<compile_context>
chip_gen: v7x
topology: tpu7x:2x2x1
jax: 0.10.0
libtpu: 0.0.40
codegen_flags: <defaults>
</compile_context>

<pallas_src>
import functools

import jax
import jax.numpy as jnp
from jax.experimental import pallas as pl
from jax.experimental.pallas import tpu as pltpu


# ----------------------------------------------------------------------------
# Fused kernel: one grid step processes one image, in the width-folded layout.
# ----------------------------------------------------------------------------
def _resblock_cca_kernel(x_ref, w1_ref, b1_ref, w2_ref, b2_ref,
                         wd1_ref, bd1_ref, wd2_ref, bd2_ref, o_ref,
                         *, H, W, C):
    Wf = W // 2            # folded width
    HWf = H * Wf           # folded spatial rows
    C2 = 2 * C             # folded channels (even pixel | odd pixel)

    # Folded-column index of every folded row -> boundary masks for the two
    # unaligned folded-dx shifts of the zero-padded "same" 3x3 conv.
    r = jax.lax.broadcasted_iota(jnp.int32, (HWf, 1), 0)
    xf = r % Wf
    not_left = xf >= 1          # dxf = -1 tap invalid at xf == 0
    not_right = xf <= Wf - 2    # dxf = +1 tap invalid at xf == Wf-1

    def shift_rows(h, off):
        # Zero-fill shift along the flattened folded-spatial axis:
        #   result[p] = h[p + off] if 0 <= p + off < HWf else 0
        if off == 0:
            return h
        pad = jnp.zeros((abs(off), C2), h.dtype)
        if off > 0:
            return jnp.concatenate([h[off:, :], pad], axis=0)
        return jnp.concatenate([pad, h[:HWf + off, :]], axis=0)

    def im2col(h):
        # (HWf, 2C) f32 -> (HWf, 9*2C) bf16.
        # Only hL/hR need unaligned +-1 shifts + masks (masks depend on xf,
        # which is invariant under the later multiple-of-Wf dy shifts, so they
        # compose correctly with the zero-filled y-boundary handling).
        hL = jnp.where(not_left, shift_rows(h, -1), 0.0)    # dxf = -1
        hR = jnp.where(not_right, shift_rows(h, 1), 0.0)    # dxf = +1
        cols = []
        for dy in (-1, 0, 1):                               # aligned +-8-row shifts
            for base in (hL, h, hR):                        # dxf = -1, 0, +1
                cols.append(shift_rows(base, dy * Wf).astype(jnp.bfloat16))
        return jnp.concatenate(cols, axis=-1)

    x = x_ref[0]                                            # (HWf, 2C) f32

    # conv1 (3x3, pad 1, bias) + LeakyReLU(0.1): one K=18C bf16 matmul.
    p1 = im2col(x)
    h1 = jnp.dot(p1, w1_ref[...], preferred_element_type=jnp.float32) + b1_ref[...]
    h1 = jnp.where(h1 >= 0.0, h1, 0.1 * h1)

    # conv2 (3x3, pad 1, bias), no activation.
    p2 = im2col(h1)
    out = jnp.dot(p2, w2_ref[...], preferred_element_type=jnp.float32) + b2_ref[...]

    # contrast (population std over spatial) + adaptive avg pool, single pass:
    # accumulate sum and sum-of-squares, combine the even/odd lane halves.
    inv_hw = 1.0 / float(H * W)
    s1 = jnp.sum(out, axis=0, keepdims=True)                # (1, 2C)
    s2 = jnp.sum(out * out, axis=0, keepdims=True)          # (1, 2C)
    mean = (s1[:, :C] + s1[:, C:]) * inv_hw                 # (1, C)
    esq = (s2[:, :C] + s2[:, C:]) * inv_hw                  # (1, C)
    var = jnp.maximum(esq - mean * mean, 0.0)               # clamp before sqrt
    stat = jnp.sqrt(var) + mean                             # (1, C)

    # conv_du: 1x1 squeeze (C -> 4) -> ReLU -> 1x1 excite (4 -> C) -> sigmoid.
    # M = 1, so do it on the VPU (broadcast-mul + small reductions), no MXU.
    hd = jnp.sum(stat * wd1_ref[...], axis=-1, keepdims=True) + bd1_ref[...]  # (Cr,1)
    hd = jnp.maximum(hd, 0.0)
    s = jnp.sum(hd * wd2_ref[...], axis=0, keepdims=True) + bd2_ref[...]      # (1, C)
    gate = jax.nn.sigmoid(s) * stat                                            # (1, C)

    # Residual broadcast add, already in the lane-dense folded layout.
    gate2 = jnp.concatenate([gate, gate], axis=-1)           # (1, 2C)
    o_ref[0] = x + gate2


# ----------------------------------------------------------------------------
# Weight folding: 3x3 OIHW conv -> (9*2C, 2C) block matrix for the folded
# (HW/2, 2C) layout.  Tap order: dy in {-1,0,+1} (outer), dxf in {-1,0,+1}.
# Row blocks of each tap matrix = (even-pixel input | odd-pixel input),
# column blocks = (even-pixel output | odd-pixel output).
# ----------------------------------------------------------------------------
def _fold_conv3x3_weight(w_oihw):
    C = w_oihw.shape[0]
    w = jnp.transpose(w_oihw, (2, 3, 1, 0))       # (kh, kw, Cin, Cout)
    Z = jnp.zeros((C, C), w.dtype)

    def blk(a, b, c, d):
        return jnp.concatenate(
            [jnp.concatenate([a, b], axis=1),
             jnp.concatenate([c, d], axis=1)], axis=0)

    blocks = []
    for kh in range(3):
        W0, W1, W2 = w[kh, 0], w[kh, 1], w[kh, 2]   # (Cin, Cout) for dx=-1,0,+1
        blocks.append(blk(Z, Z, W0, Z))             # dxf = -1 (odd-in -> even-out)
        blocks.append(blk(W1, W0, W2, W1))          # dxf =  0
        blocks.append(blk(Z, W2, Z, Z))             # dxf = +1 (even-in -> odd-out)
    return jnp.concatenate(blocks, axis=0)          # (9*2C, 2C)


# ----------------------------------------------------------------------------
# Wrapper: PyTorch-style NCHW in / NCHW out, single pallas_call.
# ----------------------------------------------------------------------------
def residual_block_nobn(x, p):
    """x: (B, C, H, W) float32. Returns (B, C, H, W) float32."""
    B, C, H, W = x.shape
    assert W % 2 == 0, "width-folded layout needs even W"
    Wf, HWf, C2 = W // 2, H * (W // 2), 2 * C
    Cr = p["wd1"].shape[0]

    # NCHW -> NHWC -> width-folded (B, H*W/2, 2C): one lane-dense view that is
    # conv input, identity and output layout at once (no duplicate DMA).
    x_fold = jnp.transpose(x, (0, 2, 3, 1)).reshape(B, HWf, C2)

    kern = functools.partial(_resblock_cca_kernel, H=H, W=W, C=C)
    bcast = lambda b: (0, 0)                        # weights: same block every step

    out_fold = pl.pallas_call(
        kern,
        out_shape=jax.ShapeDtypeStruct((B, HWf, C2), jnp.float32),
        grid_spec=pltpu.PrefetchScalarGridSpec(
            num_scalar_prefetch=0,
            grid=(B,),
            in_specs=[
                pl.BlockSpec((1, HWf, C2), lambda b: (b, 0, 0)),  # folded image
                pl.BlockSpec((9 * C2, C2), bcast),   # conv1 folded weight (bf16)
                pl.BlockSpec((1, C2), bcast),        # conv1 bias (folded)
                pl.BlockSpec((9 * C2, C2), bcast),   # conv2 folded weight (bf16)
                pl.BlockSpec((1, C2), bcast),        # conv2 bias (folded)
                pl.BlockSpec((Cr, C), bcast),        # conv_du[0] weight
                pl.BlockSpec((Cr, 1), bcast),        # conv_du[0] bias
                pl.BlockSpec((Cr, C), bcast),        # conv_du[2] weight (transposed)
                pl.BlockSpec((1, C), bcast),         # conv_du[2] bias
            ],
            out_specs=pl.BlockSpec((1, HWf, C2), lambda b: (b, 0, 0)),
        ),
        compiler_params=pltpu.CompilerParams(
            dimension_semantics=("parallel",),       # batch across TCs on v7x
            vmem_limit_bytes=32 * 1024 * 1024,
        ),
    )(x_fold, p["w1"], p["b1"], p["w2"], p["b2"],
      p["wd1"], p["bd1"], p["wd2"], p["bd2"])

    return jnp.transpose(out_fold.reshape(B, H, W, C), (0, 3, 1, 2))


# ----------------------------------------------------------------------------
# Parameters: PyTorch-layout raw weights (kaiming fan_in; conv1/conv_du scaled
# 0.1 with zero bias, like initialize_weights([conv1, conv_du], 0.1)), plus the
# kernel's folded/matmul layouts derived from them.
# ----------------------------------------------------------------------------
def make_params(key, nf=64, reduce_c=4):
    k1, k2, k3, k4, k5 = jax.random.split(key, 5)

    def kaiming(key, cout, cin, kh, kw, scale):
        fan_in = cin * kh * kw
        std = (2.0 / fan_in) ** 0.5
        return jax.random.normal(key, (cout, cin, kh, kw), jnp.float32) * std * scale

    w1 = kaiming(k1, nf, nf, 3, 3, 0.1)             # conv1 (scaled 0.1, zero bias)
    w2 = kaiming(k2, nf, nf, 3, 3, 1.0)             # conv2 (default-ish init)
    b2 = jax.random.uniform(k5, (nf,), jnp.float32, -0.05, 0.05)
    wd1 = kaiming(k3, reduce_c, nf, 1, 1, 0.1)      # conv_du[0]
    wd2 = kaiming(k4, nf, reduce_c, 1, 1, 0.1)      # conv_du[2]

    raw = {
        "w1": w1, "b1": jnp.zeros((nf,), jnp.float32),
        "w2": w2, "b2": b2,
        "wd1": wd1[:, :, 0, 0],                     # (4, nf)
        "bd1": jnp.zeros((reduce_c,), jnp.float32),
        "wd2": wd2[:, :, 0, 0],                     # (nf, 4)
        "bd2": jnp.zeros((nf,), jnp.float32),
    }
    kparams = {
        "w1": _fold_conv3x3_weight(w1).astype(jnp.bfloat16),
        "b1": jnp.concatenate([raw["b1"], raw["b1"]]).reshape(1, 2 * nf),
        "w2": _fold_conv3x3_weight(w2).astype(jnp.bfloat16),
        "b2": jnp.concatenate([b2, b2]).reshape(1, 2 * nf),
        "wd1": raw["wd1"],                          # (4, nf)
        "bd1": raw["bd1"].reshape(reduce_c, 1),
        "wd2": raw["wd2"].T,                        # (4, nf)
        "bd2": raw["bd2"].reshape(1, nf),
    }
    return raw, kparams


# ----------------------------------------------------------------------------
# Pure-JAX f32 reference (matches the PyTorch forward exactly).
# ----------------------------------------------------------------------------
def residual_block_nobn_ref(x, raw):
    def conv3x3(h, w, b):
        y = jax.lax.conv_general_dilated(
            h, w, (1, 1), ((1, 1), (1, 1)),
            dimension_numbers=("NCHW", "OIHW", "NCHW"))
        return y + b.reshape(1, -1, 1, 1)

    out = conv3x3(x, raw["w1"], raw["b1"])
    out = jnp.where(out >= 0, out, 0.1 * out)
    out = conv3x3(out, raw["w2"], raw["b2"])
    mean = out.mean(axis=(2, 3), keepdims=True)
    var = ((out - mean) ** 2).mean(axis=(2, 3), keepdims=True)
    stat = jnp.sqrt(var) + mean
    hd = jnp.maximum(
        jnp.einsum("bcxy,jc->bjxy", stat, raw["wd1"]) + raw["bd1"].reshape(1, -1, 1, 1), 0.0)
    s = jax.nn.sigmoid(
        jnp.einsum("bjxy,cj->bcxy", hd, raw["wd2"]) + raw["bd2"].reshape(1, -1, 1, 1))
    return s * stat + x


if __name__ == "__main__":
    key = jax.random.PRNGKey(0)
    k_x, k_p = jax.random.split(key)

    B, nf, H, W = 2, 64, 16, 16                     # NCHW, nf=64 as in the module
    x = jax.random.normal(k_x, (B, nf, H, W), jnp.float32)
    raw, params = make_params(k_p, nf=nf)

    out = residual_block_nobn(x, params)
    jax.block_until_ready(out)
    assert out.shape == (B, nf, H, W), out.shape

    ref = residual_block_nobn_ref(x, raw)
    err = float(jnp.max(jnp.abs(out - ref)))
    assert err < 2e-2, f"max abs err vs f32 reference: {err}"
    print("KERNEL_OK")
</pallas_src>

<mosaic_0001>
module attributes {stable_mosaic.version = 11 : i64} {
  func.func @_resblock_cca_kernel(%arg0: i32, %arg1: memref<1x128x128xf32, #tpu.memory_space<vmem>>, %arg2: memref<1152x128xbf16, #tpu.memory_space<vmem>>, %arg3: memref<1x128xf32, #tpu.memory_space<vmem>>, %arg4: memref<1152x128xbf16, #tpu.memory_space<vmem>>, %arg5: memref<1x128xf32, #tpu.memory_space<vmem>>, %arg6: memref<4x64xf32, #tpu.memory_space<vmem>>, %arg7: memref<4x1xf32, #tpu.memory_space<vmem>>, %arg8: memref<4x64xf32, #tpu.memory_space<vmem>>, %arg9: memref<1x64xf32, #tpu.memory_space<vmem>>, %arg10: memref<1x128x128xf32, #tpu.memory_space<vmem>>) attributes {dimension_semantics = [#tpu.dimension_semantics<parallel>], iteration_bounds = array<i64: 2>, scalar_prefetch = 0 : i64, scratch_operands = 0 : i64, tpu.core_type = #tpu.core_type<tc>, window_params = [{transform_indices = @transform_0, window_bounds = array<i64: 1, 128, 128>}, {pipeline_mode = #tpu.pipeline_mode<synchronous>, transform_indices = @transform_1, window_bounds = array<i64: 1152, 128>}, {pipeline_mode = #tpu.pipeline_mode<synchronous>, transform_indices = @transform_2, window_bounds = array<i64: 1, 128>}, {pipeline_mode = #tpu.pipeline_mode<synchronous>, transform_indices = @transform_3, window_bounds = array<i64: 1152, 128>}, {pipeline_mode = #tpu.pipeline_mode<synchronous>, transform_indices = @transform_4, window_bounds = array<i64: 1, 128>}, {pipeline_mode = #tpu.pipeline_mode<synchronous>, transform_indices = @transform_5, window_bounds = array<i64: 4, 64>}, {pipeline_mode = #tpu.pipeline_mode<synchronous>, transform_indices = @transform_6, window_bounds = array<i64: 4, 1>}, {pipeline_mode = #tpu.pipeline_mode<synchronous>, transform_indices = @transform_7, window_bounds = array<i64: 4, 64>}, {pipeline_mode = #tpu.pipeline_mode<synchronous>, transform_indices = @transform_8, window_bounds = array<i64: 1, 64>}, {transform_indices = @transform_9, window_bounds = array<i64: 1, 128, 128>}]} {
    %0 = tpu.iota {dimensions = array<i32: 0>} : vector<128x1xi32>
    %c8_i32 = arith.constant 8 : i32
    %c0_i32 = arith.constant 0 : i32
    %1 = arith.cmpi eq, %c8_i32, %c0_i32 : i32
    %c1_i32 = arith.constant 1 : i32
    %2 = arith.select %1, %c1_i32, %c8_i32 : i32
    %3 = vector.broadcast %2 : i32 to vector<128x1xi32>
    %4 = arith.remsi %0, %3 : vector<128x1xi32>
    %c0_i32_0 = arith.constant 0 : i32
    %5 = vector.broadcast %c0_i32_0 : i32 to vector<128x1xi32>
    %6 = arith.cmpi ne, %4, %5 : vector<128x1xi32>
    %c0_i32_1 = arith.constant 0 : i32
    %7 = vector.broadcast %c0_i32_1 : i32 to vector<128x1xi32>
    %8 = arith.cmpi slt, %4, %7 : vector<128x1xi32>
    %c0_i32_2 = arith.constant 0 : i32
    %9 = arith.cmpi slt, %2, %c0_i32_2 : i32
    %10 = vector.broadcast %9 : i1 to vector<128x1xi1>
    %11 = vector.broadcast %10 : vector<128x1xi1> to vector<128x1xi1>
    %12 = arith.xori %8, %11 : vector<128x1xi1>
    %13 = arith.andi %12, %6 : vector<128x1xi1>
    %14 = vector.broadcast %2 : i32 to vector<128x1xi32>
    %15 = arith.addi %4, %14 : vector<128x1xi32>
    %16 = arith.select %13, %15, %4 : vector<128x1xi1>, vector<128x1xi32>
    %c1_i32_3 = arith.constant 1 : i32
    %17 = vector.broadcast %c1_i32_3 : i32 to vector<128x1xi32>
    %18 = arith.cmpi sge, %16, %17 : vector<128x1xi32>
    %c6_i32 = arith.constant 6 : i32
    %19 = vector.broadcast %c6_i32 : i32 to vector<128x1xi32>
    %20 = arith.cmpi sle, %16, %19 : vector<128x1xi32>
    %c0 = arith.constant 0 : index
    %c0_4 = arith.constant 0 : index
    %c0_5 = arith.constant 0 : index
    %21 = vector.load %arg1[%c0, %c0_4, %c0_5] : memref<1x128x128xf32, #tpu.memory_space<vmem>>, vector<1x128x128xf32>
    %22 = vector.shape_cast %21 : vector<1x128x128xf32> to vector<128x128xf32>
    %cst = arith.constant 0.000000e+00 : f32
    %23 = vector.broadcast %cst : f32 to vector<1x128xf32>
    %24 = vector.extract_strided_slice %22 {offsets = [0, 0], sizes = [127, 128], strides = [1, 1]} : vector<128x128xf32> to vector<127x128xf32>
    %25 = tpu.concatenate %23, %24 in 0 : vector<1x128xf32>, vector<127x128xf32> -> vector<128x128xf32>
    %cst_6 = arith.constant 0.000000e+00 : f32
    %26 = vector.shape_cast %18 : vector<128x1xi1> to vector<128x1xi1>
    %27 = vector.broadcast %26 : vector<128x1xi1> to vector<128x128xi1>
    %28 = vector.broadcast %cst_6 : f32 to vector<128x128xf32>
    %29 = arith.select %27, %25, %28 : vector<128x128xi1>, vector<128x128xf32>
    %cst_7 = arith.constant 0.000000e+00 : f32
    %30 = vector.broadcast %cst_7 : f32 to vector<1x128xf32>
    %31 = vector.extract_strided_slice %22 {offsets = [1, 0], sizes = [127, 128], strides = [1, 1]} : vector<128x128xf32> to vector<127x128xf32>
    %32 = tpu.concatenate %31, %30 in 0 : vector<127x128xf32>, vector<1x128xf32> -> vector<128x128xf32>
    %cst_8 = arith.constant 0.000000e+00 : f32
    %33 = vector.shape_cast %20 : vector<128x1xi1> to vector<128x1xi1>
    %34 = vector.broadcast %33 : vector<128x1xi1> to vector<128x128xi1>
    %35 = vector.broadcast %cst_8 : f32 to vector<128x128xf32>
    %36 = arith.select %34, %32, %35 : vector<128x128xi1>, vector<128x128xf32>
    %cst_9 = arith.constant 0.000000e+00 : f32
    %37 = vector.broadcast %cst_9 : f32 to vector<8x128xf32>
    %38 = vector.extract_strided_slice %29 {offsets = [0, 0], sizes = [120, 128], strides = [1, 1]} : vector<128x128xf32> to vector<120x128xf32>
    %39 = tpu.concatenate %37, %38 in 0 : vector<8x128xf32>, vector<120x128xf32> -> vector<128x128xf32>
    %40 = arith.truncf %39 : vector<128x128xf32> to vector<128x128xbf16>
    %cst_10 = arith.constant 0.000000e+00 : f32
    %41 = vector.broadcast %cst_10 : f32 to vector<8x128xf32>
    %42 = vector.extract_strided_slice %22 {offsets = [0, 0], sizes = [120, 128], strides = [1, 1]} : vector<128x128xf32> to vector<120x128xf32>
    %43 = tpu.concatenate %41, %42 in 0 : vector<8x128xf32>, vector<120x128xf32> -> vector<128x128xf32>
    %44 = arith.truncf %43 : vector<128x128xf32> to vector<128x128xbf16>
    %cst_11 = arith.constant 0.000000e+00 : f32
    %45 = vector.broadcast %cst_11 : f32 to vector<8x128xf32>
    %46 = vector.extract_strided_slice %36 {offsets = [0, 0], sizes = [120, 128], strides = [1, 1]} : vector<128x128xf32> to vector<120x128xf32>
    %47 = tpu.concatenate %45, %46 in 0 : vector<8x128xf32>, vector<120x128xf32> -> vector<128x128xf32>
    %48 = arith.truncf %47 : vector<128x128xf32> to vector<128x128xbf16>
    %49 = arith.truncf %29 : vector<128x128xf32> to vector<128x128xbf16>
    %50 = arith.truncf %22 : vector<128x128xf32> to vector<128x128xbf16>
    %51 = arith.truncf %36 : vector<128x128xf32> to vector<128x128xbf16>
    %cst_12 = arith.constant 0.000000e+00 : f32
    %52 = vector.broadcast %cst_12 : f32 to vector<8x128xf32>
    %53 = vector.extract_strided_slice %29 {offsets = [8, 0], sizes = [120, 128], strides = [1, 1]} : vector<128x128xf32> to vector<120x128xf32>
    %54 = tpu.concatenate %53, %52 in 0 : vector<120x128xf32>, vector<8x128xf32> -> vector<128x128xf32>
    %55 = arith.truncf %54 : vector<128x128xf32> to vector<128x128xbf16>
    %cst_13 = arith.constant 0.000000e+00 : f32
    %56 = vector.broadcast %cst_13 : f32 to vector<8x128xf32>
    %57 = vector.extract_strided_slice %22 {offsets = [8, 0], sizes = [120, 128], strides = [1, 1]} : vector<128x128xf32> to vector<120x128xf32>
    %58 = tpu.concatenate %57, %56 in 0 : vector<120x128xf32>, vector<8x128xf32> -> vector<128x128xf32>
    %59 = arith.truncf %58 : vector<128x128xf32> to vector<128x128xbf16>
    %cst_14 = arith.constant 0.000000e+00 : f32
    %60 = vector.broadcast %cst_14 : f32 to vector<8x128xf32>
    %61 = vector.extract_strided_slice %36 {offsets = [8, 0], sizes = [120, 128], strides = [1, 1]} : vector<128x128xf32> to vector<120x128xf32>
    %62 = tpu.concatenate %61, %60 in 0 : vector<120x128xf32>, vector<8x128xf32> -> vector<128x128xf32>
    %63 = arith.truncf %62 : vector<128x128xf32> to vector<128x128xbf16>
    %64 = tpu.concatenate %40, %44, %48, %49, %50, %51, %55, %59, %63 in 1 : vector<128x128xbf16>, vector<128x128xbf16>, vector<128x128xbf16>, vector<128x128xbf16>, vector<128x128xbf16>, vector<128x128xbf16>, vector<128x128xbf16>, vector<128x128xbf16>, vector<128x128xbf16> -> vector<128x1152xbf16>
    %c0_15 = arith.constant 0 : index
    %c0_16 = arith.constant 0 : index
    %65 = vector.load %arg2[%c0_15, %c0_16] : memref<1152x128xbf16, #tpu.memory_space<vmem>>, vector<1152x128xbf16>
    %cst_17 = arith.constant dense<0.000000e+00> : vector<128x128xf32>
    %66 = tpu.matmul %64, %65, %cst_17 {dimension_numbers = #tpu.dot_dimension_numbers<[1], [0], [0], [1], [0, 0, 1, 1], [], []>} : vector<128x1152xbf16>, vector<1152x128xbf16>, vector<128x128xf32> -> vector<128x128xf32>
    %c0_18 = arith.constant 0 : index
    %c0_19 = arith.constant 0 : index
    %67 = vector.load %arg3[%c0_18, %c0_19] : memref<1x128xf32, #tpu.memory_space<vmem>>, vector<1x128xf32>
    %68 = vector.broadcast %67 : vector<1x128xf32> to vector<128x128xf32>
    %69 = arith.addf %66, %68 : vector<128x128xf32>
    %cst_20 = arith.constant 0.000000e+00 : f32
    %70 = vector.broadcast %cst_20 : f32 to vector<128x128xf32>
    %71 = arith.cmpf oge, %69, %70 : vector<128x128xf32>
    %cst_21 = arith.constant 1.000000e-01 : f32
    %72 = vector.broadcast %cst_21 : f32 to vector<128x128xf32>
    %73 = arith.mulf %72, %69 : vector<128x128xf32>
    %74 = arith.select %71, %69, %73 : vector<128x128xi1>, vector<128x128xf32>
    %cst_22 = arith.constant 0.000000e+00 : f32
    %75 = vector.broadcast %cst_22 : f32 to vector<1x128xf32>
    %76 = vector.extract_strided_slice %74 {offsets = [0, 0], sizes = [127, 128], strides = [1, 1]} : vector<128x128xf32> to vector<127x128xf32>
    %77 = tpu.concatenate %75, %76 in 0 : vector<1x128xf32>, vector<127x128xf32> -> vector<128x128xf32>
    %cst_23 = arith.constant 0.000000e+00 : f32
    %78 = vector.shape_cast %18 : vector<128x1xi1> to vector<128x1xi1>
    %79 = vector.broadcast %78 : vector<128x1xi1> to vector<128x128xi1>
    %80 = vector.broadcast %cst_23 : f32 to vector<128x128xf32>
    %81 = arith.select %79, %77, %80 : vector<128x128xi1>, vector<128x128xf32>
    %cst_24 = arith.constant 0.000000e+00 : f32
    %82 = vector.broadcast %cst_24 : f32 to vector<1x128xf32>
    %83 = vector.extract_strided_slice %74 {offsets = [1, 0], sizes = [127, 128], strides = [1, 1]} : vector<128x128xf32> to vector<127x128xf32>
    %84 = tpu.concatenate %83, %82 in 0 : vector<127x128xf32>, vector<1x128xf32> -> vector<128x128xf32>
    %cst_25 = arith.constant 0.000000e+00 : f32
    %85 = vector.shape_cast %20 : vector<128x1xi1> to vector<128x1xi1>
    %86 = vector.broadcast %85 : vector<128x1xi1> to vector<128x128xi1>
    %87 = vector.broadcast %cst_25 : f32 to vector<128x128xf32>
    %88 = arith.select %86, %84, %87 : vector<128x128xi1>, vector<128x128xf32>
    %cst_26 = arith.constant 0.000000e+00 : f32
    %89 = vector.broadcast %cst_26 : f32 to vector<8x128xf32>
    %90 = vector.extract_strided_slice %81 {offsets = [0, 0], sizes = [120, 128], strides = [1, 1]} : vector<128x128xf32> to vector<120x128xf32>
    %91 = tpu.concatenate %89, %90 in 0 : vector<8x128xf32>, vector<120x128xf32> -> vector<128x128xf32>
    %92 = arith.truncf %91 : vector<128x128xf32> to vector<128x128xbf16>
    %cst_27 = arith.constant 0.000000e+00 : f32
    %93 = vector.broadcast %cst_27 : f32 to vector<8x128xf32>
    %94 = vector.extract_strided_slice %74 {offsets = [0, 0], sizes = [120, 128], strides = [1, 1]} : vector<128x128xf32> to vector<120x128xf32>
    %95 = tpu.concatenate %93, %94 in 0 : vector<8x128xf32>, vector<120x128xf32> -> vector<128x128xf32>
    %96 = arith.truncf %95 : vector<128x128xf32> to vector<128x128xbf16>
    %cst_28 = arith.constant 0.000000e+00 : f32
    %97 = vector.broadcast %cst_28 : f32 to vector<8x128xf32>
    %98 = vector.extract_strided_slice %88 {offsets = [0, 0], sizes = [120, 128], strides = [1, 1]} : vector<128x128xf32> to vector<120x128xf32>
    %99 = tpu.concatenate %97, %98 in 0 : vector<8x128xf32>, vector<120x128xf32> -> vector<128x128xf32>
    %100 = arith.truncf %99 : vector<128x128xf32> to vector<128x128xbf16>
    %101 = arith.truncf %81 : vector<128x128xf32> to vector<128x128xbf16>
    %102 = arith.truncf %74 : vector<128x128xf32> to vector<128x128xbf16>
    %103 = arith.truncf %88 : vector<128x128xf32> to vector<128x128xbf16>
    %cst_29 = arith.constant 0.000000e+00 : f32
    %104 = vector.broadcast %cst_29 : f32 to vector<8x128xf32>
    %105 = vector.extract_strided_slice %81 {offsets = [8, 0], sizes = [120, 128], strides = [1, 1]} : vector<128x128xf32> to vector<120x128xf32>
    %106 = tpu.concatenate %105, %104 in 0 : vector<120x128xf32>, vector<8x128xf32> -> vector<128x128xf32>
    %107 = arith.truncf %106 : vector<128x128xf32> to vector<128x128xbf16>
    %cst_30 = arith.constant 0.000000e+00 : f32
    %108 = vector.broadcast %cst_30 : f32 to vector<8x128xf32>
    %109 = vector.extract_strided_slice %74 {offsets = [8, 0], sizes = [120, 128], strides = [1, 1]} : vector<128x128xf32> to vector<120x128xf32>
    %110 = tpu.concatenate %109, %108 in 0 : vector<120x128xf32>, vector<8x128xf32> -> vector<128x128xf32>
    %111 = arith.truncf %110 : vector<128x128xf32> to vector<128x128xbf16>
    %cst_31 = arith.constant 0.000000e+00 : f32
    %112 = vector.broadcast %cst_31 : f32 to vector<8x128xf32>
    %113 = vector.extract_strided_slice %88 {offsets = [8, 0], sizes = [120, 128], strides = [1, 1]} : vector<128x128xf32> to vector<120x128xf32>
    %114 = tpu.concatenate %113, %112 in 0 : vector<120x128xf32>, vector<8x128xf32> -> vector<128x128xf32>
    %115 = arith.truncf %114 : vector<128x128xf32> to vector<128x128xbf16>
    %116 = tpu.concatenate %92, %96, %100, %101, %102, %103, %107, %111, %115 in 1 : vector<128x128xbf16>, vector<128x128xbf16>, vector<128x128xbf16>, vector<128x128xbf16>, vector<128x128xbf16>, vector<128x128xbf16>, vector<128x128xbf16>, vector<128x128xbf16>, vector<128x128xbf16> -> vector<128x1152xbf16>
    %c0_32 = arith.constant 0 : index
    %c0_33 = arith.constant 0 : index
    %117 = vector.load %arg4[%c0_32, %c0_33] : memref<1152x128xbf16, #tpu.memory_space<vmem>>, vector<1152x128xbf16>
    %cst_34 = arith.constant dense<0.000000e+00> : vector<128x128xf32>
    %118 = tpu.matmul %116, %117, %cst_34 {dimension_numbers = #tpu.dot_dimension_numbers<[1], [0], [0], [1], [0, 0, 1, 1], [], []>} : vector<128x1152xbf16>, vector<1152x128xbf16>, vector<128x128xf32> -> vector<128x128xf32>
    %c0_35 = arith.constant 0 : index
    %c0_36 = arith.constant 0 : index
    %119 = vector.load %arg5[%c0_35, %c0_36] : memref<1x128xf32, #tpu.memory_space<vmem>>, vector<1x128xf32>
    %120 = vector.broadcast %119 : vector<1x128xf32> to vector<128x128xf32>
    %121 = arith.addf %118, %120 : vector<128x128xf32>
    %cst_37 = arith.constant dense<0.000000e+00> : vector<128xf32>
    %122 = vector.multi_reduction <add>, %121, %cst_37 [0] : vector<128x128xf32> to vector<128xf32>
    %123 = vector.shape_cast %122 : vector<128xf32> to vector<1x128xf32>
    %124 = arith.mulf %121, %121 : vector<128x128xf32>
    %cst_38 = arith.constant dense<0.000000e+00> : vector<128xf32>
    %125 = vector.multi_reduction <add>, %124, %cst_38 [0] : vector<128x128xf32> to vector<128xf32>
    %126 = vector.shape_cast %125 : vector<128xf32> to vector<1x128xf32>
    %127 = vector.extract_strided_slice %123 {offsets = [0, 0], sizes = [1, 64], strides = [1, 1]} : vector<1x128xf32> to vector<1x64xf32>
    %128 = vector.extract_strided_slice %123 {offsets = [0, 64], sizes = [1, 64], strides = [1, 1]} : vector<1x128xf32> to vector<1x64xf32>
    %129 = arith.addf %127, %128 : vector<1x64xf32>
    %cst_39 = arith.constant 3.906250e-03 : f32
    %130 = vector.broadcast %cst_39 : f32 to vector<1x64xf32>
    %131 = arith.mulf %129, %130 : vector<1x64xf32>
    %132 = vector.extract_strided_slice %126 {offsets = [0, 0], sizes = [1, 64], strides = [1, 1]} : vector<1x128xf32> to vector<1x64xf32>
    %133 = vector.extract_strided_slice %126 {offsets = [0, 64], sizes = [1, 64], strides = [1, 1]} : vector<1x128xf32> to vector<1x64xf32>
    %134 = arith.addf %132, %133 : vector<1x64xf32>
    %cst_40 = arith.constant 3.906250e-03 : f32
    %135 = vector.broadcast %cst_40 : f32 to vector<1x64xf32>
    %136 = arith.mulf %134, %135 : vector<1x64xf32>
    %137 = arith.mulf %131, %131 : vector<1x64xf32>
    %138 = arith.subf %136, %137 : vector<1x64xf32>
    %cst_41 = arith.constant 0.000000e+00 : f32
    %139 = vector.broadcast %cst_41 : f32 to vector<1x64xf32>
    %140 = arith.maximumf %138, %139 : vector<1x64xf32>
    %141 = math.sqrt %140 : vector<1x64xf32>
    %142 = arith.addf %141, %131 : vector<1x64xf32>
    %c0_42 = arith.constant 0 : index
    %c0_43 = arith.constant 0 : index
    %143 = vector.load %arg6[%c0_42, %c0_43] : memref<4x64xf32, #tpu.memory_space<vmem>>, vector<4x64xf32>
    %144 = vector.broadcast %142 : vector<1x64xf32> to vector<4x64xf32>
    %145 = arith.mulf %144, %143 : vector<4x64xf32>
    %cst_44 = arith.constant dense<0.000000e+00> : vector<4xf32>
    %146 = vector.multi_reduction <add>, %145, %cst_44 [1] : vector<4x64xf32> to vector<4xf32>
    %147 = vector.shape_cast %146 : vector<4xf32> to vector<4x1xf32>
    %c0_45 = arith.constant 0 : index
    %c0_46 = arith.constant 0 : index
    %148 = vector.load %arg7[%c0_45, %c0_46] : memref<4x1xf32, #tpu.memory_space<vmem>>, vector<4x1xf32>
    %149 = arith.addf %147, %148 : vector<4x1xf32>
    %cst_47 = arith.constant 0.000000e+00 : f32
    %150 = vector.broadcast %cst_47 : f32 to vector<4x1xf32>
    %151 = arith.maximumf %149, %150 : vector<4x1xf32>
    %c0_48 = arith.constant 0 : index
    %c0_49 = arith.constant 0 : index
    %152 = vector.load %arg8[%c0_48, %c0_49] : memref<4x64xf32, #tpu.memory_space<vmem>>, vector<4x64xf32>
    %153 = vector.broadcast %151 : vector<4x1xf32> to vector<4x64xf32>
    %154 = arith.mulf %153, %152 : vector<4x64xf32>
    %cst_50 = arith.constant dense<0.000000e+00> : vector<64xf32>
    %155 = vector.multi_reduction <add>, %154, %cst_50 [0] : vector<4x64xf32> to vector<64xf32>
    %156 = vector.shape_cast %155 : vector<64xf32> to vector<1x64xf32>
    %c0_51 = arith.constant 0 : index
    %c0_52 = arith.constant 0 : index
    %157 = vector.load %arg9[%c0_51, %c0_52] : memref<1x64xf32, #tpu.memory_space<vmem>>, vector<1x64xf32>
    %158 = arith.addf %156, %157 : vector<1x64xf32>
    %159 = arith.negf %158 : vector<1x64xf32>
    %160 = math.exp %159 : vector<1x64xf32>
    %cst_53 = arith.constant 1.000000e+00 : f32
    %161 = vector.broadcast %cst_53 : f32 to vector<1x64xf32>
    %162 = arith.addf %161, %160 : vector<1x64xf32>
    %163 = arith.divf %161, %162 : vector<1x64xf32>
    %164 = arith.mulf %163, %142 : vector<1x64xf32>
    %165 = tpu.concatenate %164, %164 in 1 : vector<1x64xf32>, vector<1x64xf32> -> vector<1x128xf32>
    %166 = vector.broadcast %165 : vector<1x128xf32> to vector<128x128xf32>
    %167 = arith.addf %22, %166 : vector<128x128xf32>
    %c0_54 = arith.constant 0 : index
    %c0_55 = arith.constant 0 : index
    %c0_56 = arith.constant 0 : index
    %168 = vector.load %arg10[%c0_54, %c0_55, %c0_56] : memref<1x128x128xf32, #tpu.memory_space<vmem>>, vector<1x128x128xf32>
    %169 = vector.shape_cast %168 : vector<1x128x128xf32> to vector<128x128xf32>
    %170 = vector.shape_cast %167 : vector<128x128xf32> to vector<1x128x128xf32>
    tpu.vector_store %arg10[%c0_54, %c0_55, %c0_56], %170 {strides = array<i32>} : memref<1x128x128xf32, #tpu.memory_space<vmem>>, vector<1x128x128xf32>,
    return
  }
  func.func @transform_0(%arg0: i32) -> (i32, i32, i32) {
    %c0_i32 = arith.constant 0 : i32
    %c0_i32_0 = arith.constant 0 : i32
    %c0_i32_1 = arith.constant 0 : i32
    return %arg0, %c0_i32, %c0_i32_0 : i32, i32, i32
  }
  func.func @transform_1(%arg0: i32) -> (i32, i32) {
    %c0_i32 = arith.constant 0 : i32
    %c0_i32_0 = arith.constant 0 : i32
    %c0_i32_1 = arith.constant 0 : i32
    return %c0_i32, %c0_i32_0 : i32, i32
  }
  func.func @transform_2(%arg0: i32) -> (i32, i32) {
    %c0_i32 = arith.constant 0 : i32
    %c0_i32_0 = arith.constant 0 : i32
    %c0_i32_1 = arith.constant 0 : i32
    return %c0_i32, %c0_i32_0 : i32, i32
  }
  func.func @transform_3(%arg0: i32) -> (i32, i32) {
    %c0_i32 = arith.constant 0 : i32
    %c0_i32_0 = arith.constant 0 : i32
    %c0_i32_1 = arith.constant 0 : i32
    return %c0_i32, %c0_i32_0 : i32, i32
  }
  func.func @transform_4(%arg0: i32) -> (i32, i32) {
    %c0_i32 = arith.constant 0 : i32
    %c0_i32_0 = arith.constant 0 : i32
    %c0_i32_1 = arith.constant 0 : i32
    return %c0_i32, %c0_i32_0 : i32, i32
  }
  func.func @transform_5(%arg0: i32) -> (i32, i32) {
    %c0_i32 = arith.constant 0 : i32
    %c0_i32_0 = arith.constant 0 : i32
    %c0_i32_1 = arith.constant 0 : i32
    return %c0_i32, %c0_i32_0 : i32, i32
  }
  func.func @transform_6(%arg0: i32) -> (i32, i32) {
    %c0_i32 = arith.constant 0 : i32
    %c0_i32_0 = arith.constant 0 : i32
    %c0_i32_1 = arith.constant 0 : i32
    return %c0_i32, %c0_i32_0 : i32, i32
  }
  func.func @transform_7(%arg0: i32) -> (i32, i32) {
    %c0_i32 = arith.constant 0 : i32
    %c0_i32_0 = arith.constant 0 : i32
    %c0_i32_1 = arith.constant 0 : i32
    return %c0_i32, %c0_i32_0 : i32, i32
  }
  func.func @transform_8(%arg0: i32) -> (i32, i32) {
    %c0_i32 = arith.constant 0 : i32
    %c0_i32_0 = arith.constant 0 : i32
    %c0_i32_1 = arith.constant 0 : i32
    return %c0_i32, %c0_i32_0 : i32, i32
  }
  func.func @transform_9(%arg0: i32) -> (i32, i32, i32) {
    %c0_i32 = arith.constant 0 : i32
    %c0_i32_0 = arith.constant 0 : i32
    %c0_i32_1 = arith.constant 0 : i32
    return %arg0, %c0_i32, %c0_i32_0 : i32, i32, i32
  }
}

</mosaic_0001>

<llo_original>
// kernel: tpu_custom_call.1
$region0: #{tpu_custom_call.1}
  #allocation0 [shape = 'u32[]', space=smem, size = 0x4, offset = 0x4, fixed_abs, tag = 'smem constant byte address 0x4 - core index']
  #allocation1 [shape = 'u32[144,128]{1,0:T(1,128)}', space=vmem, size = 0x12000, scoped, tag = 'internal scratch']
  %s0 = inlined_call_operand.hbm [shape: f32[2,128,128], index: 0, kind: input, shape index: {}]
  %s1 = inlined_call_operand.hbm [shape: bf16[1152,128], index: 1, kind: input, shape index: {}]
  %s2 = inlined_call_operand.vmem [shape: f32[1,128], index: 2, kind: input, shape index: {}]
  %s3 = inlined_call_operand.hbm [shape: bf16[1152,128], index: 3, kind: input, shape index: {}]
  %s4 = inlined_call_operand.vmem [shape: f32[1,128], index: 4, kind: input, shape index: {}]
  %s5 = inlined_call_operand.vmem [shape: f32[4,64], index: 5, kind: input, shape index: {}]
  %s6 = inlined_call_operand.vmem [shape: f32[4,1], index: 6, kind: input, shape index: {}]
  %s7 = inlined_call_operand.vmem [shape: f32[4,64], index: 7, kind: input, shape index: {}]
  %s8 = inlined_call_operand.vmem [shape: f32[1,64], index: 8, kind: input, shape index: {}]
  %s9 = inlined_call_operand.hbm [shape: f32[2,128,128], index: 9, kind: output, shape index: {}]
  %s10 = sld [smem:[#allocation0]]
  $region81: #{tpu_custom_call.1} parent=0
    _
  %s12 = ssub.s32 1, %s10
  %s13 = scalar_select 0, %s12, %s10
  $region1: #{tpu_custom_call.1} parent=0
    #allocation2 [shape = 'u8[131072]{0}', space=vmem, size = 0x20000, scoped, tag = 'input window, operand 0']
    #allocation3 [shape = 's32[2]{0}', space=sflag, size = 0x8, scoped, tag = 'scoped memory for tpu_custom_call.1']
    #allocation4 [shape = 's32[2]{0}', space=sflag, size = 0x8, scoped, tag = 'scoped memory for tpu_custom_call.1']
    #allocation5 [shape = 'u8[294912]{0}', space=vmem, size = 0x48000, scoped, tag = 'input window, operand 1, single buffered']
    #allocation6 [shape = 's32[1]{0}', space=sflag, size = 0x4, scoped, tag = 'scoped memory for tpu_custom_call.1']
    #allocation7 [shape = 'u8[294912]{0}', space=vmem, size = 0x48000, scoped, tag = 'input window, operand 3, single buffered']
    #allocation8 [shape = 'u8[131072]{0}', space=vmem, size = 0x20000, scoped, tag = 'output window, operand 0']
    %14 = vsyncpa [#allocation3], 0
    %s15 = scalar_lea.sflag [#allocation3], 1
    %16 = vsyncpa %s15, 0
    %17 = vsyncpa [#allocation6], 0
    %18 = vsyncpa [#allocation4], 0
    %s19 = scalar_lea.sflag [#allocation4], 1
    %20 = vsyncpa %s19, 0
    loop: start=0, step=1, limit=4
    $region2: #{tpu_custom_call.1} parent=1 // loop_pre_header
      _
    $region3: #{tpu_custom_call.1} parent=1 // loop_header
      %s22 = sphi 0, %s26
      %p23 = scmp.ge.s32.totalorder %s22, 4
      %s32 = sphi 0, %s34
      %s35 = sphi 0, %s32
      %s36 = sphi 0, %s35
      %s52 = sphi 0, %s36
      %s56 = sphi 0, %s56
      %s58 = sphi 0, %s56
      %s59 = sphi 0, %s58
      %s73 = sphi 0, %s59
      %s77 = sphi 0, %s77
      %s79 = sphi 0, %s77
      %s80 = sphi 0, %s79
      %s94 = sphi 0, %s80
      %s98 = sphi 0, %s98
      %s100 = sphi 0, %s98
      %s101 = sphi 0, %s100
      %s115 = sphi 0, %s101
      %s119 = sphi 0, %s119
      %s121 = sphi 0, %s119
      %s122 = sphi 0, %s121
      %s136 = sphi 0, %s122
      %s140 = sphi 0, %s140
      %s142 = sphi 0, %s140
      %s143 = sphi 0, %s142
      %s157 = sphi 0, %s143
      %s161 = sphi 0, %s161
      %s163 = sphi 0, %s161
      %s164 = sphi 0, %s163
      %s178 = sphi 0, %s164
      %s182 = sphi 0, %s182
      %s184 = sphi 0, %s182
      %s185 = sphi 0, %s184
      %s199 = sphi 0, %s185
      %s203 = sphi 0, %s203
      %s205 = sphi 0, %s203
      %s206 = sphi 0, %s205
      %s220 = sphi 0, %s206
      %s226 = sphi 0, %s228
      %s229 = sphi 0, %s226
      %s230 = sphi 0, %s229
      %s246 = sphi 0, %s230
    $region4: #{tpu_custom_call.1} parent=1 // loop_header_branch
      %25 = sbr.rel (%p23) target = $region8
    $region5: #{tpu_custom_call.1} parent=1 // loop_body
      %s27 = ssub.s32 %s22, 1
      %s28 = ssub.s32 %s22, 2
      %s29 = sadd.s32 %s22, 1
      %s30 = ssub.s32 %s22, %s29
      %p31 = scmp.eq.s32.totalorder %s30, 0
      %s33 = sadd.s32 %s32, 1
      %s34 = scalar_select %p31, %s32, %s33
      %p37 = pneg %p31
      %p38 = scmp.eq.s32.totalorder %s22, 1
      %p39 = por %p37, %p38
      %p40 = scmp.ne.s32.totalorder %s32, %s35
      %p41 = scmp.eq.s32.totalorder %s22, 0
      %p42 = por %p40, %p41
      %p43 = scmp.ne.s32.totalorder %s32, %s35
      %p44 = scmp.eq.s32.totalorder %s27, 1
      %p45 = por %p43, %p44
      %p46 = scmp.ne.s32.totalorder %s35, %s36
      %p47 = scmp.eq.s32.totalorder %s27, 0
      %p48 = por %p46, %p47
      %p49 = scmp.ne.s32.totalorder %s35, %s36
      %p50 = scmp.eq.s32.totalorder %s28, 1
      %p51 = por %p49, %p50
      %p53 = scmp.ne.s32.totalorder %s36, %s52
      %p54 = scmp.eq.s32.totalorder %s28, 0
      %p55 = por %p53, %p54
      %s57 = sadd.s32 %s56, 1
      %p60 = scmp.eq.s32.totalorder %s22, 1
      %p61 = scmp.ne.s32.totalorder %s56, %s58
      %p62 = scmp.eq.s32.totalorder %s22, 0
      %p63 = por %p61, %p62
      %p64 = scmp.ne.s32.totalorder %s56, %s58
      %p65 = scmp.eq.s32.totalorder %s27, 1
      %p66 = por %p64, %p65
      %p67 = scmp.ne.s32.totalorder %s58, %s59
      %p68 = scmp.eq.s32.totalorder %s27, 0
      %p69 = por %p67, %p68
      %p70 = scmp.ne.s32.totalorder %s58, %s59
      %p71 = scmp.eq.s32.totalorder %s28, 1
      %p72 = por %p70, %p71
      %p74 = scmp.ne.s32.totalorder %s59, %s73
      %p75 = scmp.eq.s32.totalorder %s28, 0
      %p76 = por %p74, %p75
      %s78 = sadd.s32 %s77, 1
      %p81 = scmp.eq.s32.totalorder %s22, 1
      %p82 = scmp.ne.s32.totalorder %s77, %s79
      %p83 = scmp.eq.s32.totalorder %s22, 0
      %p84 = por %p82, %p83
      %p85 = scmp.ne.s32.totalorder %s77, %s79
      %p86 = scmp.eq.s32.totalorder %s27, 1
      %p87 = por %p85, %p86
      %p88 = scmp.ne.s32.totalorder %s79, %s80
      %p89 = scmp.eq.s32.totalorder %s27, 0
      %p90 = por %p88, %p89
      %p91 = scmp.ne.s32.totalorder %s79, %s80
      %p92 = scmp.eq.s32.totalorder %s28, 1
      %p93 = por %p91, %p92
      %p95 = scmp.ne.s32.totalorder %s80, %s94
      %p96 = scmp.eq.s32.totalorder %s28, 0
      %p97 = por %p95, %p96
      %s99 = sadd.s32 %s98, 1
      %p102 = scmp.eq.s32.totalorder %s22, 1
      %p103 = scmp.ne.s32.totalorder %s98, %s100
      %p104 = scmp.eq.s32.totalorder %s22, 0
      %p105 = por %p103, %p104
      %p106 = scmp.ne.s32.totalorder %s98, %s100
      %p107 = scmp.eq.s32.totalorder %s27, 1
      %p108 = por %p106, %p107
      %p109 = scmp.ne.s32.totalorder %s100, %s101
      %p110 = scmp.eq.s32.totalorder %s27, 0
      %p111 = por %p109, %p110
      %p112 = scmp.ne.s32.totalorder %s100, %s101
      %p113 = scmp.eq.s32.totalorder %s28, 1
      %p114 = por %p112, %p113
      %p116 = scmp.ne.s32.totalorder %s101, %s115
      %p117 = scmp.eq.s32.totalorder %s28, 0
      %p118 = por %p116, %p117
      %s120 = sadd.s32 %s119, 1
      %p123 = scmp.eq.s32.totalorder %s22, 1
      %p124 = scmp.ne.s32.totalorder %s119, %s121
      %p125 = scmp.eq.s32.totalorder %s22, 0
      %p126 = por %p124, %p125
      %p127 = scmp.ne.s32.totalorder %s119, %s121
      %p128 = scmp.eq.s32.totalorder %s27, 1
      %p129 = por %p127, %p128
      %p130 = scmp.ne.s32.totalorder %s121, %s122
      %p131 = scmp.eq.s32.totalorder %s27, 0
      %p132 = por %p130, %p131
      %p133 = scmp.ne.s32.totalorder %s121, %s122
      %p134 = scmp.eq.s32.totalorder %s28, 1
      %p135 = por %p133, %p134
      %p137 = scmp.ne.s32.totalorder %s122, %s136
      %p138 = scmp.eq.s32.totalorder %s28, 0
      %p139 = por %p137, %p138
      %s141 = sadd.s32 %s140, 1
      %p144 = scmp.eq.s32.totalorder %s22, 1
      %p145 = scmp.ne.s32.totalorder %s140, %s142
      %p146 = scmp.eq.s32.totalorder %s22, 0
      %p147 = por %p145, %p146
      %p148 = scmp.ne.s32.totalorder %s140, %s142
      %p149 = scmp.eq.s32.totalorder %s27, 1
      %p150 = por %p148, %p149
      %p151 = scmp.ne.s32.totalorder %s142, %s143
      %p152 = scmp.eq.s32.totalorder %s27, 0
      %p153 = por %p151, %p152
      %p154 = scmp.ne.s32.totalorder %s142, %s143
      %p155 = scmp.eq.s32.totalorder %s28, 1
      %p156 = por %p154, %p155
      %p158 = scmp.ne.s32.totalorder %s143, %s157
      %p159 = scmp.eq.s32.totalorder %s28, 0
      %p160 = por %p158, %p159
      %s162 = sadd.s32 %s161, 1
      %p165 = scmp.eq.s32.totalorder %s22, 1
      %p166 = scmp.ne.s32.totalorder %s161, %s163
      %p167 = scmp.eq.s32.totalorder %s22, 0
      %p168 = por %p166, %p167
      %p169 = scmp.ne.s32.totalorder %s161, %s163
      %p170 = scmp.eq.s32.totalorder %s27, 1
      %p171 = por %p169, %p170
      %p172 = scmp.ne.s32.totalorder %s163, %s164
      %p173 = scmp.eq.s32.totalorder %s27, 0
      %p174 = por %p172, %p173
      %p175 = scmp.ne.s32.totalorder %s163, %s164
      %p176 = scmp.eq.s32.totalorder %s28, 1
      %p177 = por %p175, %p176
      %p179 = scmp.ne.s32.totalorder %s164, %s178
      %p180 = scmp.eq.s32.totalorder %s28, 0
      %p181 = por %p179, %p180
      %s183 = sadd.s32 %s182, 1
      %p186 = scmp.eq.s32.totalorder %s22, 1
      %p187 = scmp.ne.s32.totalorder %s182, %s184
      %p188 = scmp.eq.s32.totalorder %s22, 0
      %p189 = por %p187, %p188
      %p190 = scmp.ne.s32.totalorder %s182, %s184
      %p191 = scmp.eq.s32.totalorder %s27, 1
      %p192 = por %p190, %p191
      %p193 = scmp.ne.s32.totalorder %s184, %s185
      %p194 = scmp.eq.s32.totalorder %s27, 0
      %p195 = por %p193, %p194
      %p196 = scmp.ne.s32.totalorder %s184, %s185
      %p197 = scmp.eq.s32.totalorder %s28, 1
      %p198 = por %p196, %p197
      %p200 = scmp.ne.s32.totalorder %s185, %s199
      %p201 = scmp.eq.s32.totalorder %s28, 0
      %p202 = por %p200, %p201
      %s204 = sadd.s32 %s203, 1
      %p207 = scmp.eq.s32.totalorder %s22, 1
      %p208 = scmp.ne.s32.totalorder %s203, %s205
      %p209 = scmp.eq.s32.totalorder %s22, 0
      %p210 = por %p208, %p209
      %p211 = scmp.ne.s32.totalorder %s203, %s205
      %p212 = scmp.eq.s32.totalorder %s27, 1
      %p213 = por %p211, %p212
      %p214 = scmp.ne.s32.totalorder %s205, %s206
      %p215 = scmp.eq.s32.totalorder %s27, 0
      %p216 = por %p214, %p215
      %p217 = scmp.ne.s32.totalorder %s205, %s206
      %p218 = scmp.eq.s32.totalorder %s28, 1
      %p219 = por %p217, %p218
      %p221 = scmp.ne.s32.totalorder %s206, %s220
      %p222 = scmp.eq.s32.totalorder %s28, 0
      %p223 = por %p221, %p222
      %s224 = ssub.s32 %s22, %s29
      %p225 = scmp.eq.s32.totalorder %s224, 0
      %s227 = sadd.s32 %s226, 1
      %s228 = scalar_select %p225, %s226, %s227
      %p231 = pneg %p225
      %p232 = scmp.eq.s32.totalorder %s22, 1
      %p233 = por %p231, %p232
      %p234 = scmp.ne.s32.totalorder %s226, %s229
      %p235 = scmp.eq.s32.totalorder %s22, 0
      %p236 = por %p234, %p235
      %p237 = scmp.ne.s32.totalorder %s226, %s229
      %p238 = scmp.eq.s32.totalorder %s27, 1
      %p239 = por %p237, %p238
      %p240 = scmp.ne.s32.totalorder %s229, %s230
      %p241 = scmp.eq.s32.totalorder %s27, 0
      %p242 = por %p240, %p241
      %p243 = scmp.ne.s32.totalorder %s229, %s230
      %p244 = scmp.eq.s32.totalorder %s28, 1
      %p245 = por %p243, %p244
      %p247 = scmp.ne.s32.totalorder %s230, %s246
      %p248 = scmp.eq.s32.totalorder %s28, 0
      %p249 = por %p247, %p248
      %p250 = scmp.le.s32.totalorder 1, %s22
      %p251 = scmp.lt.s32.totalorder %s22, 3
      %p252 = pnand %p250, %p251
      %p253 = pneg %p252
      // Predicated region
      $region9: #{tpu_custom_call.1} parent=5 // pred_check
        _
      $region10: #{tpu_custom_call.1} parent=5 // pred_check_branch
        %255 = sbr.rel (%p252) target = $region12
      $region11: #{tpu_custom_call.1} parent=5 // pred_region
        %s256 = ssub.s32 %s22, 1
        // Predicated region
        $region13: #{tpu_custom_call.1} parent=11 // pred_check
          %p257 = pneg %p69
        $region14: #{tpu_custom_call.1} parent=11 // pred_check_branch
          %259 = sbr.rel (%p257) target = $region16
        $region15: #{tpu_custom_call.1} parent=11 // pred_region
          %s261 = ssub.s32 9216, 9216
          %262 = vsyncadd [#allocation6], %s261
          %s263 = sshll.u32 [#allocation5], 4
          %s264 = int_to_ptr.vmem [resolvable:$true] %s263
          %269 = dma.hbm_to_vmem [thread:$0]  %s1, 9216, %s264, [#allocation6], 64, 64, 4
        $region16: #{tpu_custom_call.1} parent=11 // pred_fallthru
          _
        // Predicated region
        $region17: #{tpu_custom_call.1} parent=11 // pred_check
          %p270 = pneg %p90
        $region18: #{tpu_custom_call.1} parent=11 // pred_check_branch
          %272 = sbr.rel (%p270) target = $region20
        $region19: #{tpu_custom_call.1} parent=11 // pred_region
          _
        $region20: #{tpu_custom_call.1} parent=11 // pred_fallthru
          _
        // Predicated region
        $region21: #{tpu_custom_call.1} parent=11 // pred_check
          %p273 = pneg %p111
        $region22: #{tpu_custom_call.1} parent=11 // pred_check_branch
          %275 = sbr.rel (%p273) target = $region24
        $region23: #{tpu_custom_call.1} parent=11 // pred_region
          %s277 = ssub.s32 9216, 9216
          %278 = vsyncadd [#allocation6], %s277
          %s279 = sshll.u32 [#allocation7], 4
          %s280 = int_to_ptr.vmem [resolvable:$true] %s279
          %285 = dma.hbm_to_vmem [thread:$0]  %s3, 9216, %s280, [#allocation6], 64, 64, 4
        $region24: #{tpu_custom_call.1} parent=11 // pred_fallthru
          _
        // Predicated region
        $region25: #{tpu_custom_call.1} parent=11 // pred_check
          %p286 = pneg %p132
        $region26: #{tpu_custom_call.1} parent=11 // pred_check_branch
          %288 = sbr.rel (%p286) target = $region28
        $region27: #{tpu_custom_call.1} parent=11 // pred_region
          _
        $region28: #{tpu_custom_call.1} parent=11 // pred_fallthru
          _
        // Predicated region
        $region29: #{tpu_custom_call.1} parent=11 // pred_check
          %p289 = pneg %p153
        $region30: #{tpu_custom_call.1} parent=11 // pred_check_branch
          %291 = sbr.rel (%p289) target = $region32
        $region31: #{tpu_custom_call.1} parent=11 // pred_region
          _
        $region32: #{tpu_custom_call.1} parent=11 // pred_fallthru
          _
        // Predicated region
        $region33: #{tpu_custom_call.1} parent=11 // pred_check
          %p292 = pneg %p174
        $region34: #{tpu_custom_call.1} parent=11 // pred_check_branch
          %294 = sbr.rel (%p292) target = $region36
        $region35: #{tpu_custom_call.1} parent=11 // pred_region
          _
        $region36: #{tpu_custom_call.1} parent=11 // pred_fallthru
          _
        // Predicated region
        $region37: #{tpu_custom_call.1} parent=11 // pred_check
          %p295 = pneg %p195
        $region38: #{tpu_custom_call.1} parent=11 // pred_check_branch
          %297 = sbr.rel (%p295) target = $region40
        $region39: #{tpu_custom_call.1} parent=11 // pred_region
          _
        $region40: #{tpu_custom_call.1} parent=11 // pred_fallthru
          _
        // Predicated region
        $region41: #{tpu_custom_call.1} parent=11 // pred_check
          %p298 = pneg %p216
        $region42: #{tpu_custom_call.1} parent=11 // pred_check_branch
          %300 = sbr.rel (%p298) target = $region44
        $region43: #{tpu_custom_call.1} parent=11 // pred_region
          _
        $region44: #{tpu_custom_call.1} parent=11 // pred_fallthru
          _
      $region12: #{tpu_custom_call.1} parent=5 // pred_fallthru
        _
      %p301 = scmp.lt.s32.totalorder %s22, 2
      // Predicated region
      $region45: #{tpu_custom_call.1} parent=5 // pred_check
        %p302 = pneg %p301
      $region46: #{tpu_custom_call.1} parent=5 // pred_check_branch
        %304 = sbr.rel (%p302) target = $region48
      $region47: #{tpu_custom_call.1} parent=5 // pred_region
        // Predicated region
        $region49: #{tpu_custom_call.1} parent=47 // pred_check
          %p305 = pneg %p42
        $region50: #{tpu_custom_call.1} parent=47 // pred_check_branch
          %307 = sbr.rel (%p305) target = $region52
        $region51: #{tpu_custom_call.1} parent=47 // pred_region
          %s308 = sand.u32 %s32, 1
          %s309 = scalar_lea.sflag [#allocation3], %s308
          %s310 = sand.u32 %s32, 1
          %s311 = smul.addr %s310, 128
          %s312 = scalar_lea.vmem [#allocation2], %s311
          %s314 = ssub.s32 2048, 2048
          %315 = vsyncadd %s309, %s314
          %s316 = smul.addr %s22, 16
          %s317 = smul.addr %s316, 128
          %s318 = scalar_lea.hbm %s0, %s317
          %s319 = sshll.u32 %s312, 4
          %s320 = int_to_ptr.vmem [resolvable:$true] %s319
          %325 = dma.hbm_to_vmem [thread:$0]  %s318, 2048, %s320, %s309, 128, 128, 8
        $region52: #{tpu_custom_call.1} parent=47 // pred_fallthru
          _
      $region48: #{tpu_custom_call.1} parent=5 // pred_fallthru
        _
      %p326 = scmp.le.s32.totalorder 1, %s22
      %p327 = scmp.lt.s32.totalorder %s22, 3
      %p328 = pnand %p326, %p327
      %p329 = pneg %p328
      // Predicated region
      $region53: #{tpu_custom_call.1} parent=5 // pred_check
        _
      $region54: #{tpu_custom_call.1} parent=5 // pred_check_branch
        %331 = sbr.rel (%p328) target = $region56
      $region55: #{tpu_custom_call.1} parent=5 // pred_region
        %s332 = ssub.s32 %s22, 1
        %s333 = sand.u32 %s35, 1
        %s334 = scalar_lea.sflag [#allocation3], %s333
        %s335 = sand.u32 %s35, 1
        %s336 = smul.addr %s335, 128
        %s337 = scalar_lea.vmem [#allocation2], %s336
        // Predicated region
        $region57: #{tpu_custom_call.1} parent=55 // pred_check
          %p338 = pneg %p48
        $region58: #{tpu_custom_call.1} parent=55 // pred_check_branch
          %340 = sbr.rel (%p338) target = $region60
        $region59: #{tpu_custom_call.1} parent=55 // pred_region
          %341 = dma.done %s334, 2048
        $region60: #{tpu_custom_call.1} parent=55 // pred_fallthru
          _
        // Predicated region
        $region61: #{tpu_custom_call.1} parent=55 // pred_check
          %p342 = pneg %p69
        $region62: #{tpu_custom_call.1} parent=55 // pred_check_branch
          %344 = sbr.rel (%p342) target = $region64
        $region63: #{tpu_custom_call.1} parent=55 // pred_region
          %345 = dma.done [#allocation6], 9216
        $region64: #{tpu_custom_call.1} parent=55 // pred_fallthru
          _
        // Predicated region
        $region65: #{tpu_custom_call.1} parent=55 // pred_check
          %p346 = pneg %p111
        $region66: #{tpu_custom_call.1} parent=55 // pred_check_branch
          %348 = sbr.rel (%p346) target = $region68
        $region67: #{tpu_custom_call.1} parent=55 // pred_region
          %349 = dma.done [#allocation6], 9216
        $region68: #{tpu_custom_call.1} parent=55 // pred_fallthru
          _
        %s350 = sand.u32 %s35, 1
        %s351 = scalar_lea.sflag [#allocation3], %s350
        %s352 = sand.u32 %s35, 1
        %s353 = smul.addr %s352, 128
        %s354 = scalar_lea.vmem [#allocation2], %s353
        %p355 = pneg %p48
        %p356 = pneg %p45
        %p357 = pneg %p69
        %p358 = pneg %p66
        %p359 = pneg %p90
        %p360 = pneg %p87
        %p361 = pneg %p111
        %p362 = pneg %p108
        %p363 = pneg %p132
        %p364 = pneg %p129
        %p365 = pneg %p153
        %p366 = pneg %p150
        %p367 = pneg %p174
        %p368 = pneg %p171
        %p369 = pneg %p195
        %p370 = pneg %p192
        %p371 = pneg %p216
        %p372 = pneg %p213
        %p373 = pneg %p242
        %p374 = pneg %p239
        %s375 = sand.u32 %s229, 1
        %s376 = scalar_lea.sflag [#allocation4], %s375
        %s377 = sand.u32 %s229, 1
        %s378 = smul.addr %s377, 128
        %s379 = scalar_lea.vmem [#allocation8], %s378
        %v381 = vlaneseq
        %v382 = vshrl.u32 %v381, 7
        %v383 = vadd.s32 %v382, 8
        %v384 = vadd.s32 %v382, 16
        %v385 = vadd.s32 %v382, 24
        %v386 = vadd.s32 %v382, 32
        %v387 = vadd.s32 %v382, 40
        %v388 = vadd.s32 %v382, 48
        %v389 = vadd.s32 %v382, 56
        %v390 = vadd.s32 %v382, 64
        %v391 = vadd.s32 %v382, 72
        %v392 = vadd.s32 %v382, 80
        %v393 = vadd.s32 %v382, 88
        %v394 = vadd.s32 %v382, 96
        %v395 = vadd.s32 %v382, 104
        %v396 = vadd.s32 %v382, 112
        %v397 = vadd.s32 %v382, 120
        %vm398 = vcmp.lt.s32.totalorder %v382, 0
        %v399 = vsub.s32 0, %v382
        %v400 = vsel %vm398, %v399, %v382
        %v401 = vshrl.u32 %v400, 3
        %v402 = vand.u32 %v400, 7
        %v403 = vsub.s32 0, %v402
        %v404 = vsel %vm398, %v403, %v402
        %vm405 = vcmp.lt.s32.totalorder %v383, 0
        %v406 = vsub.s32 0, %v383
        %v407 = vsel %vm405, %v406, %v383
        %v408 = vshrl.u32 %v407, 3
        %v409 = vand.u32 %v407, 7
        %v410 = vsub.s32 0, %v409
        %v411 = vsel %vm405, %v410, %v409
        %vm412 = vcmp.lt.s32.totalorder %v384, 0
        %v413 = vsub.s32 0, %v384
        %v414 = vsel %vm412, %v413, %v384
        %v415 = vshrl.u32 %v414, 3
        %v416 = vand.u32 %v414, 7
        %v417 = vsub.s32 0, %v416
        %v418 = vsel %vm412, %v417, %v416
        %vm419 = vcmp.lt.s32.totalorder %v385, 0
        %v420 = vsub.s32 0, %v385
        %v421 = vsel %vm419, %v420, %v385
        %v422 = vshrl.u32 %v421, 3
        %v423 = vand.u32 %v421, 7
        %v424 = vsub.s32 0, %v423
        %v425 = vsel %vm419, %v424, %v423
        %vm426 = vcmp.lt.s32.totalorder %v386, 0
        %v427 = vsub.s32 0, %v386
        %v428 = vsel %vm426, %v427, %v386
        %v429 = vshrl.u32 %v428, 3
        %v430 = vand.u32 %v428, 7
        %v431 = vsub.s32 0, %v430
        %v432 = vsel %vm426, %v431, %v430
        %vm433 = vcmp.lt.s32.totalorder %v387, 0
        %v434 = vsub.s32 0, %v387
        %v435 = vsel %vm433, %v434, %v387
        %v436 = vshrl.u32 %v435, 3
        %v437 = vand.u32 %v435, 7
        %v438 = vsub.s32 0, %v437
        %v439 = vsel %vm433, %v438, %v437
        %vm440 = vcmp.lt.s32.totalorder %v388, 0
        %v441 = vsub.s32 0, %v388
        %v442 = vsel %vm440, %v441, %v388
        %v443 = vshrl.u32 %v442, 3
        %v444 = vand.u32 %v442, 7
        %v445 = vsub.s32 0, %v444
        %v446 = vsel %vm440, %v445, %v444
        %vm447 = vcmp.lt.s32.totalorder %v389, 0
        %v448 = vsub.s32 0, %v389
        %v449 = vsel %vm447, %v448, %v389
        %v450 = vshrl.u32 %v449, 3
        %v451 = vand.u32 %v449, 7
        %v452 = vsub.s32 0, %v451
        %v453 = vsel %vm447, %v452, %v451
        %vm454 = vcmp.lt.s32.totalorder %v390, 0
        %v455 = vsub.s32 0, %v390
        %v456 = vsel %vm454, %v455, %v390
        %v457 = vshrl.u32 %v456, 3
        %v458 = vand.u32 %v456, 7
        %v459 = vsub.s32 0, %v458
        %v460 = vsel %vm454, %v459, %v458
        %vm461 = vcmp.lt.s32.totalorder %v391, 0
        %v462 = vsub.s32 0, %v391
        %v463 = vsel %vm461, %v462, %v391
        %v464 = vshrl.u32 %v463, 3
        %v465 = vand.u32 %v463, 7
        %v466 = vsub.s32 0, %v465
        %v467 = vsel %vm461, %v466, %v465
        %vm468 = vcmp.lt.s32.totalorder %v392, 0
        %v469 = vsub.s32 0, %v392
        %v470 = vsel %vm468, %v469, %v392
        %v471 = vshrl.u32 %v470, 3
        %v472 = vand.u32 %v470, 7
        %v473 = vsub.s32 0, %v472
        %v474 = vsel %vm468, %v473, %v472
        %vm475 = vcmp.lt.s32.totalorder %v393, 0
        %v476 = vsub.s32 0, %v393
        %v477 = vsel %vm475, %v476, %v393
        %v478 = vshrl.u32 %v477, 3
        %v479 = vand.u32 %v477, 7
        %v480 = vsub.s32 0, %v479
        %v481 = vsel %vm475, %v480, %v479
        %vm482 = vcmp.lt.s32.totalorder %v394, 0
        %v483 = vsub.s32 0, %v394
        %v484 = vsel %vm482, %v483, %v394
        %v485 = vshrl.u32 %v484, 3
        %v486 = vand.u32 %v484, 7
        %v487 = vsub.s32 0, %v486
        %v488 = vsel %vm482, %v487, %v486
        %vm489 = vcmp.lt.s32.totalorder %v395, 0
        %v490 = vsub.s32 0, %v395
        %v491 = vsel %vm489, %v490, %v395
        %v492 = vshrl.u32 %v491, 3
        %v493 = vand.u32 %v491, 7
        %v494 = vsub.s32 0, %v493
        %v495 = vsel %vm489, %v494, %v493
        %vm496 = vcmp.lt.s32.totalorder %v396, 0
        %v497 = vsub.s32 0, %v396
        %v498 = vsel %vm496, %v497, %v396
        %v499 = vshrl.u32 %v498, 3
        %v500 = vand.u32 %v498, 7
        %v501 = vsub.s32 0, %v500
        %v502 = vsel %vm496, %v501, %v500
        %vm503 = vcmp.lt.s32.totalorder %v397, 0
        %v504 = vsub.s32 0, %v397
        %v505 = vsel %vm503, %v504, %v397
        %v506 = vshrl.u32 %v505, 3
        %v507 = vand.u32 %v505, 7
        %v508 = vsub.s32 0, %v507
        %v509 = vsel %vm503, %v508, %v507
        %vm510 = vcmp.ne.s32.totalorder %v404, 0
        %vm511 = vcmp.ne.s32.totalorder %v411, 0
        %vm512 = vcmp.ne.s32.totalorder %v418, 0
        %vm513 = vcmp.ne.s32.totalorder %v425, 0
        %vm514 = vcmp.ne.s32.totalorder %v432, 0
        %vm515 = vcmp.ne.s32.totalorder %v439, 0
        %vm516 = vcmp.ne.s32.totalorder %v446, 0
        %vm517 = vcmp.ne.s32.totalorder %v453, 0
        %vm518 = vcmp.ne.s32.totalorder %v460, 0
        %vm519 = vcmp.ne.s32.totalorder %v467, 0
        %vm520 = vcmp.ne.s32.totalorder %v474, 0
        %vm521 = vcmp.ne.s32.totalorder %v481, 0
        %vm522 = vcmp.ne.s32.totalorder %v488, 0
        %vm523 = vcmp.ne.s32.totalorder %v495, 0
        %vm524 = vcmp.ne.s32.totalorder %v502, 0
        %vm525 = vcmp.ne.s32.totalorder %v509, 0
        %vm526 = vcmp.lt.s32.totalorder %v404, 0
        %vm527 = vcmp.lt.s32.totalorder %v411, 0
        %vm528 = vcmp.lt.s32.totalorder %v418, 0
        %vm529 = vcmp.lt.s32.totalorder %v425, 0
        %vm530 = vcmp.lt.s32.totalorder %v432, 0
        %vm531 = vcmp.lt.s32.totalorder %v439, 0
        %vm532 = vcmp.lt.s32.totalorder %v446, 0
        %vm533 = vcmp.lt.s32.totalorder %v453, 0
        %vm534 = vcmp.lt.s32.totalorder %v460, 0
        %vm535 = vcmp.lt.s32.totalorder %v467, 0
        %vm536 = vcmp.lt.s32.totalorder %v474, 0
        %vm537 = vcmp.lt.s32.totalorder %v481, 0
        %vm538 = vcmp.lt.s32.totalorder %v488, 0
        %vm539 = vcmp.lt.s32.totalorder %v495, 0
        %vm540 = vcmp.lt.s32.totalorder %v502, 0
        %vm541 = vcmp.lt.s32.totalorder %v509, 0
        %vm542 = vmand %vm526, %vm510
        %vm543 = vmand %vm527, %vm511
        %vm544 = vmand %vm528, %vm512
        %vm545 = vmand %vm529, %vm513
        %vm546 = vmand %vm530, %vm514
        %vm547 = vmand %vm531, %vm515
        %vm548 = vmand %vm532, %vm516
        %vm549 = vmand %vm533, %vm517
        %vm550 = vmand %vm534, %vm518
        %vm551 = vmand %vm535, %vm519
        %vm552 = vmand %vm536, %vm520
        %vm553 = vmand %vm537, %vm521
        %vm554 = vmand %vm538, %vm522
        %vm555 = vmand %vm539, %vm523
        %vm556 = vmand %vm540, %vm524
        %vm557 = vmand %vm541, %vm525
        %v558 = vadd.s32 %v404, 8
        %v559 = vadd.s32 %v411, 8
        %v560 = vadd.s32 %v418, 8
        %v561 = vadd.s32 %v425, 8
        %v562 = vadd.s32 %v432, 8
        %v563 = vadd.s32 %v439, 8
        %v564 = vadd.s32 %v446, 8
        %v565 = vadd.s32 %v453, 8
        %v566 = vadd.s32 %v460, 8
        %v567 = vadd.s32 %v467, 8
        %v568 = vadd.s32 %v474, 8
        %v569 = vadd.s32 %v481, 8
        %v570 = vadd.s32 %v488, 8
        %v571 = vadd.s32 %v495, 8
        %v572 = vadd.s32 %v502, 8
        %v573 = vadd.s32 %v509, 8
        %v574 = vsel %vm542, %v558, %v404
        %v575 = vsel %vm543, %v559, %v411
        %v576 = vsel %vm544, %v560, %v418
        %v577 = vsel %vm545, %v561, %v425
        %v578 = vsel %vm546, %v562, %v432
        %v579 = vsel %vm547, %v563, %v439
        %v580 = vsel %vm548, %v564, %v446
        %v581 = vsel %vm549, %v565, %v453
        %v582 = vsel %vm550, %v566, %v460
        %v583 = vsel %vm551, %v567, %v467
        %v584 = vsel %vm552, %v568, %v474
        %v585 = vsel %vm553, %v569, %v481
        %v586 = vsel %vm554, %v570, %v488
        %v587 = vsel %vm555, %v571, %v495
        %v588 = vsel %vm556, %v572, %v502
        %v589 = vsel %vm557, %v573, %v509
        %vm590 = vcmp.ge.s32.totalorder %v574, 1
        %vm591 = vcmp.ge.s32.totalorder %v575, 1
        %vm592 = vcmp.ge.s32.totalorder %v576, 1
        %vm593 = vcmp.ge.s32.totalorder %v577, 1
        %vm594 = vcmp.ge.s32.totalorder %v578, 1
        %vm595 = vcmp.ge.s32.totalorder %v579, 1
        %vm596 = vcmp.ge.s32.totalorder %v580, 1
        %vm597 = vcmp.ge.s32.totalorder %v581, 1
        %vm598 = vcmp.ge.s32.totalorder %v582, 1
        %vm599 = vcmp.ge.s32.totalorder %v583, 1
        %vm600 = vcmp.ge.s32.totalorder %v584, 1
        %vm601 = vcmp.ge.s32.totalorder %v585, 1
        %vm602 = vcmp.ge.s32.totalorder %v586, 1
        %vm603 = vcmp.ge.s32.totalorder %v587, 1
        %vm604 = vcmp.ge.s32.totalorder %v588, 1
        %vm605 = vcmp.ge.s32.totalorder %v589, 1
        %vm606 = vcmp.le.s32.totalorder %v574, 6
        %vm607 = vcmp.le.s32.totalorder %v575, 6
        %vm608 = vcmp.le.s32.totalorder %v576, 6
        %vm609 = vcmp.le.s32.totalorder %v577, 6
        %vm610 = vcmp.le.s32.totalorder %v578, 6
        %vm611 = vcmp.le.s32.totalorder %v579, 6
        %vm612 = vcmp.le.s32.totalorder %v580, 6
        %vm613 = vcmp.le.s32.totalorder %v581, 6
        %vm614 = vcmp.le.s32.totalorder %v582, 6
        %vm615 = vcmp.le.s32.totalorder %v583, 6
        %vm616 = vcmp.le.s32.totalorder %v584, 6
        %vm617 = vcmp.le.s32.totalorder %v585, 6
        %vm618 = vcmp.le.s32.totalorder %v586, 6
        %vm619 = vcmp.le.s32.totalorder %v587, 6
        %vm620 = vcmp.le.s32.totalorder %v588, 6
        %vm621 = vcmp.le.s32.totalorder %v589, 6
        %v622 = vld [vmem:[%s337] sm:$0xff]
        %v623 = vld [vmem:[%s337 + $0x8] sm:$0xff]
        %v624 = vld [vmem:[%s337 + $0x10] sm:$0xff]
        %v625 = vld [vmem:[%s337 + $0x18] sm:$0xff]
        %v626 = vld [vmem:[%s337 + $0x20] sm:$0xff]
        %v627 = vld [vmem:[%s337 + $0x28] sm:$0xff]
        %v628 = vld [vmem:[%s337 + $0x30] sm:$0xff]
        %v629 = vld [vmem:[%s337 + $0x38] sm:$0xff]
        %v630 = vld [vmem:[%s337 + $0x40] sm:$0xff]
        %v631 = vld [vmem:[%s337 + $0x48] sm:$0xff]
        %v632 = vld [vmem:[%s337 + $0x50] sm:$0xff]
        %v633 = vld [vmem:[%s337 + $0x58] sm:$0xff]
        %v634 = vld [vmem:[%s337 + $0x60] sm:$0xff]
        %v635 = vld [vmem:[%s337 + $0x68] sm:$0xff]
        %v636 = vld [vmem:[%s337 + $0x70] sm:$0xff]
        %v637 = vld [vmem:[%s337 + $0x78] sm:$0xff]
        %vm654 = vcmask 1040384
        %v655 = vrot.slane %v622, 7
        %v656 = vrot.slane %v623, 7
        %v657 = vsel %vm654, %v655, %v656
        %v658 = vrot.slane %v624, 7
        %v659 = vsel %vm654, %v656, %v658
        %v660 = vrot.slane %v625, 7
        %v661 = vsel %vm654, %v658, %v660
        %v662 = vrot.slane %v626, 7
        %v663 = vsel %vm654, %v660, %v662
        %v664 = vrot.slane %v627, 7
        %v665 = vsel %vm654, %v662, %v664
        %v666 = vrot.slane %v628, 7
        %v667 = vsel %vm654, %v664, %v666
        %v668 = vrot.slane %v629, 7
        %v669 = vsel %vm654, %v666, %v668
        %v670 = vrot.slane %v630, 7
        %v671 = vsel %vm654, %v668, %v670
        %v672 = vrot.slane %v631, 7
        %v673 = vsel %vm654, %v670, %v672
        %v674 = vrot.slane %v632, 7
        %v675 = vsel %vm654, %v672, %v674
        %v676 = vrot.slane %v633, 7
        %v677 = vsel %vm654, %v674, %v676
        %v678 = vrot.slane %v634, 7
        %v679 = vsel %vm654, %v676, %v678
        %v680 = vrot.slane %v635, 7
        %v681 = vsel %vm654, %v678, %v680
        %v682 = vrot.slane %v636, 7
        %v683 = vsel %vm654, %v680, %v682
        %v684 = vrot.slane %v637, 7
        %v685 = vsel %vm654, %v682, %v684
        %v702 = vsel %vm654, 0.0, %v655
        %v703 = vsel %vm590, 1, 0
        %v704 = vsel %vm591, 1, 0
        %v705 = vsel %vm592, 1, 0
        %v706 = vsel %vm593, 1, 0
        %v707 = vsel %vm594, 1, 0
        %v708 = vsel %vm595, 1, 0
        %v709 = vsel %vm596, 1, 0
        %v710 = vsel %vm597, 1, 0
        %v711 = vsel %vm598, 1, 0
        %v712 = vsel %vm599, 1, 0
        %v713 = vsel %vm600, 1, 0
        %v714 = vsel %vm601, 1, 0
        %v715 = vsel %vm602, 1, 0
        %v716 = vsel %vm603, 1, 0
        %v717 = vsel %vm604, 1, 0
        %v718 = vsel %vm605, 1, 0
        %vm719 = vcmp.eq.s32.totalorder %v703, 1
        %vm720 = vcmp.eq.s32.totalorder %v704, 1
        %vm721 = vcmp.eq.s32.totalorder %v705, 1
        %vm722 = vcmp.eq.s32.totalorder %v706, 1
        %vm723 = vcmp.eq.s32.totalorder %v707, 1
        %vm724 = vcmp.eq.s32.totalorder %v708, 1
        %vm725 = vcmp.eq.s32.totalorder %v709, 1
        %vm726 = vcmp.eq.s32.totalorder %v710, 1
        %vm727 = vcmp.eq.s32.totalorder %v711, 1
        %vm728 = vcmp.eq.s32.totalorder %v712, 1
        %vm729 = vcmp.eq.s32.totalorder %v713, 1
        %vm730 = vcmp.eq.s32.totalorder %v714, 1
        %vm731 = vcmp.eq.s32.totalorder %v715, 1
        %vm732 = vcmp.eq.s32.totalorder %v716, 1
        %vm733 = vcmp.eq.s32.totalorder %v717, 1
        %vm734 = vcmp.eq.s32.totalorder %v718, 1
        %v735 = vsel %vm719, %v702, 0.0
        %v736 = vsel %vm720, %v657, 0.0
        %v737 = vsel %vm721, %v659, 0.0
        %v738 = vsel %vm722, %v661, 0.0
        %v739 = vsel %vm723, %v663, 0.0
        %v740 = vsel %vm724, %v665, 0.0
        %v741 = vsel %vm725, %v667, 0.0
        %v742 = vsel %vm726, %v669, 0.0
        %v743 = vsel %vm727, %v671, 0.0
        %v744 = vsel %vm728, %v673, 0.0
        %v745 = vsel %vm729, %v675, 0.0
        %v746 = vsel %vm730, %v677, 0.0
        %v747 = vsel %vm731, %v679, 0.0
        %v748 = vsel %vm732, %v681, 0.0
        %v749 = vsel %vm733, %v683, 0.0
        %v750 = vsel %vm734, %v685, 0.0
        %vm751 = vcmask 1046528
        %v752 = vrot.slane %v622, 1
        %v753 = vrot.slane %v623, 1
        %v754 = vsel %vm751, %v752, %v753
        %v755 = vrot.slane %v624, 1
        %v756 = vsel %vm751, %v753, %v755
        %v757 = vrot.slane %v625, 1
        %v758 = vsel %vm751, %v755, %v757
        %v759 = vrot.slane %v626, 1
        %v760 = vsel %vm751, %v757, %v759
        %v761 = vrot.slane %v627, 1
        %v762 = vsel %vm751, %v759, %v761
        %v763 = vrot.slane %v628, 1
        %v764 = vsel %vm751, %v761, %v763
        %v765 = vrot.slane %v629, 1
        %v766 = vsel %vm751, %v763, %v765
        %v767 = vrot.slane %v630, 1
        %v768 = vsel %vm751, %v765, %v767
        %v769 = vrot.slane %v631, 1
        %v770 = vsel %vm751, %v767, %v769
        %v771 = vrot.slane %v632, 1
        %v772 = vsel %vm751, %v769, %v771
        %v773 = vrot.slane %v633, 1
        %v774 = vsel %vm751, %v771, %v773
        %v775 = vrot.slane %v634, 1
        %v776 = vsel %vm751, %v773, %v775
        %v777 = vrot.slane %v635, 1
        %v778 = vsel %vm751, %v775, %v777
        %v779 = vrot.slane %v636, 1
        %v780 = vsel %vm751, %v777, %v779
        %v781 = vrot.slane %v637, 1
        %v782 = vsel %vm751, %v779, %v781
        %v799 = vsel %vm751, %v781, 0.0
        %v800 = vsel %vm606, 1, 0
        %v801 = vsel %vm607, 1, 0
        %v802 = vsel %vm608, 1, 0
        %v803 = vsel %vm609, 1, 0
        %v804 = vsel %vm610, 1, 0
        %v805 = vsel %vm611, 1, 0
        %v806 = vsel %vm612, 1, 0
        %v807 = vsel %vm613, 1, 0
        %v808 = vsel %vm614, 1, 0
        %v809 = vsel %vm615, 1, 0
        %v810 = vsel %vm616, 1, 0
        %v811 = vsel %vm617, 1, 0
        %v812 = vsel %vm618, 1, 0
        %v813 = vsel %vm619, 1, 0
        %v814 = vsel %vm620, 1, 0
        %v815 = vsel %vm621, 1, 0
        %vm816 = vcmp.eq.s32.totalorder %v800, 1
        %vm817 = vcmp.eq.s32.totalorder %v801, 1
        %vm818 = vcmp.eq.s32.totalorder %v802, 1
        %vm819 = vcmp.eq.s32.totalorder %v803, 1
        %vm820 = vcmp.eq.s32.totalorder %v804, 1
        %vm821 = vcmp.eq.s32.totalorder %v805, 1
        %vm822 = vcmp.eq.s32.totalorder %v806, 1
        %vm823 = vcmp.eq.s32.totalorder %v807, 1
        %vm824 = vcmp.eq.s32.totalorder %v808, 1
        %vm825 = vcmp.eq.s32.totalorder %v809, 1
        %vm826 = vcmp.eq.s32.totalorder %v810, 1
        %vm827 = vcmp.eq.s32.totalorder %v811, 1
        %vm828 = vcmp.eq.s32.totalorder %v812, 1
        %vm829 = vcmp.eq.s32.totalorder %v813, 1
        %vm830 = vcmp.eq.s32.totalorder %v814, 1
        %vm831 = vcmp.eq.s32.totalorder %v815, 1
        %v832 = vsel %vm816, %v754, 0.0
        %v833 = vsel %vm817, %v756, 0.0
        %v834 = vsel %vm818, %v758, 0.0
        %v835 = vsel %vm819, %v760, 0.0
        %v836 = vsel %vm820, %v762, 0.0
        %v837 = vsel %vm821, %v764, 0.0
        %v838 = vsel %vm822, %v766, 0.0
        %v839 = vsel %vm823, %v768, 0.0
        %v840 = vsel %vm824, %v770, 0.0
        %v841 = vsel %vm825, %v772, 0.0
        %v842 = vsel %vm826, %v774, 0.0
        %v843 = vsel %vm827, %v776, 0.0
        %v844 = vsel %vm828, %v778, 0.0
        %v845 = vsel %vm829, %v780, 0.0
        %v846 = vsel %vm830, %v782, 0.0
        %v847 = vsel %vm831, %v799, 0.0
        %v848 = vpack.c.bf16 %v735, 0.0
        %v849 = vpack.c.bf16 %v737, %v736
        %v850 = vpack.c.bf16 %v739, %v738
        %v851 = vpack.c.bf16 %v741, %v740
        %v852 = vpack.c.bf16 %v743, %v742
        %v853 = vpack.c.bf16 %v745, %v744
        %v854 = vpack.c.bf16 %v747, %v746
        %v855 = vpack.c.bf16 %v749, %v748
        %v856 = vpack.c.bf16 %v622, 0.0
        %v857 = vpack.c.bf16 %v624, %v623
        %v858 = vpack.c.bf16 %v626, %v625
        %v859 = vpack.c.bf16 %v628, %v627
        %v860 = vpack.c.bf16 %v630, %v629
        %v861 = vpack.c.bf16 %v632, %v631
        %v862 = vpack.c.bf16 %v634, %v633
        %v863 = vpack.c.bf16 %v636, %v635
        %v864 = vpack.c.bf16 %v832, 0.0
        %v865 = vpack.c.bf16 %v834, %v833
        %v866 = vpack.c.bf16 %v836, %v835
        %v867 = vpack.c.bf16 %v838, %v837
        %v868 = vpack.c.bf16 %v840, %v839
        %v869 = vpack.c.bf16 %v842, %v841
        %v870 = vpack.c.bf16 %v844, %v843
        %v871 = vpack.c.bf16 %v846, %v845
        %v872 = vpack.c.bf16 %v736, %v735
        %v873 = vpack.c.bf16 %v738, %v737
        %v874 = vpack.c.bf16 %v740, %v739
        %v875 = vpack.c.bf16 %v742, %v741
        %v876 = vpack.c.bf16 %v744, %v743
        %v877 = vpack.c.bf16 %v746, %v745
        %v878 = vpack.c.bf16 %v748, %v747
        %v879 = vpack.c.bf16 %v750, %v749
        %v880 = vpack.c.bf16 %v623, %v622
        %v881 = vpack.c.bf16 %v625, %v624
        %v882 = vpack.c.bf16 %v627, %v626
        %v883 = vpack.c.bf16 %v629, %v628
        %v884 = vpack.c.bf16 %v631, %v630
        %v885 = vpack.c.bf16 %v633, %v632
        %v886 = vpack.c.bf16 %v635, %v634
        %v887 = vpack.c.bf16 %v637, %v636
        %v888 = vpack.c.bf16 %v833, %v832
        %v889 = vpack.c.bf16 %v835, %v834
        %v890 = vpack.c.bf16 %v837, %v836
        %v891 = vpack.c.bf16 %v839, %v838
        %v892 = vpack.c.bf16 %v841, %v840
        %v893 = vpack.c.bf16 %v843, %v842
        %v894 = vpack.c.bf16 %v845, %v844
        %v895 = vpack.c.bf16 %v847, %v846
        %v896 = vpack.c.bf16 0.0, %v750
        %v897 = vpack.c.bf16 0.0, %v637
        %v898 = vpack.c.bf16 0.0, %v847
        %v899 = vld [vmem:[#allocation5] sm:$0xf]
        %v900 = vld [vmem:[#allocation5 + $0x4] sm:$0xf]
        %v901 = vld [vmem:[#allocation5 + $0x8] sm:$0xf]
        %v902 = vld [vmem:[#allocation5 + $0xc] sm:$0xf]
        %v903 = vld [vmem:[#allocation5 + $0x10] sm:$0xf]
        %v904 = vld [vmem:[#allocation5 + $0x14] sm:$0xf]
        %v905 = vld [vmem:[#allocation5 + $0x18] sm:$0xf]
        %v906 = vld [vmem:[#allocation5 + $0x1c] sm:$0xf]
        %v907 = vld [vmem:[#allocation5 + $0x20] sm:$0xf]
        %v908 = vld [vmem:[#allocation5 + $0x24] sm:$0xf]
        %v909 = vld [vmem:[#allocation5 + $0x28] sm:$0xf]
        %v910 = vld [vmem:[#allocation5 + $0x2c] sm:$0xf]
        %v911 = vld [vmem:[#allocation5 + $0x30] sm:$0xf]
        %v912 = vld [vmem:[#allocation5 + $0x34] sm:$0xf]
        %v913 = vld [vmem:[#allocation5 + $0x38] sm:$0xf]
        %v914 = vld [vmem:[#allocation5 + $0x3c] sm:$0xf]
        %v915 = vld [vmem:[#allocation5 + $0x40] sm:$0xf]
        %v916 = vld [vmem:[#allocation5 + $0x44] sm:$0xf]
        %v917 = vld [vmem:[#allocation5 + $0x48] sm:$0xf]
        %v918 = vld [vmem:[#allocation5 + $0x4c] sm:$0xf]
        %v919 = vld [vmem:[#allocation5 + $0x50] sm:$0xf]
        %v920 = vld [vmem:[#allocation5 + $0x54] sm:$0xf]
        %v921 = vld [vmem:[#allocation5 + $0x58] sm:$0xf]
        %v922 = vld [vmem:[#allocation5 + $0x5c] sm:$0xf]
        %v923 = vld [vmem:[#allocation5 + $0x60] sm:$0xf]
        %v924 = vld [vmem:[#allocation5 + $0x64] sm:$0xf]
        %v925 = vld [vmem:[#allocation5 + $0x68] sm:$0xf]
        %v926 = vld [vmem:[#allocation5 + $0x6c] sm:$0xf]
        %v927 = vld [vmem:[#allocation5 + $0x70] sm:$0xf]
        %v928 = vld [vmem:[#allocation5 + $0x74] sm:$0xf]
        %v929 = vld [vmem:[#allocation5 + $0x78] sm:$0xf]
        %v930 = vld [vmem:[#allocation5 + $0x7c] sm:$0xf]
        %v931 = vld [vmem:[#allocation5 + $0x80] sm:$0xf]
        %v932 = vld [vmem:[#allocation5 + $0x84] sm:$0xf]
        %v933 = vld [vmem:[#allocation5 + $0x88] sm:$0xf]
        %v934 = vld [vmem:[#allocation5 + $0x8c] sm:$0xf]
        %v935 = vld [vmem:[#allocation5 + $0x90] sm:$0xf]
        %v936 = vld [vmem:[#allocation5 + $0x94] sm:$0xf]
        %v937 = vld [vmem:[#allocation5 + $0x98] sm:$0xf]
        %v938 = vld [vmem:[#allocation5 + $0x9c] sm:$0xf]
        %v939 = vld [vmem:[#allocation5 + $0xa0] sm:$0xf]
        %v940 = vld [vmem:[#allocation5 + $0xa4] sm:$0xf]
        %v941 = vld [vmem:[#allocation5 + $0xa8] sm:$0xf]
        %v942 = vld [vmem:[#allocation5 + $0xac] sm:$0xf]
        %v943 = vld [vmem:[#allocation5 + $0xb0] sm:$0xf]
        %v944 = vld [vmem:[#allocation5 + $0xb4] sm:$0xf]
        %v945 = vld [vmem:[#allocation5 + $0xb8] sm:$0xf]
        %v946 = vld [vmem:[#allocation5 + $0xbc] sm:$0xf]
        %v947 = vld [vmem:[#allocation5 + $0xc0] sm:$0xf]
        %v948 = vld [vmem:[#allocation5 + $0xc4] sm:$0xf]
        %v949 = vld [vmem:[#allocation5 + $0xc8] sm:$0xf]
        %v950 = vld [vmem:[#allocation5 + $0xcc] sm:$0xf]
        %v951 = vld [vmem:[#allocation5 + $0xd0] sm:$0xf]
        %v952 = vld [vmem:[#allocation5 + $0xd4] sm:$0xf]
        %v953 = vld [vmem:[#allocation5 + $0xd8] sm:$0xf]
        %v954 = vld [vmem:[#allocation5 + $0xdc] sm:$0xf]
        %v955 = vld [vmem:[#allocation5 + $0xe0] sm:$0xf]
        %v956 = vld [vmem:[#allocation5 + $0xe4] sm:$0xf]
        %v957 = vld [vmem:[#allocation5 + $0xe8] sm:$0xf]
        %v958 = vld [vmem:[#allocation5 + $0xec] sm:$0xf]
        %v959 = vld [vmem:[#allocation5 + $0xf0] sm:$0xf]
        %v960 = vld [vmem:[#allocation5 + $0xf4] sm:$0xf]
        %v961 = vld [vmem:[#allocation5 + $0xf8] sm:$0xf]
        %v962 = vld [vmem:[#allocation5 + $0xfc] sm:$0xf]
        %v963 = vld [vmem:[#allocation5 + $0x100] sm:$0xf]
        %v964 = vld [vmem:[#allocation5 + $0x104] sm:$0xf]
        %v965 = vld [vmem:[#allocation5 + $0x108] sm:$0xf]
        %v966 = vld [vmem:[#allocation5 + $0x10c] sm:$0xf]
        %v967 = vld [vmem:[#allocation5 + $0x110] sm:$0xf]
        %v968 = vld [vmem:[#allocation5 + $0x114] sm:$0xf]
        %v969 = vld [vmem:[#allocation5 + $0x118] sm:$0xf]
        %v970 = vld [vmem:[#allocation5 + $0x11c] sm:$0xf]
        %v971 = vld [vmem:[#allocation5 + $0x120] sm:$0xf]
        %v972 = vld [vmem:[#allocation5 + $0x124] sm:$0xf]
        %v973 = vld [vmem:[#allocation5 + $0x128] sm:$0xf]
        %v974 = vld [vmem:[#allocation5 + $0x12c] sm:$0xf]
        %v975 = vld [vmem:[#allocation5 + $0x130] sm:$0xf]
        %v976 = vld [vmem:[#allocation5 + $0x134] sm:$0xf]
        %v977 = vld [vmem:[#allocation5 + $0x138] sm:$0xf]
        %v978 = vld [vmem:[#allocation5 + $0x13c] sm:$0xf]
        %v979 = vld [vmem:[#allocation5 + $0x140] sm:$0xf]
        %v980 = vld [vmem:[#allocation5 + $0x144] sm:$0xf]
        %v981 = vld [vmem:[#allocation5 + $0x148] sm:$0xf]
        %v982 = vld [vmem:[#allocation5 + $0x14c] sm:$0xf]
        %v983 = vld [vmem:[#allocation5 + $0x150] sm:$0xf]
        %v984 = vld [vmem:[#allocation5 + $0x154] sm:$0xf]
        %v985 = vld [vmem:[#allocation5 + $0x158] sm:$0xf]
        %v986 = vld [vmem:[#allocation5 + $0x15c] sm:$0xf]
        %v987 = vld [vmem:[#allocation5 + $0x160] sm:$0xf]
        %v988 = vld [vmem:[#allocation5 + $0x164] sm:$0xf]
        %v989 = vld [vmem:[#allocation5 + $0x168] sm:$0xf]
        %v990 = vld [vmem:[#allocation5 + $0x16c] sm:$0xf]
        %v991 = vld [vmem:[#allocation5 + $0x170] sm:$0xf]
        %v992 = vld [vmem:[#allocation5 + $0x174] sm:$0xf]
        %v993 = vld [vmem:[#allocation5 + $0x178] sm:$0xf]
        %v994 = vld [vmem:[#allocation5 + $0x17c] sm:$0xf]
        %v995 = vld [vmem:[#allocation5 + $0x180] sm:$0xf]
        %v996 = vld [vmem:[#allocation5 + $0x184] sm:$0xf]
        %v997 = vld [vmem:[#allocation5 + $0x188] sm:$0xf]
        %v998 = vld [vmem:[#allocation5 + $0x18c] sm:$0xf]
        %v999 = vld [vmem:[#allocation5 + $0x190] sm:$0xf]
        %v1000 = vld [vmem:[#allocation5 + $0x194] sm:$0xf]
        %v1001 = vld [vmem:[#allocation5 + $0x198] sm:$0xf]
        %v1002 = vld [vmem:[#allocation5 + $0x19c] sm:$0xf]
        %v1003 = vld [vmem:[#allocation5 + $0x1a0] sm:$0xf]
        %v1004 = vld [vmem:[#allocation5 + $0x1a4] sm:$0xf]
        %v1005 = vld [vmem:[#allocation5 + $0x1a8] sm:$0xf]
        %v1006 = vld [vmem:[#allocation5 + $0x1ac] sm:$0xf]
        %v1007 = vld [vmem:[#allocation5 + $0x1b0] sm:$0xf]
        %v1008 = vld [vmem:[#allocation5 + $0x1b4] sm:$0xf]
        %v1009 = vld [vmem:[#allocation5 + $0x1b8] sm:$0xf]
        %v1010 = vld [vmem:[#allocation5 + $0x1bc] sm:$0xf]
        %v1011 = vld [vmem:[#allocation5 + $0x1c0] sm:$0xf]
        %v1012 = vld [vmem:[#allocation5 + $0x1c4] sm:$0xf]
        %v1013 = vld [vmem:[#allocation5 + $0x1c8] sm:$0xf]
        %v1014 = vld [vmem:[#allocation5 + $0x1cc] sm:$0xf]
        %v1015 = vld [vmem:[#allocation5 + $0x1d0] sm:$0xf]
        %v1016 = vld [vmem:[#allocation5 + $0x1d4] sm:$0xf]
        %v1017 = vld [vmem:[#allocation5 + $0x1d8] sm:$0xf]
        %v1018 = vld [vmem:[#allocation5 + $0x1dc] sm:$0xf]
        %v1019 = vld [vmem:[#allocation5 + $0x1e0] sm:$0xf]
        %v1020 = vld [vmem:[#allocation5 + $0x1e4] sm:$0xf]
        %v1021 = vld [vmem:[#allocation5 + $0x1e8] sm:$0xf]
        %v1022 = vld [vmem:[#allocation5 + $0x1ec] sm:$0xf]
        %v1023 = vld [vmem:[#allocation5 + $0x1f0] sm:$0xf]
        %v1024 = vld [vmem:[#allocation5 + $0x1f4] sm:$0xf]
        %v1025 = vld [vmem:[#allocation5 + $0x1f8] sm:$0xf]
        %v1026 = vld [vmem:[#allocation5 + $0x1fc] sm:$0xf]
        %v1027 = vld [vmem:[#allocation5 + $0x200] sm:$0xf]
        %v1028 = vld [vmem:[#allocation5 + $0x204] sm:$0xf]
        %v1029 = vld [vmem:[#allocation5 + $0x208] sm:$0xf]
        %v1030 = vld [vmem:[#allocation5 + $0x20c] sm:$0xf]
        %v1031 = vld [vmem:[#allocation5 + $0x210] sm:$0xf]
        %v1032 = vld [vmem:[#allocation5 + $0x214] sm:$0xf]
        %v1033 = vld [vmem:[#allocation5 + $0x218] sm:$0xf]
        %v1034 = vld [vmem:[#allocation5 + $0x21c] sm:$0xf]
        %v1035 = vld [vmem:[#allocation5 + $0x220] sm:$0xf]
        %v1036 = vld [vmem:[#allocation5 + $0x224] sm:$0xf]
        %v1037 = vld [vmem:[#allocation5 + $0x228] sm:$0xf]
        %v1038 = vld [vmem:[#allocation5 + $0x22c] sm:$0xf]
        %v1039 = vld [vmem:[#allocation5 + $0x230] sm:$0xf]
        %v1040 = vld [vmem:[#allocation5 + $0x234] sm:$0xf]
        %v1041 = vld [vmem:[#allocation5 + $0x238] sm:$0xf]
        %v1042 = vld [vmem:[#allocation5 + $0x23c] sm:$0xf]
        %v1043 = vld [vmem:[%s2] sm:$0x1]
        %v1045 = vlaneseq
        %v1046 = vshrl.u32 %v1045, 7
        %v1047 = vsub.s32 0, %v1046
        %v1048 = vrot.slane %v1043, %v1047
        %v1194 = vunpack.c.l.b16 %v899
        %v1195 = vunpack.c.l.b16 %v900
        %v1196 = vunpack.c.l.b16 %v901
        %v1197 = vunpack.c.l.b16 %v902
        %v1198 = vunpack.c.l.b16 %v903
        %v1199 = vunpack.c.l.b16 %v904
        %v1200 = vunpack.c.l.b16 %v905
        %v1201 = vunpack.c.l.b16 %v906
        %v1202 = vunpack.c.l.b16 %v907
        %v1203 = vunpack.c.l.b16 %v908
        %v1204 = vunpack.c.l.b16 %v909
        %v1205 = vunpack.c.l.b16 %v910
        %v1206 = vunpack.c.l.b16 %v911
        %v1207 = vunpack.c.l.b16 %v912
        %v1208 = vunpack.c.l.b16 %v913
        %v1209 = vunpack.c.l.b16 %v914
        %v1210 = vunpack.c.l.b16 %v915
        %v1211 = vunpack.c.l.b16 %v916
        %v1212 = vunpack.c.l.b16 %v917
        %v1213 = vunpack.c.l.b16 %v918
        %v1214 = vunpack.c.l.b16 %v919
        %v1215 = vunpack.c.l.b16 %v920
        %v1216 = vunpack.c.l.b16 %v921
        %v1217 = vunpack.c.l.b16 %v922
        %v1218 = vunpack.c.l.b16 %v923
        %v1219 = vunpack.c.l.b16 %v924
        %v1220 = vunpack.c.l.b16 %v925
        %v1221 = vunpack.c.l.b16 %v926
        %v1222 = vunpack.c.l.b16 %v927
        %v1223 = vunpack.c.l.b16 %v928
        %v1224 = vunpack.c.l.b16 %v929
        %v1225 = vunpack.c.l.b16 %v930
        %v1226 = vunpack.c.l.b16 %v931
        %v1227 = vunpack.c.l.b16 %v932
        %v1228 = vunpack.c.l.b16 %v933
        %v1229 = vunpack.c.l.b16 %v934
        %v1230 = vunpack.c.l.b16 %v935
        %v1231 = vunpack.c.l.b16 %v936
        %v1232 = vunpack.c.l.b16 %v937
        %v1233 = vunpack.c.l.b16 %v938
        %v1234 = vunpack.c.l.b16 %v939
        %v1235 = vunpack.c.l.b16 %v940
        %v1236 = vunpack.c.l.b16 %v941
        %v1237 = vunpack.c.l.b16 %v942
        %v1238 = vunpack.c.l.b16 %v943
        %v1239 = vunpack.c.l.b16 %v944
        %v1240 = vunpack.c.l.b16 %v945
        %v1241 = vunpack.c.l.b16 %v946
        %v1242 = vunpack.c.l.b16 %v947
        %v1243 = vunpack.c.l.b16 %v948
        %v1244 = vunpack.c.l.b16 %v949
        %v1245 = vunpack.c.l.b16 %v950
        %v1246 = vunpack.c.l.b16 %v951
        %v1247 = vunpack.c.l.b16 %v952
        %v1248 = vunpack.c.l.b16 %v953
        %v1249 = vunpack.c.l.b16 %v954
        %v1250 = vunpack.c.l.b16 %v955
        %v1251 = vunpack.c.l.b16 %v956
        %v1252 = vunpack.c.l.b16 %v957
        %v1253 = vunpack.c.l.b16 %v958
        %v1254 = vunpack.c.l.b16 %v959
        %v1255 = vunpack.c.l.b16 %v960
        %v1256 = vunpack.c.l.b16 %v961
        %v1257 = vunpack.c.l.b16 %v962
        %v1258 = vunpack.c.l.b16 %v963
        %v1259 = vunpack.c.l.b16 %v964
        %v1260 = vunpack.c.l.b16 %v965
        %v1261 = vunpack.c.l.b16 %v966
        %v1262 = vunpack.c.l.b16 %v967
        %v1263 = vunpack.c.l.b16 %v968
        %v1264 = vunpack.c.l.b16 %v969
        %v1265 = vunpack.c.l.b16 %v970
        %v1266 = vunpack.c.l.b16 %v971
        %v1267 = vunpack.c.l.b16 %v972
        %v1268 = vunpack.c.l.b16 %v973
        %v1269 = vunpack.c.l.b16 %v974
        %v1270 = vunpack.c.l.b16 %v975
        %v1271 = vunpack.c.l.b16 %v976
        %v1272 = vunpack.c.l.b16 %v977
        %v1273 = vunpack.c.l.b16 %v978
        %v1274 = vunpack.c.l.b16 %v979
        %v1275 = vunpack.c.l.b16 %v980
        %v1276 = vunpack.c.l.b16 %v981
        %v1277 = vunpack.c.l.b16 %v982
        %v1278 = vunpack.c.l.b16 %v983
        %v1279 = vunpack.c.l.b16 %v984
        %v1280 = vunpack.c.l.b16 %v985
        %v1281 = vunpack.c.l.b16 %v986
        %v1282 = vunpack.c.l.b16 %v987
        %v1283 = vunpack.c.l.b16 %v988
        %v1284 = vunpack.c.l.b16 %v989
        %v1285 = vunpack.c.l.b16 %v990
        %v1286 = vunpack.c.l.b16 %v991
        %v1287 = vunpack.c.l.b16 %v992
        %v1288 = vunpack.c.l.b16 %v993
        %v1289 = vunpack.c.l.b16 %v994
        %v1290 = vunpack.c.l.b16 %v995
        %v1291 = vunpack.c.l.b16 %v996
        %v1292 = vunpack.c.l.b16 %v997
        %v1293 = vunpack.c.l.b16 %v998
        %v1294 = vunpack.c.l.b16 %v999
        %v1295 = vunpack.c.l.b16 %v1000
        %v1296 = vunpack.c.l.b16 %v1001
        %v1297 = vunpack.c.l.b16 %v1002
        %v1298 = vunpack.c.l.b16 %v1003
        %v1299 = vunpack.c.l.b16 %v1004
        %v1300 = vunpack.c.l.b16 %v1005
        %v1301 = vunpack.c.l.b16 %v1006
        %v1302 = vunpack.c.l.b16 %v1007
        %v1303 = vunpack.c.l.b16 %v1008
        %v1304 = vunpack.c.l.b16 %v1009
        %v1305 = vunpack.c.l.b16 %v1010
        %v1306 = vunpack.c.l.b16 %v1011
        %v1307 = vunpack.c.l.b16 %v1012
        %v1308 = vunpack.c.l.b16 %v1013
        %v1309 = vunpack.c.l.b16 %v1014
        %v1310 = vunpack.c.l.b16 %v1015
        %v1311 = vunpack.c.l.b16 %v1016
        %v1312 = vunpack.c.l.b16 %v1017
        %v1313 = vunpack.c.l.b16 %v1018
        %v1314 = vunpack.c.l.b16 %v1019
        %v1315 = vunpack.c.l.b16 %v1020
        %v1316 = vunpack.c.l.b16 %v1021
        %v1317 = vunpack.c.l.b16 %v1022
        %v1318 = vunpack.c.l.b16 %v1023
        %v1319 = vunpack.c.l.b16 %v1024
        %v1320 = vunpack.c.l.b16 %v1025
        %v1321 = vunpack.c.l.b16 %v1026
        %v1322 = vunpack.c.l.b16 %v1027
        %v1323 = vunpack.c.l.b16 %v1028
        %v1324 = vunpack.c.l.b16 %v1029
        %v1325 = vunpack.c.l.b16 %v1030
        %v1326 = vunpack.c.l.b16 %v1031
        %v1327 = vunpack.c.l.b16 %v1032
        %v1328 = vunpack.c.l.b16 %v1033
        %v1329 = vunpack.c.l.b16 %v1034
        %v1330 = vunpack.c.l.b16 %v1035
        %v1331 = vunpack.c.l.b16 %v1036
        %v1332 = vunpack.c.l.b16 %v1037
        %v1333 = vunpack.c.l.b16 %v1038
        %v1334 = vunpack.c.l.b16 %v1039
        %v1335 = vunpack.c.l.b16 %v1040
        %v1336 = vunpack.c.l.b16 %v1041
        %v1337 = vunpack.c.l.b16 %v1042
        %v1338 = vpack.c.b16 %v1195, %v1194
        %v1339 = vpack.c.b16 %v1197, %v1196
        %v1340 = vpack.c.b16 %v1199, %v1198
        %v1341 = vpack.c.b16 %v1201, %v1200
        %v1342 = vpack.c.b16 %v1203, %v1202
        %v1343 = vpack.c.b16 %v1205, %v1204
        %v1344 = vpack.c.b16 %v1207, %v1206
        %v1345 = vpack.c.b16 %v1209, %v1208
        %v1346 = vpack.c.b16 %v1211, %v1210
        %v1347 = vpack.c.b16 %v1213, %v1212
        %v1348 = vpack.c.b16 %v1215, %v1214
        %v1349 = vpack.c.b16 %v1217, %v1216
        %v1350 = vpack.c.b16 %v1219, %v1218
        %v1351 = vpack.c.b16 %v1221, %v1220
        %v1352 = vpack.c.b16 %v1223, %v1222
        %v1353 = vpack.c.b16 %v1225, %v1224
        %v1354 = vpack.c.b16 %v1227, %v1226
        %v1355 = vpack.c.b16 %v1229, %v1228
        %v1356 = vpack.c.b16 %v1231, %v1230
        %v1357 = vpack.c.b16 %v1233, %v1232
        %v1358 = vpack.c.b16 %v1235, %v1234
        %v1359 = vpack.c.b16 %v1237, %v1236
        %v1360 = vpack.c.b16 %v1239, %v1238
        %v1361 = vpack.c.b16 %v1241, %v1240
        %v1362 = vpack.c.b16 %v1243, %v1242
        %v1363 = vpack.c.b16 %v1245, %v1244
        %v1364 = vpack.c.b16 %v1247, %v1246
        %v1365 = vpack.c.b16 %v1249, %v1248
        %v1366 = vpack.c.b16 %v1251, %v1250
        %v1367 = vpack.c.b16 %v1253, %v1252
        %v1368 = vpack.c.b16 %v1255, %v1254
        %v1369 = vpack.c.b16 %v1257, %v1256
        %v1370 = vpack.c.b16 %v1259, %v1258
        %v1371 = vpack.c.b16 %v1261, %v1260
        %v1372 = vpack.c.b16 %v1263, %v1262
        %v1373 = vpack.c.b16 %v1265, %v1264
        %v1374 = vpack.c.b16 %v1267, %v1266
        %v1375 = vpack.c.b16 %v1269, %v1268
        %v1376 = vpack.c.b16 %v1271, %v1270
        %v1377 = vpack.c.b16 %v1273, %v1272
        %v1378 = vpack.c.b16 %v1275, %v1274
        %v1379 = vpack.c.b16 %v1277, %v1276
        %v1380 = vpack.c.b16 %v1279, %v1278
        %v1381 = vpack.c.b16 %v1281, %v1280
        %v1382 = vpack.c.b16 %v1283, %v1282
        %v1383 = vpack.c.b16 %v1285, %v1284
        %v1384 = vpack.c.b16 %v1287, %v1286
        %v1385 = vpack.c.b16 %v1289, %v1288
        %v1386 = vpack.c.b16 %v1291, %v1290
        %v1387 = vpack.c.b16 %v1293, %v1292
        %v1388 = vpack.c.b16 %v1295, %v1294
        %v1389 = vpack.c.b16 %v1297, %v1296
        %v1390 = vpack.c.b16 %v1299, %v1298
        %v1391 = vpack.c.b16 %v1301, %v1300
        %v1392 = vpack.c.b16 %v1303, %v1302
        %v1393 = vpack.c.b16 %v1305, %v1304
        %v1394 = vpack.c.b16 %v1307, %v1306
        %v1395 = vpack.c.b16 %v1309, %v1308
        %v1396 = vpack.c.b16 %v1311, %v1310
        %v1397 = vpack.c.b16 %v1313, %v1312
        %v1398 = vpack.c.b16 %v1315, %v1314
        %v1399 = vpack.c.b16 %v1317, %v1316
        %v1400 = vpack.c.b16 %v1319, %v1318
        %v1401 = vpack.c.b16 %v1321, %v1320
        %v1402 = vpack.c.b16 %v1323, %v1322
        %v1403 = vpack.c.b16 %v1325, %v1324
        %v1404 = vpack.c.b16 %v1327, %v1326
        %v1405 = vpack.c.b16 %v1329, %v1328
        %v1406 = vpack.c.b16 %v1331, %v1330
        %v1407 = vpack.c.b16 %v1333, %v1332
        %v1408 = vpack.c.b16 %v1335, %v1334
        %v1409 = vpack.c.b16 %v1337, %v1336
        %1482 = vmatprep.subr.bf16.mxu0 0
        %1483 = vmatpush1.bf16.msra.mxu0 %v1338
        %1484 = vmatprep.subr.bf16.mxu0 0
        %1485 = vmatpush1.bf16.msra.mxu0 %v1339
        %1486 = vmatprep.subr.bf16.mxu0 0
        %1487 = vmatpush1.bf16.msra.mxu0 %v1340
        %1488 = vmatprep.subr.bf16.mxu0 0
        %1489 = vmatpush1.bf16.msra.mxu0 %v1341
        %1490 = vmatprep.subr.bf16.mxu0 0
        %1491 = vmatpush1.bf16.msra.mxu0 %v1342
        %1492 = vmatprep.subr.bf16.mxu0 0
        %1493 = vmatpush1.bf16.msra.mxu0 %v1343
        %1494 = vmatprep.subr.bf16.mxu0 0
        %1495 = vmatpush1.bf16.msra.mxu0 %v1344
        %1496 = vmatprep.subr.bf16.mxu0 0
        %1497 = vmatpush1.bf16.msra.mxu0 %v1345
        %1498 = vmatprep.subr.bf16.mxu0 0
        %1499 = vmatpush1.bf16.msra.mxu0 %v1346
        %1500 = vmatprep.subr.bf16.mxu0 0
        %1501 = vmatpush1.bf16.msra.mxu0 %v1347
        %1502 = vmatprep.subr.bf16.mxu0 0
        %1503 = vmatpush1.bf16.msra.mxu0 %v1348
        %1504 = vmatprep.subr.bf16.mxu0 0
        %1505 = vmatpush1.bf16.msra.mxu0 %v1349
        %1506 = vmatprep.subr.bf16.mxu0 0
        %1507 = vmatpush1.bf16.msra.mxu0 %v1350
        %1508 = vmatprep.subr.bf16.mxu0 0
        %1509 = vmatpush1.bf16.msra.mxu0 %v1351
        %1510 = vmatprep.subr.bf16.mxu0 0
        %1511 = vmatpush1.bf16.msra.mxu0 %v1352
        %1512 = vmatprep.subr.bf16.mxu0 0
        %1513 = vmatpush1.bf16.msra.mxu0 %v1353
        %1514 = vmatprep.mubr.bf16.mxu0 %v856
        %1515 = vmatmul.mubr.bf16.gmra.mrb[0].mxu0 %v848
        %v1516 = vpop.f32.mrb[0].mxu0
        %v1517 = vadd.f32 %v1048, %v1516
        %v1518 = vpop.f32.mrb[0].mxu0
        %v1519 = vpop.f32.mrb[0].mxu0
        %v1520 = vadd.f32 %v1048, %v1519
        %v1521 = vpop.f32.mrb[0].mxu0
        %1522 = vmatprep.mubr.bf16.mxu0 %v857
        %1523 = vmatmul.mubr.bf16.gmra.mrb[0].mxu0 %v849
        %v1524 = vpop.f32.mrb[0].mxu0
        %v1525 = vadd.f32 %v1048, %v1524
        %v1526 = vpop.f32.mrb[0].mxu0
        %v1527 = vpop.f32.mrb[0].mxu0
        %v1528 = vadd.f32 %v1048, %v1527
        %v1529 = vpop.f32.mrb[0].mxu0
        %1530 = vmatprep.mubr.bf16.mxu0 %v858
        %1531 = vmatmul.mubr.bf16.gmra.mrb[0].mxu0 %v850
        %v1532 = vpop.f32.mrb[0].mxu0
        %v1533 = vadd.f32 %v1048, %v1532
        %v1534 = vpop.f32.mrb[0].mxu0
        %v1535 = vpop.f32.mrb[0].mxu0
        %v1536 = vadd.f32 %v1048, %v1535
        %v1537 = vpop.f32.mrb[0].mxu0
        %1538 = vmatprep.mubr.bf16.mxu0 %v859
        %1539 = vmatmul.mubr.bf16.gmra.mrb[0].mxu0 %v851
        %v1540 = vpop.f32.mrb[0].mxu0
        %v1541 = vadd.f32 %v1048, %v1540
        %v1542 = vpop.f32.mrb[0].mxu0
        %v1543 = vpop.f32.mrb[0].mxu0
        %v1544 = vadd.f32 %v1048, %v1543
        %v1545 = vpop.f32.mrb[0].mxu0
        %1546 = vmatprep.mubr.bf16.mxu0 %v860
        %1547 = vmatmul.mubr.bf16.gmra.mrb[0].mxu0 %v852
        %v1548 = vpop.f32.mrb[0].mxu0
        %v1549 = vadd.f32 %v1048, %v1548
        %v1550 = vpop.f32.mrb[0].mxu0
        %v1551 = vpop.f32.mrb[0].mxu0
        %v1552 = vadd.f32 %v1048, %v1551
        %v1553 = vpop.f32.mrb[0].mxu0
        %1554 = vmatprep.mubr.bf16.mxu0 %v861
        %1555 = vmatmul.mubr.bf16.gmra.mrb[0].mxu0 %v853
        %v1556 = vpop.f32.mrb[0].mxu0
        %v1557 = vadd.f32 %v1048, %v1556
        %v1558 = vpop.f32.mrb[0].mxu0
        %v1559 = vpop.f32.mrb[0].mxu0
        %v1560 = vadd.f32 %v1048, %v1559
        %v1561 = vpop.f32.mrb[0].mxu0
        %1562 = vmatprep.mubr.bf16.mxu0 %v862
        %1563 = vmatmul.mubr.bf16.gmra.mrb[0].mxu0 %v854
        %v1564 = vpop.f32.mrb[0].mxu0
        %v1565 = vadd.f32 %v1048, %v1564
        %v1566 = vpop.f32.mrb[0].mxu0
        %v1567 = vpop.f32.mrb[0].mxu0
        %v1568 = vadd.f32 %v1048, %v1567
        %v1569 = vpop.f32.mrb[0].mxu0
        %1570 = vmatprep.mubr.bf16.mxu0 %v863
        %1571 = vmatmul.mubr.bf16.gmra.mrb[0].mxu0 %v855
        %v1572 = vpop.f32.mrb[0].mxu0
        %v1573 = vadd.f32 %v1048, %v1572
        %v1574 = vpop.f32.mrb[0].mxu0
        %v1575 = vpop.f32.mrb[0].mxu0
        %v1576 = vadd.f32 %v1048, %v1575
        %v1577 = vpop.f32.mrb[0].mxu0
        %1578 = vdwg.mxu0
        %1579 = vmatprep.subr.bf16.mxu0 0
        %1580 = vmatpush1.bf16.msra.mxu0 %v1354
        %1581 = vmatprep.subr.bf16.mxu0 0
        %1582 = vmatpush1.bf16.msra.mxu0 %v1355
        %1583 = vmatprep.subr.bf16.mxu0 0
        %1584 = vmatpush1.bf16.msra.mxu0 %v1356
        %1585 = vmatprep.subr.bf16.mxu0 0
        %1586 = vmatpush1.bf16.msra.mxu0 %v1357
        %1587 = vmatprep.subr.bf16.mxu0 0
        %1588 = vmatpush1.bf16.msra.mxu0 %v1358
        %1589 = vmatprep.subr.bf16.mxu0 0
        %1590 = vmatpush1.bf16.msra.mxu0 %v1359
        %1591 = vmatprep.subr.bf16.mxu0 0
        %1592 = vmatpush1.bf16.msra.mxu0 %v1360
        %1593 = vmatprep.subr.bf16.mxu0 0
        %1594 = vmatpush1.bf16.msra.mxu0 %v1361
        %1595 = vmatprep.subr.bf16.mxu0 0
        %1596 = vmatpush1.bf16.msra.mxu0 %v1362
        %1597 = vmatprep.subr.bf16.mxu0 0
        %1598 = vmatpush1.bf16.msra.mxu0 %v1363
        %1599 = vmatprep.subr.bf16.mxu0 0
        %1600 = vmatpush1.bf16.msra.mxu0 %v1364
        %1601 = vmatprep.subr.bf16.mxu0 0
        %1602 = vmatpush1.bf16.msra.mxu0 %v1365
        %1603 = vmatprep.subr.bf16.mxu0 0
        %1604 = vmatpush1.bf16.msra.mxu0 %v1366
        %1605 = vmatprep.subr.bf16.mxu0 0
        %1606 = vmatpush1.bf16.msra.mxu0 %v1367
        %1607 = vmatprep.subr.bf16.mxu0 0
        %1608 = vmatpush1.bf16.msra.mxu0 %v1368
        %1609 = vmatprep.subr.bf16.mxu0 0
        %1610 = vmatpush1.bf16.msra.mxu0 %v1369
        %1611 = vmatprep.mubr.bf16.mxu0 %v872
        %1612 = vmatmul.mubr.bf16.gmra.mrb[0].mxu0 %v864
        %v1613 = vpop.f32.mrb[0].mxu0
        %v1614 = vadd.f32 %v1517, %v1613
        %v1615 = vpop.f32.mrb[0].mxu0
        %v1616 = vpop.f32.mrb[0].mxu0
        %v1617 = vadd.f32 %v1520, %v1616
        %v1618 = vpop.f32.mrb[0].mxu0
        %1619 = vmatprep.mubr.bf16.mxu0 %v873
        %1620 = vmatmul.mubr.bf16.gmra.mrb[0].mxu0 %v865
        %v1621 = vpop.f32.mrb[0].mxu0
        %v1622 = vadd.f32 %v1525, %v1621
        %v1623 = vpop.f32.mrb[0].mxu0
        %v1624 = vpop.f32.mrb[0].mxu0
        %v1625 = vadd.f32 %v1528, %v1624
        %v1626 = vpop.f32.mrb[0].mxu0
        %1627 = vmatprep.mubr.bf16.mxu0 %v874
        %1628 = vmatmul.mubr.bf16.gmra.mrb[0].mxu0 %v866
        %v1629 = vpop.f32.mrb[0].mxu0
        %v1630 = vadd.f32 %v1533, %v1629
        %v1631 = vpop.f32.mrb[0].mxu0
        %v1632 = vpop.f32.mrb[0].mxu0
        %v1633 = vadd.f32 %v1536, %v1632
        %v1634 = vpop.f32.mrb[0].mxu0
        %1635 = vmatprep.mubr.bf16.mxu0 %v875
        %1636 = vmatmul.mubr.bf16.gmra.mrb[0].mxu0 %v867
        %v1637 = vpop.f32.mrb[0].mxu0
        %v1638 = vadd.f32 %v1541, %v1637
        %v1639 = vpop.f32.mrb[0].mxu0
        %v1640 = vpop.f32.mrb[0].mxu0
        %v1641 = vadd.f32 %v1544, %v1640
        %v1642 = vpop.f32.mrb[0].mxu0
        %1643 = vmatprep.mubr.bf16.mxu0 %v876
        %1644 = vmatmul.mubr.bf16.gmra.mrb[0].mxu0 %v868
        %v1645 = vpop.f32.mrb[0].mxu0
        %v1646 = vadd.f32 %v1549, %v1645
        %v1647 = vpop.f32.mrb[0].mxu0
        %v1648 = vpop.f32.mrb[0].mxu0
        %v1649 = vadd.f32 %v1552, %v1648
        %v1650 = vpop.f32.mrb[0].mxu0
        %1651 = vmatprep.mubr.bf16.mxu0 %v877
        %1652 = vmatmul.mubr.bf16.gmra.mrb[0].mxu0 %v869
        %v1653 = vpop.f32.mrb[0].mxu0
        %v1654 = vadd.f32 %v1557, %v1653
        %v1655 = vpop.f32.mrb[0].mxu0
        %v1656 = vpop.f32.mrb[0].mxu0
        %v1657 = vadd.f32 %v1560, %v1656
        %v1658 = vpop.f32.mrb[0].mxu0
        %1659 = vmatprep.mubr.bf16.mxu0 %v878
        %1660 = vmatmul.mubr.bf16.gmra.mrb[0].mxu0 %v870
        %v1661 = vpop.f32.mrb[0].mxu0
        %v1662 = vadd.f32 %v1565, %v1661
        %v1663 = vpop.f32.mrb[0].mxu0
        %v1664 = vpop.f32.mrb[0].mxu0
        %v1665 = vadd.f32 %v1568, %v1664
        %v1666 = vpop.f32.mrb[0].mxu0
        %1667 = vmatprep.mubr.bf16.mxu0 %v879
        %1668 = vmatmul.mubr.bf16.gmra.mrb[0].mxu0 %v871
        %v1669 = vpop.f32.mrb[0].mxu0
        %v1670 = vadd.f32 %v1573, %v1669
        %v1671 = vpop.f32.mrb[0].mxu0
        %v1672 = vpop.f32.mrb[0].mxu0
        %v1673 = vadd.f32 %v1576, %v1672
        %v1674 = vpop.f32.mrb[0].mxu0
        %1675 = vdwg.mxu0
        %1676 = vmatprep.subr.bf16.mxu0 0
        %1677 = vmatpush1.bf16.msra.mxu0 %v1370
        %1678 = vmatprep.subr.bf16.mxu0 0
        %1679 = vmatpush1.bf16.msra.mxu0 %v1371
        %1680 = vmatprep.subr.bf16.mxu0 0
        %1681 = vmatpush1.bf16.msra.mxu0 %v1372
        %1682 = vmatprep.subr.bf16.mxu0 0
        %1683 = vmatpush1.bf16.msra.mxu0 %v1373
        %1684 = vmatprep.subr.bf16.mxu0 0
        %1685 = vmatpush1.bf16.msra.mxu0 %v1374
        %1686 = vmatprep.subr.bf16.mxu0 0
        %1687 = vmatpush1.bf16.msra.mxu0 %v1375
        %1688 = vmatprep.subr.bf16.mxu0 0
        %1689 = vmatpush1.bf16.msra.mxu0 %v1376
        %1690 = vmatprep.subr.bf16.mxu0 0
        %1691 = vmatpush1.bf16.msra.mxu0 %v1377
        %1692 = vmatprep.subr.bf16.mxu0 0
        %1693 = vmatpush1.bf16.msra.mxu0 %v1378
        %1694 = vmatprep.subr.bf16.mxu0 0
        %1695 = vmatpush1.bf16.msra.mxu0 %v1379
        %1696 = vmatprep.subr.bf16.mxu0 0
        %1697 = vmatpush1.bf16.msra.mxu0 %v1380
        %1698 = vmatprep.subr.bf16.mxu0 0
        %1699 = vmatpush1.bf16.msra.mxu0 %v1381
        %1700 = vmatprep.subr.bf16.mxu0 0
        %1701 = vmatpush1.bf16.msra.mxu0 %v1382
        %1702 = vmatprep.subr.bf16.mxu0 0
        %1703 = vmatpush1.bf16.msra.mxu0 %v1383
        %1704 = vmatprep.subr.bf16.mxu0 0
        %1705 = vmatpush1.bf16.msra.mxu0 %v1384
        %1706 = vmatprep.subr.bf16.mxu0 0
        %1707 = vmatpush1.bf16.msra.mxu0 %v1385
        %1708 = vmatprep.mubr.bf16.mxu0 %v888
        %1709 = vmatmul.mubr.bf16.gmra.mrb[0].mxu0 %v880
        %v1710 = vpop.f32.mrb[0].mxu0
        %v1711 = vadd.f32 %v1614, %v1710
        %v1712 = vpop.f32.mrb[0].mxu0
        %v1713 = vpop.f32.mrb[0].mxu0
        %v1714 = vadd.f32 %v1617, %v1713
        %v1715 = vpop.f32.mrb[0].mxu0
        %1716 = vmatprep.mubr.bf16.mxu0 %v889
        %1717 = vmatmul.mubr.bf16.gmra.mrb[0].mxu0 %v881
        %v1718 = vpop.f32.mrb[0].mxu0
        %v1719 = vadd.f32 %v1622, %v1718
        %v1720 = vpop.f32.mrb[0].mxu0
        %v1721 = vpop.f32.mrb[0].mxu0
        %v1722 = vadd.f32 %v1625, %v1721
        %v1723 = vpop.f32.mrb[0].mxu0
        %1724 = vmatprep.mubr.bf16.mxu0 %v890
        %1725 = vmatmul.mubr.bf16.gmra.mrb[0].mxu0 %v882
        %v1726 = vpop.f32.mrb[0].mxu0
        %v1727 = vadd.f32 %v1630, %v1726
        %v1728 = vpop.f32.mrb[0].mxu0
        %v1729 = vpop.f32.mrb[0].mxu0
        %v1730 = vadd.f32 %v1633, %v1729
        %v1731 = vpop.f32.mrb[0].mxu0
        %1732 = vmatprep.mubr.bf16.mxu0 %v891
        %1733 = vmatmul.mubr.bf16.gmra.mrb[0].mxu0 %v883
        %v1734 = vpop.f32.mrb[0].mxu0
        %v1735 = vadd.f32 %v1638, %v1734
        %v1736 = vpop.f32.mrb[0].mxu0
        %v1737 = vpop.f32.mrb[0].mxu0
        %v1738 = vadd.f32 %v1641, %v1737
        %v1739 = vpop.f32.mrb[0].mxu0
        %1740 = vmatprep.mubr.bf16.mxu0 %v892
        %1741 = vmatmul.mubr.bf16.gmra.mrb[0].mxu0 %v884
        %v1742 = vpop.f32.mrb[0].mxu0
        %v1743 = vadd.f32 %v1646, %v1742
        %v1744 = vpop.f32.mrb[0].mxu0
        %v1745 = vpop.f32.mrb[0].mxu0
        %v1746 = vadd.f32 %v1649, %v1745
        %v1747 = vpop.f32.mrb[0].mxu0
        %1748 = vmatprep.mubr.bf16.mxu0 %v893
        %1749 = vmatmul.mubr.bf16.gmra.mrb[0].mxu0 %v885
        %v1750 = vpop.f32.mrb[0].mxu0
        %v1751 = vadd.f32 %v1654, %v1750
        %v1752 = vpop.f32.mrb[0].mxu0
        %v1753 = vpop.f32.mrb[0].mxu0
        %v1754 = vadd.f32 %v1657, %v1753
        %v1755 = vpop.f32.mrb[0].mxu0
        %1756 = vmatprep.mubr.bf16.mxu0 %v894
        %1757 = vmatmul.mubr.bf16.gmra.mrb[0].mxu0 %v886
        %v1758 = vpop.f32.mrb[0].mxu0
        %v1759 = vadd.f32 %v1662, %v1758
        %v1760 = vpop.f32.mrb[0].mxu0
        %v1761 = vpop.f32.mrb[0].mxu0
        %v1762 = vadd.f32 %v1665, %v1761
        %v1763 = vpop.f32.mrb[0].mxu0
        %1764 = vmatprep.mubr.bf16.mxu0 %v895
        %1765 = vmatmul.mubr.bf16.gmra.mrb[0].mxu0 %v887
        %v1766 = vpop.f32.mrb[0].mxu0
        %v1767 = vadd.f32 %v1670, %v1766
        %v1768 = vpop.f32.mrb[0].mxu0
        %v1769 = vpop.f32.mrb[0].mxu0
        %v1770 = vadd.f32 %v1673, %v1769
        %v1771 = vpop.f32.mrb[0].mxu0
        %1772 = vdwg.mxu0
        %1773 = vmatprep.subr.bf16.mxu0 0
        %1774 = vmatpush1.bf16.msra.mxu0 %v1386
        %1775 = vmatprep.subr.bf16.mxu0 0
        %1776 = vmatpush1.bf16.msra.mxu0 %v1387
        %1777 = vmatprep.subr.bf16.mxu0 0
        %1778 = vmatpush1.bf16.msra.mxu0 %v1388
        %1779 = vmatprep.subr.bf16.mxu0 0
        %1780 = vmatpush1.bf16.msra.mxu0 %v1389
        %1781 = vmatprep.subr.bf16.mxu0 0
        %1782 = vmatpush1.bf16.msra.mxu0 %v1390
        %1783 = vmatprep.subr.bf16.mxu0 0
        %1784 = vmatpush1.bf16.msra.mxu0 %v1391
        %1785 = vmatprep.subr.bf16.mxu0 0
        %1786 = vmatpush1.bf16.msra.mxu0 %v1392
        %1787 = vmatprep.subr.bf16.mxu0 0
        %1788 = vmatpush1.bf16.msra.mxu0 %v1393
        %1789 = vmatprep.subr.bf16.mxu0 0
        %1790 = vmatpush1.bf16.msra.mxu0 %v1394
        %1791 = vmatprep.subr.bf16.mxu0 0
        %1792 = vmatpush1.bf16.msra.mxu0 %v1395
        %1793 = vmatprep.subr.bf16.mxu0 0
        %1794 = vmatpush1.bf16.msra.mxu0 %v1396
        %1795 = vmatprep.subr.bf16.mxu0 0
        %1796 = vmatpush1.bf16.msra.mxu0 %v1397
        %1797 = vmatprep.subr.bf16.mxu0 0
        %1798 = vmatpush1.bf16.msra.mxu0 %v1398
        %1799 = vmatprep.subr.bf16.mxu0 0
        %1800 = vmatpush1.bf16.msra.mxu0 %v1399
        %1801 = vmatprep.subr.bf16.mxu0 0
        %1802 = vmatpush1.bf16.msra.mxu0 %v1400
        %1803 = vmatprep.subr.bf16.mxu0 0
        %1804 = vmatpush1.bf16.msra.mxu0 %v1401
        %1805 = vmatprep.mubr.bf16.mxu0 %v857
        %1806 = vmatmul.mubr.bf16.gmra.mrb[0].mxu0 %v849
        %v1807 = vpop.f32.mrb[0].mxu0
        %v1808 = vadd.f32 %v1711, %v1807
        %v1809 = vpop.f32.mrb[0].mxu0
        %v1810 = vpop.f32.mrb[0].mxu0
        %v1811 = vadd.f32 %v1714, %v1810
        %v1812 = vpop.f32.mrb[0].mxu0
        %1813 = vmatprep.mubr.bf16.mxu0 %v858
        %1814 = vmatmul.mubr.bf16.gmra.mrb[0].mxu0 %v850
        %v1815 = vpop.f32.mrb[0].mxu0
        %v1816 = vadd.f32 %v1719, %v1815
        %v1817 = vpop.f32.mrb[0].mxu0
        %v1818 = vpop.f32.mrb[0].mxu0
        %v1819 = vadd.f32 %v1722, %v1818
        %v1820 = vpop.f32.mrb[0].mxu0
        %1821 = vmatprep.mubr.bf16.mxu0 %v859
        %1822 = vmatmul.mubr.bf16.gmra.mrb[0].mxu0 %v851
        %v1823 = vpop.f32.mrb[0].mxu0
        %v1824 = vadd.f32 %v1727, %v1823
        %v1825 = vpop.f32.mrb[0].mxu0
        %v1826 = vpop.f32.mrb[0].mxu0
        %v1827 = vadd.f32 %v1730, %v1826
        %v1828 = vpop.f32.mrb[0].mxu0
        %1829 = vmatprep.mubr.bf16.mxu0 %v860
        %1830 = vmatmul.mubr.bf16.gmra.mrb[0].mxu0 %v852
        %v1831 = vpop.f32.mrb[0].mxu0
        %v1832 = vadd.f32 %v1735, %v1831
        %v1833 = vpop.f32.mrb[0].mxu0
        %v1834 = vpop.f32.mrb[0].mxu0
        %v1835 = vadd.f32 %v1738, %v1834
        %v1836 = vpop.f32.mrb[0].mxu0
        %1837 = vmatprep.mubr.bf16.mxu0 %v861
        %1838 = vmatmul.mubr.bf16.gmra.mrb[0].mxu0 %v853
        %v1839 = vpop.f32.mrb[0].mxu0
        %v1840 = vadd.f32 %v1743, %v1839
        %v1841 = vpop.f32.mrb[0].mxu0
        %v1842 = vpop.f32.mrb[0].mxu0
        %v1843 = vadd.f32 %v1746, %v1842
        %v1844 = vpop.f32.mrb[0].mxu0
        %1845 = vmatprep.mubr.bf16.mxu0 %v862
        %1846 = vmatmul.mubr.bf16.gmra.mrb[0].mxu0 %v854
        %v1847 = vpop.f32.mrb[0].mxu0
        %v1848 = vadd.f32 %v1751, %v1847
        %v1849 = vpop.f32.mrb[0].mxu0
        %v1850 = vpop.f32.mrb[0].mxu0
        %v1851 = vadd.f32 %v1754, %v1850
        %v1852 = vpop.f32.mrb[0].mxu0
        %1853 = vmatprep.mubr.bf16.mxu0 %v863
        %1854 = vmatmul.mubr.bf16.gmra.mrb[0].mxu0 %v855
        %v1855 = vpop.f32.mrb[0].mxu0
        %v1856 = vadd.f32 %v1759, %v1855
        %v1857 = vpop.f32.mrb[0].mxu0
        %v1858 = vpop.f32.mrb[0].mxu0
        %v1859 = vadd.f32 %v1762, %v1858
        %v1860 = vpop.f32.mrb[0].mxu0
        %1861 = vmatprep.mubr.bf16.mxu0 %v897
        %1862 = vmatmul.mubr.bf16.gmra.mrb[0].mxu0 %v896
        %v1863 = vpop.f32.mrb[0].mxu0
        %v1864 = vadd.f32 %v1767, %v1863
        %v1865 = vpop.f32.mrb[0].mxu0
        %v1866 = vpop.f32.mrb[0].mxu0
        %v1867 = vadd.f32 %v1770, %v1866
        %v1868 = vpop.f32.mrb[0].mxu0
        %1869 = vdwg.mxu0
        %1870 = vmatprep.subr.bf16.mxu0 0
        %1871 = vmatpush1.bf16.msra.mxu0 %v1402
        %1872 = vmatprep.subr.bf16.mxu0 0
        %1873 = vmatpush1.bf16.msra.mxu0 %v1403
        %1874 = vmatprep.subr.bf16.mxu0 0
        %1875 = vmatpush1.bf16.msra.mxu0 %v1404
        %1876 = vmatprep.subr.bf16.mxu0 0
        %1877 = vmatpush1.bf16.msra.mxu0 %v1405
        %1878 = vmatprep.subr.bf16.mxu0 0
        %1879 = vmatpush1.bf16.msra.mxu0 %v1406
        %1880 = vmatprep.subr.bf16.mxu0 0
        %1881 = vmatpush1.bf16.msra.mxu0 %v1407
        %1882 = vmatprep.subr.bf16.mxu0 0
        %1883 = vmatpush1.bf16.msra.mxu0 %v1408
        %1884 = vmatprep.subr.bf16.mxu0 0
        %1885 = vmatpush1.bf16.msra.mxu0 %v1409
        %1886 = vmatprep.subr.bf16.mxu0 0
        %1887 = vmatpush1.bf16.msra.mxu0 0
        %1888 = vmatprep.subr.bf16.mxu0 0
        %1889 = vmatpush1.bf16.msra.mxu0 0
        %1890 = vmatprep.subr.bf16.mxu0 0
        %1891 = vmatpush1.bf16.msra.mxu0 0
        %1892 = vmatprep.subr.bf16.mxu0 0
        %1893 = vmatpush1.bf16.msra.mxu0 0
        %1894 = vmatprep.subr.bf16.mxu0 0
        %1895 = vmatpush1.bf16.msra.mxu0 0
        %1896 = vmatprep.subr.bf16.mxu0 0
        %1897 = vmatpush1.bf16.msra.mxu0 0
        %1898 = vmatprep.subr.bf16.mxu0 0
        %1899 = vmatpush1.bf16.msra.mxu0 0
        %1900 = vmatprep.subr.bf16.mxu0 0
        %1901 = vmatpush1.bf16.msra.mxu0 0
        %1902 = vmatprep.mubr.bf16.mxu0 0
        %1903 = vmatmul.mubr.bf16.gmra.mrb[0].mxu0 %v865
        %v1904 = vpop.f32.mrb[0].mxu0
        %v1905 = vadd.f32 %v1808, %v1904
        %v1906 = vpop.f32.mrb[0].mxu0
        %v1907 = vpop.f32.mrb[0].mxu0
        %v1908 = vadd.f32 %v1811, %v1907
        %v1909 = vpop.f32.mrb[0].mxu0
        %1910 = vmatprep.mubr.bf16.mxu0 0
        %1911 = vmatmul.mubr.bf16.gmra.mrb[0].mxu0 %v866
        %v1912 = vpop.f32.mrb[0].mxu0
        %v1913 = vadd.f32 %v1816, %v1912
        %v1914 = vpop.f32.mrb[0].mxu0
        %v1915 = vpop.f32.mrb[0].mxu0
        %v1916 = vadd.f32 %v1819, %v1915
        %v1917 = vpop.f32.mrb[0].mxu0
        %1918 = vmatprep.mubr.bf16.mxu0 0
        %1919 = vmatmul.mubr.bf16.gmra.mrb[0].mxu0 %v867
        %v1920 = vpop.f32.mrb[0].mxu0
        %v1921 = vadd.f32 %v1824, %v1920
        %v1922 = vpop.f32.mrb[0].mxu0
        %v1923 = vpop.f32.mrb[0].mxu0
        %v1924 = vadd.f32 %v1827, %v1923
        %v1925 = vpop.f32.mrb[0].mxu0
        %1926 = vmatprep.mubr.bf16.mxu0 0
        %1927 = vmatmul.mubr.bf16.gmra.mrb[0].mxu0 %v868
        %v1928 = vpop.f32.mrb[0].mxu0
        %v1929 = vadd.f32 %v1832, %v1928
        %v1930 = vpop.f32.mrb[0].mxu0
        %v1931 = vpop.f32.mrb[0].mxu0
        %v1932 = vadd.f32 %v1835, %v1931
        %v1933 = vpop.f32.mrb[0].mxu0
        %1934 = vmatprep.mubr.bf16.mxu0 0
        %1935 = vmatmul.mubr.bf16.gmra.mrb[0].mxu0 %v869
        %v1936 = vpop.f32.mrb[0].mxu0
        %v1937 = vadd.f32 %v1840, %v1936
        %v1938 = vpop.f32.mrb[0].mxu0
        %v1939 = vpop.f32.mrb[0].mxu0
        %v1940 = vadd.f32 %v1843, %v1939
        %v1941 = vpop.f32.mrb[0].mxu0
        %1942 = vmatprep.mubr.bf16.mxu0 0
        %1943 = vmatmul.mubr.bf16.gmra.mrb[0].mxu0 %v870
        %v1944 = vpop.f32.mrb[0].mxu0
        %v1945 = vadd.f32 %v1848, %v1944
        %v1946 = vpop.f32.mrb[0].mxu0
        %v1947 = vpop.f32.mrb[0].mxu0
        %v1948 = vadd.f32 %v1851, %v1947
        %v1949 = vpop.f32.mrb[0].mxu0
        %1950 = vmatprep.mubr.bf16.mxu0 0
        %1951 = vmatmul.mubr.bf16.gmra.mrb[0].mxu0 %v871
        %v1952 = vpop.f32.mrb[0].mxu0
        %v1953 = vadd.f32 %v1856, %v1952
        %v1954 = vpop.f32.mrb[0].mxu0
        %v1955 = vpop.f32.mrb[0].mxu0
        %v1956 = vadd.f32 %v1859, %v1955
        %v1957 = vpop.f32.mrb[0].mxu0
        %1958 = vmatprep.mubr.bf16.mxu0 0
        %1959 = vmatmul.mubr.bf16.gmra.mrb[0].mxu0 %v898
        %v1960 = vpop.f32.mrb[0].mxu0
        %v1961 = vadd.f32 %v1864, %v1960
        %v1962 = vpop.f32.mrb[0].mxu0
        %v1963 = vpop.f32.mrb[0].mxu0
        %v1964 = vadd.f32 %v1867, %v1963
        %v1965 = vpop.f32.mrb[0].mxu0
        %1966 = vdwg.mxu0
        %vm1967 = vcmp.ge.f32.partialorder %v1905, 0.0
        %vm1968 = vcmp.ge.f32.partialorder %v1908, 0.0
        %vm1969 = vcmp.ge.f32.partialorder %v1913, 0.0
        %vm1970 = vcmp.ge.f32.partialorder %v1916, 0.0
        %vm1971 = vcmp.ge.f32.partialorder %v1921, 0.0
        %vm1972 = vcmp.ge.f32.partialorder %v1924, 0.0
        %vm1973 = vcmp.ge.f32.partialorder %v1929, 0.0
        %vm1974 = vcmp.ge.f32.partialorder %v1932, 0.0
        %vm1975 = vcmp.ge.f32.partialorder %v1937, 0.0
        %vm1976 = vcmp.ge.f32.partialorder %v1940, 0.0
        %vm1977 = vcmp.ge.f32.partialorder %v1945, 0.0
        %vm1978 = vcmp.ge.f32.partialorder %v1948, 0.0
        %vm1979 = vcmp.ge.f32.partialorder %v1953, 0.0
        %vm1980 = vcmp.ge.f32.partialorder %v1956, 0.0
        %vm1981 = vcmp.ge.f32.partialorder %v1961, 0.0
        %vm1982 = vcmp.ge.f32.partialorder %v1964, 0.0
        %v1983 = vmul.f32 %v1905, 0.1
        %v1984 = vmul.f32 %v1908, 0.1
        %v1985 = vmul.f32 %v1913, 0.1
        %v1986 = vmul.f32 %v1916, 0.1
        %v1987 = vmul.f32 %v1921, 0.1
        %v1988 = vmul.f32 %v1924, 0.1
        %v1989 = vmul.f32 %v1929, 0.1
        %v1990 = vmul.f32 %v1932, 0.1
        %v1991 = vmul.f32 %v1937, 0.1
        %v1992 = vmul.f32 %v1940, 0.1
        %v1993 = vmul.f32 %v1945, 0.1
        %v1994 = vmul.f32 %v1948, 0.1
        %v1995 = vmul.f32 %v1953, 0.1
        %v1996 = vmul.f32 %v1956, 0.1
        %v1997 = vmul.f32 %v1961, 0.1
        %v1998 = vmul.f32 %v1964, 0.1
        %v1999 = vsel %vm1967, %v1905, %v1983
        %v2000 = vsel %vm1968, %v1908, %v1984
        %v2001 = vsel %vm1969, %v1913, %v1985
        %v2002 = vsel %vm1970, %v1916, %v1986
        %v2003 = vsel %vm1971, %v1921, %v1987
        %v2004 = vsel %vm1972, %v1924, %v1988
        %v2005 = vsel %vm1973, %v1929, %v1989
        %v2006 = vsel %vm1974, %v1932, %v1990
        %v2007 = vsel %vm1975, %v1937, %v1991
        %v2008 = vsel %vm1976, %v1940, %v1992
        %v2009 = vsel %vm1977, %v1945, %v1993
        %v2010 = vsel %vm1978, %v1948, %v1994
        %v2011 = vsel %vm1979, %v1953, %v1995
        %v2012 = vsel %vm1980, %v1956, %v1996
        %v2013 = vsel %vm1981, %v1961, %v1997
        %v2014 = vsel %vm1982, %v1964, %v1998
        %v2031 = vrot.slane %v1999, 7
        %v2032 = vrot.slane %v2000, 7
        %v2033 = vsel %vm654, %v2031, %v2032
        %v2034 = vrot.slane %v2001, 7
        %v2035 = vsel %vm654, %v2032, %v2034
        %v2036 = vrot.slane %v2002, 7
        %v2037 = vsel %vm654, %v2034, %v2036
        %v2038 = vrot.slane %v2003, 7
        %v2039 = vsel %vm654, %v2036, %v2038
        %v2040 = vrot.slane %v2004, 7
        %v2041 = vsel %vm654, %v2038, %v2040
        %v2042 = vrot.slane %v2005, 7
        %v2043 = vsel %vm654, %v2040, %v2042
        %v2044 = vrot.slane %v2006, 7
        %v2045 = vsel %vm654, %v2042, %v2044
        %v2046 = vrot.slane %v2007, 7
        %v2047 = vsel %vm654, %v2044, %v2046
        %v2048 = vrot.slane %v2008, 7
        %v2049 = vsel %vm654, %v2046, %v2048
        %v2050 = vrot.slane %v2009, 7
        %v2051 = vsel %vm654, %v2048, %v2050
        %v2052 = vrot.slane %v2010, 7
        %v2053 = vsel %vm654, %v2050, %v2052
        %v2054 = vrot.slane %v2011, 7
        %v2055 = vsel %vm654, %v2052, %v2054
        %v2056 = vrot.slane %v2012, 7
        %v2057 = vsel %vm654, %v2054, %v2056
        %v2058 = vrot.slane %v2013, 7
        %v2059 = vsel %vm654, %v2056, %v2058
        %v2060 = vrot.slane %v2014, 7
        %v2061 = vsel %vm654, %v2058, %v2060
        %v2078 = vsel %vm654, 0.0, %v2031
        %v2079 = vsel %vm719, %v2078, 0.0
        %v2080 = vsel %vm720, %v2033, 0.0
        %v2081 = vsel %vm721, %v2035, 0.0
        %v2082 = vsel %vm722, %v2037, 0.0
        %v2083 = vsel %vm723, %v2039, 0.0
        %v2084 = vsel %vm724, %v2041, 0.0
        %v2085 = vsel %vm725, %v2043, 0.0
        %v2086 = vsel %vm726, %v2045, 0.0
        %v2087 = vsel %vm727, %v2047, 0.0
        %v2088 = vsel %vm728, %v2049, 0.0
        %v2089 = vsel %vm729, %v2051, 0.0
        %v2090 = vsel %vm730, %v2053, 0.0
        %v2091 = vsel %vm731, %v2055, 0.0
        %v2092 = vsel %vm732, %v2057, 0.0
        %v2093 = vsel %vm733, %v2059, 0.0
        %v2094 = vsel %vm734, %v2061, 0.0
        %v2095 = vrot.slane %v1999, 1
        %v2096 = vrot.slane %v2000, 1
        %v2097 = vsel %vm751, %v2095, %v2096
        %v2098 = vrot.slane %v2001, 1
        %v2099 = vsel %vm751, %v2096, %v2098
        %v2100 = vrot.slane %v2002, 1
        %v2101 = vsel %vm751, %v2098, %v2100
        %v2102 = vrot.slane %v2003, 1
        %v2103 = vsel %vm751, %v2100, %v2102
        %v2104 = vrot.slane %v2004, 1
        %v2105 = vsel %vm751, %v2102, %v2104
        %v2106 = vrot.slane %v2005, 1
        %v2107 = vsel %vm751, %v2104, %v2106
        %v2108 = vrot.slane %v2006, 1
        %v2109 = vsel %vm751, %v2106, %v2108
        %v2110 = vrot.slane %v2007, 1
        %v2111 = vsel %vm751, %v2108, %v2110
        %v2112 = vrot.slane %v2008, 1
        %v2113 = vsel %vm751, %v2110, %v2112
        %v2114 = vrot.slane %v2009, 1
        %v2115 = vsel %vm751, %v2112, %v2114
        %v2116 = vrot.slane %v2010, 1
        %v2117 = vsel %vm751, %v2114, %v2116
        %v2118 = vrot.slane %v2011, 1
        %v2119 = vsel %vm751, %v2116, %v2118
        %v2120 = vrot.slane %v2012, 1
        %v2121 = vsel %vm751, %v2118, %v2120
        %v2122 = vrot.slane %v2013, 1
        %v2123 = vsel %vm751, %v2120, %v2122
        %v2124 = vrot.slane %v2014, 1
        %v2125 = vsel %vm751, %v2122, %v2124
        %v2142 = vsel %vm751, %v2124, 0.0
        %v2143 = vsel %vm816, %v2097, 0.0
        %v2144 = vsel %vm817, %v2099, 0.0
        %v2145 = vsel %vm818, %v2101, 0.0
        %v2146 = vsel %vm819, %v2103, 0.0
        %v2147 = vsel %vm820, %v2105, 0.0
        %v2148 = vsel %vm821, %v2107, 0.0
        %v2149 = vsel %vm822, %v2109, 0.0
        %v2150 = vsel %vm823, %v2111, 0.0
        %v2151 = vsel %vm824, %v2113, 0.0
        %v2152 = vsel %vm825, %v2115, 0.0
        %v2153 = vsel %vm826, %v2117, 0.0
        %v2154 = vsel %vm827, %v2119, 0.0
        %v2155 = vsel %vm828, %v2121, 0.0
        %v2156 = vsel %vm829, %v2123, 0.0
        %v2157 = vsel %vm830, %v2125, 0.0
        %v2158 = vsel %vm831, %v2142, 0.0
        %v2159 = vpack.c.bf16 %v2079, 0.0
        %v2160 = vpack.c.bf16 %v2081, %v2080
        %v2161 = vpack.c.bf16 %v2083, %v2082
        %v2162 = vpack.c.bf16 %v2085, %v2084
        %v2163 = vpack.c.bf16 %v2087, %v2086
        %v2164 = vpack.c.bf16 %v2089, %v2088
        %v2165 = vpack.c.bf16 %v2091, %v2090
        %v2166 = vpack.c.bf16 %v2093, %v2092
        %v2167 = vpack.c.bf16 %v1999, 0.0
        %v2168 = vpack.c.bf16 %v2001, %v2000
        %v2169 = vpack.c.bf16 %v2003, %v2002
        %v2170 = vpack.c.bf16 %v2005, %v2004
        %v2171 = vpack.c.bf16 %v2007, %v2006
        %v2172 = vpack.c.bf16 %v2009, %v2008
        %v2173 = vpack.c.bf16 %v2011, %v2010
        %v2174 = vpack.c.bf16 %v2013, %v2012
        %v2175 = vpack.c.bf16 %v2143, 0.0
        %v2176 = vpack.c.bf16 %v2145, %v2144
        %v2177 = vpack.c.bf16 %v2147, %v2146
        %v2178 = vpack.c.bf16 %v2149, %v2148
        %v2179 = vpack.c.bf16 %v2151, %v2150
        %v2180 = vpack.c.bf16 %v2153, %v2152
        %v2181 = vpack.c.bf16 %v2155, %v2154
        %v2182 = vpack.c.bf16 %v2157, %v2156
        %v2183 = vpack.c.bf16 %v2080, %v2079
        %v2184 = vpack.c.bf16 %v2082, %v2081
        %v2185 = vpack.c.bf16 %v2084, %v2083
        %v2186 = vpack.c.bf16 %v2086, %v2085
        %v2187 = vpack.c.bf16 %v2088, %v2087
        %v2188 = vpack.c.bf16 %v2090, %v2089
        %v2189 = vpack.c.bf16 %v2092, %v2091
        %v2190 = vpack.c.bf16 %v2094, %v2093
        %v2191 = vpack.c.bf16 %v2000, %v1999
        %v2192 = vpack.c.bf16 %v2002, %v2001
        %v2193 = vpack.c.bf16 %v2004, %v2003
        %v2194 = vpack.c.bf16 %v2006, %v2005
        %v2195 = vpack.c.bf16 %v2008, %v2007
        %v2196 = vpack.c.bf16 %v2010, %v2009
        %v2197 = vpack.c.bf16 %v2012, %v2011
        %v2198 = vpack.c.bf16 %v2014, %v2013
        %v2199 = vpack.c.bf16 %v2144, %v2143
        %v2200 = vpack.c.bf16 %v2146, %v2145
        %v2201 = vpack.c.bf16 %v2148, %v2147
        %v2202 = vpack.c.bf16 %v2150, %v2149
        %v2203 = vpack.c.bf16 %v2152, %v2151
        %v2204 = vpack.c.bf16 %v2154, %v2153
        %v2205 = vpack.c.bf16 %v2156, %v2155
        %v2206 = vpack.c.bf16 %v2158, %v2157
        %v2207 = vpack.c.bf16 0.0, %v2094
        %v2208 = vpack.c.bf16 0.0, %v2014
        %v2209 = vpack.c.bf16 0.0, %v2158
        %v2210 = vld [vmem:[#allocation7] sm:$0xf]
        %v2211 = vld [vmem:[#allocation7 + $0x4] sm:$0xf]
        %v2212 = vld [vmem:[#allocation7 + $0x8] sm:$0xf]
        %v2213 = vld [vmem:[#allocation7 + $0xc] sm:$0xf]
        %v2214 = vld [vmem:[#allocation7 + $0x10] sm:$0xf]
        %v2215 = vld [vmem:[#allocation7 + $0x14] sm:$0xf]
        %v2216 = vld [vmem:[#allocation7 + $0x18] sm:$0xf]
        %v2217 = vld [vmem:[#allocation7 + $0x1c] sm:$0xf]
        %v2218 = vld [vmem:[#allocation7 + $0x20] sm:$0xf]
        %v2219 = vld [vmem:[#allocation7 + $0x24] sm:$0xf]
        %v2220 = vld [vmem:[#allocation7 + $0x28] sm:$0xf]
        %v2221 = vld [vmem:[#allocation7 + $0x2c] sm:$0xf]
        %v2222 = vld [vmem:[#allocation7 + $0x30] sm:$0xf]
        %v2223 = vld [vmem:[#allocation7 + $0x34] sm:$0xf]
        %v2224 = vld [vmem:[#allocation7 + $0x38] sm:$0xf]
        %v2225 = vld [vmem:[#allocation7 + $0x3c] sm:$0xf]
        %v2226 = vld [vmem:[#allocation7 + $0x40] sm:$0xf]
        %v2227 = vld [vmem:[#allocation7 + $0x44] sm:$0xf]
        %v2228 = vld [vmem:[#allocation7 + $0x48] sm:$0xf]
        %v2229 = vld [vmem:[#allocation7 + $0x4c] sm:$0xf]
        %v2230 = vld [vmem:[#allocation7 + $0x50] sm:$0xf]
        %v2231 = vld [vmem:[#allocation7 + $0x54] sm:$0xf]
        %v2232 = vld [vmem:[#allocation7 + $0x58] sm:$0xf]
        %v2233 = vld [vmem:[#allocation7 + $0x5c] sm:$0xf]
        %v2234 = vld [vmem:[#allocation7 + $0x60] sm:$0xf]
        %v2235 = vld [vmem:[#allocation7 + $0x64] sm:$0xf]
        %v2236 = vld [vmem:[#allocation7 + $0x68] sm:$0xf]
        %v2237 = vld [vmem:[#allocation7 + $0x6c] sm:$0xf]
        %v2238 = vld [vmem:[#allocation7 + $0x70] sm:$0xf]
        %v2239 = vld [vmem:[#allocation7 + $0x74] sm:$0xf]
        %v2240 = vld [vmem:[#allocation7 + $0x78] sm:$0xf]
        %v2241 = vld [vmem:[#allocation7 + $0x7c] sm:$0xf]
        %v2242 = vld [vmem:[#allocation7 + $0x80] sm:$0xf]
        %v2243 = vld [vmem:[#allocation7 + $0x84] sm:$0xf]
        %v2244 = vld [vmem:[#allocation7 + $0x88] sm:$0xf]
        %v2245 = vld [vmem:[#allocation7 + $0x8c] sm:$0xf]
        %v2246 = vld [vmem:[#allocation7 + $0x90] sm:$0xf]
        %v2247 = vld [vmem:[#allocation7 + $0x94] sm:$0xf]
        %v2248 = vld [vmem:[#allocation7 + $0x98] sm:$0xf]
        %v2249 = vld [vmem:[#allocation7 + $0x9c] sm:$0xf]
        %v2250 = vld [vmem:[#allocation7 + $0xa0] sm:$0xf]
        %v2251 = vld [vmem:[#allocation7 + $0xa4] sm:$0xf]
        %v2252 = vld [vmem:[#allocation7 + $0xa8] sm:$0xf]
        %v2253 = vld [vmem:[#allocation7 + $0xac] sm:$0xf]
        %v2254 = vld [vmem:[#allocation7 + $0xb0] sm:$0xf]
        %v2255 = vld [vmem:[#allocation7 + $0xb4] sm:$0xf]
        %v2256 = vld [vmem:[#allocation7 + $0xb8] sm:$0xf]
        %v2257 = vld [vmem:[#allocation7 + $0xbc] sm:$0xf]
        %v2258 = vld [vmem:[#allocation7 + $0xc0] sm:$0xf]
        %v2259 = vld [vmem:[#allocation7 + $0xc4] sm:$0xf]
        %v2260 = vld [vmem:[#allocation7 + $0xc8] sm:$0xf]
        %v2261 = vld [vmem:[#allocation7 + $0xcc] sm:$0xf]
        %v2262 = vld [vmem:[#allocation7 + $0xd0] sm:$0xf]
        %v2263 = vld [vmem:[#allocation7 + $0xd4] sm:$0xf]
        %v2264 = vld [vmem:[#allocation7 + $0xd8] sm:$0xf]
        %v2265 = vld [vmem:[#allocation7 + $0xdc] sm:$0xf]
        %v2266 = vld [vmem:[#allocation7 + $0xe0] sm:$0xf]
        %v2267 = vld [vmem:[#allocation7 + $0xe4] sm:$0xf]
        %v2268 = vld [vmem:[#allocation7 + $0xe8] sm:$0xf]
        %v2269 = vld [vmem:[#allocation7 + $0xec] sm:$0xf]
        %v2270 = vld [vmem:[#allocation7 + $0xf0] sm:$0xf]
        %v2271 = vld [vmem:[#allocation7 + $0xf4] sm:$0xf]
        %v2272 = vld [vmem:[#allocation7 + $0xf8] sm:$0xf]
        %v2273 = vld [vmem:[#allocation7 + $0xfc] sm:$0xf]
        %v2274 = vld [vmem:[#allocation7 + $0x100] sm:$0xf]
        %v2275 = vld [vmem:[#allocation7 + $0x104] sm:$0xf]
        %v2276 = vld [vmem:[#allocation7 + $0x108] sm:$0xf]
        %v2277 = vld [vmem:[#allocation7 + $0x10c] sm:$0xf]
        %v2278 = vld [vmem:[#allocation7 + $0x110] sm:$0xf]
        %v2279 = vld [vmem:[#allocation7 + $0x114] sm:$0xf]
        %v2280 = vld [vmem:[#allocation7 + $0x118] sm:$0xf]
        %v2281 = vld [vmem:[#allocation7 + $0x11c] sm:$0xf]
        %v2282 = vld [vmem:[#allocation7 + $0x120] sm:$0xf]
        %v2283 = vld [vmem:[#allocation7 + $0x124] sm:$0xf]
        %v2284 = vld [vmem:[#allocation7 + $0x128] sm:$0xf]
        %v2285 = vld [vmem:[#allocation7 + $0x12c] sm:$0xf]
        %v2286 = vld [vmem:[#allocation7 + $0x130] sm:$0xf]
        %v2287 = vld [vmem:[#allocation7 + $0x134] sm:$0xf]
        %v2288 = vld [vmem:[#allocation7 + $0x138] sm:$0xf]
        %v2289 = vld [vmem:[#allocation7 + $0x13c] sm:$0xf]
        %v2290 = vld [vmem:[#allocation7 + $0x140] sm:$0xf]
        %v2291 = vld [vmem:[#allocation7 + $0x144] sm:$0xf]
        %v2292 = vld [vmem:[#allocation7 + $0x148] sm:$0xf]
        %v2293 = vld [vmem:[#allocation7 + $0x14c] sm:$0xf]
        %v2294 = vld [vmem:[#allocation7 + $0x150] sm:$0xf]
        %v2295 = vld [vmem:[#allocation7 + $0x154] sm:$0xf]
        %v2296 = vld [vmem:[#allocation7 + $0x158] sm:$0xf]
        %v2297 = vld [vmem:[#allocation7 + $0x15c] sm:$0xf]
        %v2298 = vld [vmem:[#allocation7 + $0x160] sm:$0xf]
        %v2299 = vld [vmem:[#allocation7 + $0x164] sm:$0xf]
        %v2300 = vld [vmem:[#allocation7 + $0x168] sm:$0xf]
        %v2301 = vld [vmem:[#allocation7 + $0x16c] sm:$0xf]
        %v2302 = vld [vmem:[#allocation7 + $0x170] sm:$0xf]
        %v2303 = vld [vmem:[#allocation7 + $0x174] sm:$0xf]
        %v2304 = vld [vmem:[#allocation7 + $0x178] sm:$0xf]
        %v2305 = vld [vmem:[#allocation7 + $0x17c] sm:$0xf]
        %v2306 = vld [vmem:[#allocation7 + $0x180] sm:$0xf]
        %v2307 = vld [vmem:[#allocation7 + $0x184] sm:$0xf]
        %v2308 = vld [vmem:[#allocation7 + $0x188] sm:$0xf]
        %v2309 = vld [vmem:[#allocation7 + $0x18c] sm:$0xf]
        %v2310 = vld [vmem:[#allocation7 + $0x190] sm:$0xf]
        %v2311 = vld [vmem:[#allocation7 + $0x194] sm:$0xf]
        %v2312 = vld [vmem:[#allocation7 + $0x198] sm:$0xf]
        %v2313 = vld [vmem:[#allocation7 + $0x19c] sm:$0xf]
        %v2314 = vld [vmem:[#allocation7 + $0x1a0] sm:$0xf]
        %v2315 = vld [vmem:[#allocation7 + $0x1a4] sm:$0xf]
        %v2316 = vld [vmem:[#allocation7 + $0x1a8] sm:$0xf]
        %v2317 = vld [vmem:[#allocation7 + $0x1ac] sm:$0xf]
        %v2318 = vld [vmem:[#allocation7 + $0x1b0] sm:$0xf]
        %v2319 = vld [vmem:[#allocation7 + $0x1b4] sm:$0xf]
        %v2320 = vld [vmem:[#allocation7 + $0x1b8] sm:$0xf]
        %v2321 = vld [vmem:[#allocation7 + $0x1bc] sm:$0xf]
        %v2322 = vld [vmem:[#allocation7 + $0x1c0] sm:$0xf]
        %v2323 = vld [vmem:[#allocation7 + $0x1c4] sm:$0xf]
        %v2324 = vld [vmem:[#allocation7 + $0x1c8] sm:$0xf]
        %v2325 = vld [vmem:[#allocation7 + $0x1cc] sm:$0xf]
        %v2326 = vld [vmem:[#allocation7 + $0x1d0] sm:$0xf]
        %v2327 = vld [vmem:[#allocation7 + $0x1d4] sm:$0xf]
        %v2328 = vld [vmem:[#allocation7 + $0x1d8] sm:$0xf]
        %v2329 = vld [vmem:[#allocation7 + $0x1dc] sm:$0xf]
        %v2330 = vld [vmem:[#allocation7 + $0x1e0] sm:$0xf]
        %v2331 = vld [vmem:[#allocation7 + $0x1e4] sm:$0xf]
        %v2332 = vld [vmem:[#allocation7 + $0x1e8] sm:$0xf]
        %v2333 = vld [vmem:[#allocation7 + $0x1ec] sm:$0xf]
        %v2334 = vld [vmem:[#allocation7 + $0x1f0] sm:$0xf]
        %v2335 = vld [vmem:[#allocation7 + $0x1f4] sm:$0xf]
        %v2336 = vld [vmem:[#allocation7 + $0x1f8] sm:$0xf]
        %v2337 = vld [vmem:[#allocation7 + $0x1fc] sm:$0xf]
        %v2338 = vld [vmem:[#allocation7 + $0x200] sm:$0xf]
        %v2339 = vld [vmem:[#allocation7 + $0x204] sm:$0xf]
        %v2340 = vld [vmem:[#allocation7 + $0x208] sm:$0xf]
        %v2341 = vld [vmem:[#allocation7 + $0x20c] sm:$0xf]
        %v2342 = vld [vmem:[#allocation7 + $0x210] sm:$0xf]
        %v2343 = vld [vmem:[#allocation7 + $0x214] sm:$0xf]
        %v2344 = vld [vmem:[#allocation7 + $0x218] sm:$0xf]
        %v2345 = vld [vmem:[#allocation7 + $0x21c] sm:$0xf]
        %v2346 = vld [vmem:[#allocation7 + $0x220] sm:$0xf]
        %v2347 = vld [vmem:[#allocation7 + $0x224] sm:$0xf]
        %v2348 = vld [vmem:[#allocation7 + $0x228] sm:$0xf]
        %v2349 = vld [vmem:[#allocation7 + $0x22c] sm:$0xf]
        %v2350 = vld [vmem:[#allocation7 + $0x230] sm:$0xf]
        %v2351 = vld [vmem:[#allocation7 + $0x234] sm:$0xf]
        %v2352 = vld [vmem:[#allocation7 + $0x238] sm:$0xf]
        %v2353 = vld [vmem:[#allocation7 + $0x23c] sm:$0xf]
        %v2354 = vld [vmem:[%s4] sm:$0x1]
        %v2356 = vlaneseq
        %v2357 = vshrl.u32 %v2356, 7
        %v2358 = vsub.s32 0, %v2357
        %v2359 = vrot.slane %v2354, %v2358
        %v2505 = vunpack.c.l.b16 %v2210
        %v2506 = vunpack.c.l.b16 %v2211
        %v2507 = vunpack.c.l.b16 %v2212
        %v2508 = vunpack.c.l.b16 %v2213
        %v2509 = vunpack.c.l.b16 %v2214
        %v2510 = vunpack.c.l.b16 %v2215
        %v2511 = vunpack.c.l.b16 %v2216
        %v2512 = vunpack.c.l.b16 %v2217
        %v2513 = vunpack.c.l.b16 %v2218
        %v2514 = vunpack.c.l.b16 %v2219
        %v2515 = vunpack.c.l.b16 %v2220
        %v2516 = vunpack.c.l.b16 %v2221
        %v2517 = vunpack.c.l.b16 %v2222
        %v2518 = vunpack.c.l.b16 %v2223
        %v2519 = vunpack.c.l.b16 %v2224
        %v2520 = vunpack.c.l.b16 %v2225
        %v2521 = vunpack.c.l.b16 %v2226
        %v2522 = vunpack.c.l.b16 %v2227
        %v2523 = vunpack.c.l.b16 %v2228
        %v2524 = vunpack.c.l.b16 %v2229
        %v2525 = vunpack.c.l.b16 %v2230
        %v2526 = vunpack.c.l.b16 %v2231
        %v2527 = vunpack.c.l.b16 %v2232
        %v2528 = vunpack.c.l.b16 %v2233
        %v2529 = vunpack.c.l.b16 %v2234
        %v2530 = vunpack.c.l.b16 %v2235
        %v2531 = vunpack.c.l.b16 %v2236
        %v2532 = vunpack.c.l.b16 %v2237
        %v2533 = vunpack.c.l.b16 %v2238
        %v2534 = vunpack.c.l.b16 %v2239
        %v2535 = vunpack.c.l.b16 %v2240
        %v2536 = vunpack.c.l.b16 %v2241
        %v2537 = vunpack.c.l.b16 %v2242
        %v2538 = vunpack.c.l.b16 %v2243
        %v2539 = vunpack.c.l.b16 %v2244
        %v2540 = vunpack.c.l.b16 %v2245
        %v2541 = vunpack.c.l.b16 %v2246
        %v2542 = vunpack.c.l.b16 %v2247
        %v2543 = vunpack.c.l.b16 %v2248
        %v2544 = vunpack.c.l.b16 %v2249
        %v2545 = vunpack.c.l.b16 %v2250
        %v2546 = vunpack.c.l.b16 %v2251
        %v2547 = vunpack.c.l.b16 %v2252
        %v2548 = vunpack.c.l.b16 %v2253
        %v2549 = vunpack.c.l.b16 %v2254
        %v2550 = vunpack.c.l.b16 %v2255
        %v2551 = vunpack.c.l.b16 %v2256
        %v2552 = vunpack.c.l.b16 %v2257
        %v2553 = vunpack.c.l.b16 %v2258
        %v2554 = vunpack.c.l.b16 %v2259
        %v2555 = vunpack.c.l.b16 %v2260
        %v2556 = vunpack.c.l.b16 %v2261
        %v2557 = vunpack.c.l.b16 %v2262
        %v2558 = vunpack.c.l.b16 %v2263
        %v2559 = vunpack.c.l.b16 %v2264
        %v2560 = vunpack.c.l.b16 %v2265
        %v2561 = vunpack.c.l.b16 %v2266
        %v2562 = vunpack.c.l.b16 %v2267
        %v2563 = vunpack.c.l.b16 %v2268
        %v2564 = vunpack.c.l.b16 %v2269
        %v2565 = vunpack.c.l.b16 %v2270
        %v2566 = vunpack.c.l.b16 %v2271
        %v2567 = vunpack.c.l.b16 %v2272
        %v2568 = vunpack.c.l.b16 %v2273
        %v2569 = vunpack.c.l.b16 %v2274
        %v2570 = vunpack.c.l.b16 %v2275
        %v2571 = vunpack.c.l.b16 %v2276
        %v2572 = vunpack.c.l.b16 %v2277
        %v2573 = vunpack.c.l.b16 %v2278
        %v2574 = vunpack.c.l.b16 %v2279
        %v2575 = vunpack.c.l.b16 %v2280
        %v2576 = vunpack.c.l.b16 %v2281
        %v2577 = vunpack.c.l.b16 %v2282
        %v2578 = vunpack.c.l.b16 %v2283
        %v2579 = vunpack.c.l.b16 %v2284
        %v2580 = vunpack.c.l.b16 %v2285
        %v2581 = vunpack.c.l.b16 %v2286
        %v2582 = vunpack.c.l.b16 %v2287
        %v2583 = vunpack.c.l.b16 %v2288
        %v2584 = vunpack.c.l.b16 %v2289
        %v2585 = vunpack.c.l.b16 %v2290
        %v2586 = vunpack.c.l.b16 %v2291
        %v2587 = vunpack.c.l.b16 %v2292
        %v2588 = vunpack.c.l.b16 %v2293
        %v2589 = vunpack.c.l.b16 %v2294
        %v2590 = vunpack.c.l.b16 %v2295
        %v2591 = vunpack.c.l.b16 %v2296
        %v2592 = vunpack.c.l.b16 %v2297
        %v2593 = vunpack.c.l.b16 %v2298
        %v2594 = vunpack.c.l.b16 %v2299
        %v2595 = vunpack.c.l.b16 %v2300
        %v2596 = vunpack.c.l.b16 %v2301
        %v2597 = vunpack.c.l.b16 %v2302
        %v2598 = vunpack.c.l.b16 %v2303
        %v2599 = vunpack.c.l.b16 %v2304
        %v2600 = vunpack.c.l.b16 %v2305
        %v2601 = vunpack.c.l.b16 %v2306
        %v2602 = vunpack.c.l.b16 %v2307
        %v2603 = vunpack.c.l.b16 %v2308
        %v2604 = vunpack.c.l.b16 %v2309
        %v2605 = vunpack.c.l.b16 %v2310
        %v2606 = vunpack.c.l.b16 %v2311
        %v2607 = vunpack.c.l.b16 %v2312
        %v2608 = vunpack.c.l.b16 %v2313
        %v2609 = vunpack.c.l.b16 %v2314
        %v2610 = vunpack.c.l.b16 %v2315
        %v2611 = vunpack.c.l.b16 %v2316
        %v2612 = vunpack.c.l.b16 %v2317
        %v2613 = vunpack.c.l.b16 %v2318
        %v2614 = vunpack.c.l.b16 %v2319
        %v2615 = vunpack.c.l.b16 %v2320
        %v2616 = vunpack.c.l.b16 %v2321
        %v2617 = vunpack.c.l.b16 %v2322
        %v2618 = vunpack.c.l.b16 %v2323
        %v2619 = vunpack.c.l.b16 %v2324
        %v2620 = vunpack.c.l.b16 %v2325
        %v2621 = vunpack.c.l.b16 %v2326
        %v2622 = vunpack.c.l.b16 %v2327
        %v2623 = vunpack.c.l.b16 %v2328
        %v2624 = vunpack.c.l.b16 %v2329
        %v2625 = vunpack.c.l.b16 %v2330
        %v2626 = vunpack.c.l.b16 %v2331
        %v2627 = vunpack.c.l.b16 %v2332
        %v2628 = vunpack.c.l.b16 %v2333
        %v2629 = vunpack.c.l.b16 %v2334
        %v2630 = vunpack.c.l.b16 %v2335
        %v2631 = vunpack.c.l.b16 %v2336
        %v2632 = vunpack.c.l.b16 %v2337
        %v2633 = vunpack.c.l.b16 %v2338
        %v2634 = vunpack.c.l.b16 %v2339
        %v2635 = vunpack.c.l.b16 %v2340
        %v2636 = vunpack.c.l.b16 %v2341
        %v2637 = vunpack.c.l.b16 %v2342
        %v2638 = vunpack.c.l.b16 %v2343
        %v2639 = vunpack.c.l.b16 %v2344
        %v2640 = vunpack.c.l.b16 %v2345
        %v2641 = vunpack.c.l.b16 %v2346
        %v2642 = vunpack.c.l.b16 %v2347
        %v2643 = vunpack.c.l.b16 %v2348
        %v2644 = vunpack.c.l.b16 %v2349
        %v2645 = vunpack.c.l.b16 %v2350
        %v2646 = vunpack.c.l.b16 %v2351
        %v2647 = vunpack.c.l.b16 %v2352
        %v2648 = vunpack.c.l.b16 %v2353
        %v2649 = vpack.c.b16 %v2506, %v2505
        %v2650 = vpack.c.b16 %v2508, %v2507
        %v2651 = vpack.c.b16 %v2510, %v2509
        %v2652 = vpack.c.b16 %v2512, %v2511
        %v2653 = vpack.c.b16 %v2514, %v2513
        %v2654 = vpack.c.b16 %v2516, %v2515
        %v2655 = vpack.c.b16 %v2518, %v2517
        %v2656 = vpack.c.b16 %v2520, %v2519
        %v2657 = vpack.c.b16 %v2522, %v2521
        %v2658 = vpack.c.b16 %v2524, %v2523
        %v2659 = vpack.c.b16 %v2526, %v2525
        %v2660 = vpack.c.b16 %v2528, %v2527
        %v2661 = vpack.c.b16 %v2530, %v2529
        %v2662 = vpack.c.b16 %v2532, %v2531
        %v2663 = vpack.c.b16 %v2534, %v2533
        %v2664 = vpack.c.b16 %v2536, %v2535
        %v2665 = vpack.c.b16 %v2538, %v2537
        %v2666 = vpack.c.b16 %v2540, %v2539
        %v2667 = vpack.c.b16 %v2542, %v2541
        %v2668 = vpack.c.b16 %v2544, %v2543
        %v2669 = vpack.c.b16 %v2546, %v2545
        %v2670 = vpack.c.b16 %v2548, %v2547
        %v2671 = vpack.c.b16 %v2550, %v2549
        %v2672 = vpack.c.b16 %v2552, %v2551
        %v2673 = vpack.c.b16 %v2554, %v2553
        %v2674 = vpack.c.b16 %v2556, %v2555
        %v2675 = vpack.c.b16 %v2558, %v2557
        %v2676 = vpack.c.b16 %v2560, %v2559
        %v2677 = vpack.c.b16 %v2562, %v2561
        %v2678 = vpack.c.b16 %v2564, %v2563
        %v2679 = vpack.c.b16 %v2566, %v2565
        %v2680 = vpack.c.b16 %v2568, %v2567
        %v2681 = vpack.c.b16 %v2570, %v2569
        %v2682 = vpack.c.b16 %v2572, %v2571
        %v2683 = vpack.c.b16 %v2574, %v2573
        %v2684 = vpack.c.b16 %v2576, %v2575
        %v2685 = vpack.c.b16 %v2578, %v2577
        %v2686 = vpack.c.b16 %v2580, %v2579
        %v2687 = vpack.c.b16 %v2582, %v2581
        %v2688 = vpack.c.b16 %v2584, %v2583
        %v2689 = vpack.c.b16 %v2586, %v2585
        %v2690 = vpack.c.b16 %v2588, %v2587
        %v2691 = vpack.c.b16 %v2590, %v2589
        %v2692 = vpack.c.b16 %v2592, %v2591
        %v2693 = vpack.c.b16 %v2594, %v2593
        %v2694 = vpack.c.b16 %v2596, %v2595
        %v2695 = vpack.c.b16 %v2598, %v2597
        %v2696 = vpack.c.b16 %v2600, %v2599
        %v2697 = vpack.c.b16 %v2602, %v2601
        %v2698 = vpack.c.b16 %v2604, %v2603
        %v2699 = vpack.c.b16 %v2606, %v2605
        %v2700 = vpack.c.b16 %v2608, %v2607
        %v2701 = vpack.c.b16 %v2610, %v2609
        %v2702 = vpack.c.b16 %v2612, %v2611
        %v2703 = vpack.c.b16 %v2614, %v2613
        %v2704 = vpack.c.b16 %v2616, %v2615
        %v2705 = vpack.c.b16 %v2618, %v2617
        %v2706 = vpack.c.b16 %v2620, %v2619
        %v2707 = vpack.c.b16 %v2622, %v2621
        %v2708 = vpack.c.b16 %v2624, %v2623
        %v2709 = vpack.c.b16 %v2626, %v2625
        %v2710 = vpack.c.b16 %v2628, %v2627
        %v2711 = vpack.c.b16 %v2630, %v2629
        %v2712 = vpack.c.b16 %v2632, %v2631
        %v2713 = vpack.c.b16 %v2634, %v2633
        %v2714 = vpack.c.b16 %v2636, %v2635
        %v2715 = vpack.c.b16 %v2638, %v2637
        %v2716 = vpack.c.b16 %v2640, %v2639
        %v2717 = vpack.c.b16 %v2642, %v2641
        %v2718 = vpack.c.b16 %v2644, %v2643
        %v2719 = vpack.c.b16 %v2646, %v2645
        %v2720 = vpack.c.b16 %v2648, %v2647
        %2793 = vmatprep.subr.bf16.mxu0 0
        %2794 = vmatpush1.bf16.msra.mxu0 %v2649
        %2795 = vmatprep.subr.bf16.mxu0 0
        %2796 = vmatpush1.bf16.msra.mxu0 %v2650
        %2797 = vmatprep.subr.bf16.mxu0 0
        %2798 = vmatpush1.bf16.msra.mxu0 %v2651
        %2799 = vmatprep.subr.bf16.mxu0 0
        %2800 = vmatpush1.bf16.msra.mxu0 %v2652
        %2801 = vmatprep.subr.bf16.mxu0 0
        %2802 = vmatpush1.bf16.msra.mxu0 %v2653
        %2803 = vmatprep.subr.bf16.mxu0 0
        %2804 = vmatpush1.bf16.msra.mxu0 %v2654
        %2805 = vmatprep.subr.bf16.mxu0 0
        %2806 = vmatpush1.bf16.msra.mxu0 %v2655
        %2807 = vmatprep.subr.bf16.mxu0 0
        %2808 = vmatpush1.bf16.msra.mxu0 %v2656
        %2809 = vmatprep.subr.bf16.mxu0 0
        %2810 = vmatpush1.bf16.msra.mxu0 %v2657
        %2811 = vmatprep.subr.bf16.mxu0 0
        %2812 = vmatpush1.bf16.msra.mxu0 %v2658
        %2813 = vmatprep.subr.bf16.mxu0 0
        %2814 = vmatpush1.bf16.msra.mxu0 %v2659
        %2815 = vmatprep.subr.bf16.mxu0 0
        %2816 = vmatpush1.bf16.msra.mxu0 %v2660
        %2817 = vmatprep.subr.bf16.mxu0 0
        %2818 = vmatpush1.bf16.msra.mxu0 %v2661
        %2819 = vmatprep.subr.bf16.mxu0 0
        %2820 = vmatpush1.bf16.msra.mxu0 %v2662
        %2821 = vmatprep.subr.bf16.mxu0 0
        %2822 = vmatpush1.bf16.msra.mxu0 %v2663
        %2823 = vmatprep.subr.bf16.mxu0 0
        %2824 = vmatpush1.bf16.msra.mxu0 %v2664
        %2825 = vmatprep.mubr.bf16.mxu0 %v2167
        %2826 = vmatmul.mubr.bf16.gmra.mrb[0].mxu0 %v2159
        %v2827 = vpop.f32.mrb[0].mxu0
        %v2828 = vadd.f32 %v2359, %v2827
        %v2829 = vpop.f32.mrb[0].mxu0
        %v2830 = vpop.f32.mrb[0].mxu0
        %v2831 = vadd.f32 %v2359, %v2830
        %v2832 = vpop.f32.mrb[0].mxu0
        %2833 = vmatprep.mubr.bf16.mxu0 %v2168
        %2834 = vmatmul.mubr.bf16.gmra.mrb[0].mxu0 %v2160
        %v2835 = vpop.f32.mrb[0].mxu0
        %v2836 = vadd.f32 %v2359, %v2835
        %v2837 = vpop.f32.mrb[0].mxu0
        %v2838 = vpop.f32.mrb[0].mxu0
        %v2839 = vadd.f32 %v2359, %v2838
        %v2840 = vpop.f32.mrb[0].mxu0
        %2841 = vmatprep.mubr.bf16.mxu0 %v2169
        %2842 = vmatmul.mubr.bf16.gmra.mrb[0].mxu0 %v2161
        %v2843 = vpop.f32.mrb[0].mxu0
        %v2844 = vadd.f32 %v2359, %v2843
        %v2845 = vpop.f32.mrb[0].mxu0
        %v2846 = vpop.f32.mrb[0].mxu0
        %v2847 = vadd.f32 %v2359, %v2846
        %v2848 = vpop.f32.mrb[0].mxu0
        %2849 = vmatprep.mubr.bf16.mxu0 %v2170
        %2850 = vmatmul.mubr.bf16.gmra.mrb[0].mxu0 %v2162
        %v2851 = vpop.f32.mrb[0].mxu0
        %v2852 = vadd.f32 %v2359, %v2851
        %v2853 = vpop.f32.mrb[0].mxu0
        %v2854 = vpop.f32.mrb[0].mxu0
        %v2855 = vadd.f32 %v2359, %v2854
        %v2856 = vpop.f32.mrb[0].mxu0
        %2857 = vmatprep.mubr.bf16.mxu0 %v2171
        %2858 = vmatmul.mubr.bf16.gmra.mrb[0].mxu0 %v2163
        %v2859 = vpop.f32.mrb[0].mxu0
        %v2860 = vadd.f32 %v2359, %v2859
        %v2861 = vpop.f32.mrb[0].mxu0
        %v2862 = vpop.f32.mrb[0].mxu0
        %v2863 = vadd.f32 %v2359, %v2862
        %v2864 = vpop.f32.mrb[0].mxu0
        %2865 = vmatprep.mubr.bf16.mxu0 %v2172
        %2866 = vmatmul.mubr.bf16.gmra.mrb[0].mxu0 %v2164
        %v2867 = vpop.f32.mrb[0].mxu0
        %v2868 = vadd.f32 %v2359, %v2867
        %v2869 = vpop.f32.mrb[0].mxu0
        %v2870 = vpop.f32.mrb[0].mxu0
        %v2871 = vadd.f32 %v2359, %v2870
        %v2872 = vpop.f32.mrb[0].mxu0
        %2873 = vmatprep.mubr.bf16.mxu0 %v2173
        %2874 = vmatmul.mubr.bf16.gmra.mrb[0].mxu0 %v2165
        %v2875 = vpop.f32.mrb[0].mxu0
        %v2876 = vadd.f32 %v2359, %v2875
        %v2877 = vpop.f32.mrb[0].mxu0
        %v2878 = vpop.f32.mrb[0].mxu0
        %v2879 = vadd.f32 %v2359, %v2878
        %v2880 = vpop.f32.mrb[0].mxu0
        %2881 = vmatprep.mubr.bf16.mxu0 %v2174
        %2882 = vmatmul.mubr.bf16.gmra.mrb[0].mxu0 %v2166
        %v2883 = vpop.f32.mrb[0].mxu0
        %v2884 = vadd.f32 %v2359, %v2883
        %v2885 = vpop.f32.mrb[0].mxu0
        %v2886 = vpop.f32.mrb[0].mxu0
        %v2887 = vadd.f32 %v2359, %v2886
        %v2888 = vpop.f32.mrb[0].mxu0
        %2889 = vdwg.mxu0
        %2890 = vmatprep.subr.bf16.mxu0 0
        %2891 = vmatpush1.bf16.msra.mxu0 %v2665
        %2892 = vmatprep.subr.bf16.mxu0 0
        %2893 = vmatpush1.bf16.msra.mxu0 %v2666
        %2894 = vmatprep.subr.bf16.mxu0 0
        %2895 = vmatpush1.bf16.msra.mxu0 %v2667
        %2896 = vmatprep.subr.bf16.mxu0 0
        %2897 = vmatpush1.bf16.msra.mxu0 %v2668
        %2898 = vmatprep.subr.bf16.mxu0 0
        %2899 = vmatpush1.bf16.msra.mxu0 %v2669
        %2900 = vmatprep.subr.bf16.mxu0 0
        %2901 = vmatpush1.bf16.msra.mxu0 %v2670
        %2902 = vmatprep.subr.bf16.mxu0 0
        %2903 = vmatpush1.bf16.msra.mxu0 %v2671
        %2904 = vmatprep.subr.bf16.mxu0 0
        %2905 = vmatpush1.bf16.msra.mxu0 %v2672
        %2906 = vmatprep.subr.bf16.mxu0 0
        %2907 = vmatpush1.bf16.msra.mxu0 %v2673
        %2908 = vmatprep.subr.bf16.mxu0 0
        %2909 = vmatpush1.bf16.msra.mxu0 %v2674
        %2910 = vmatprep.subr.bf16.mxu0 0
        %2911 = vmatpush1.bf16.msra.mxu0 %v2675
        %2912 = vmatprep.subr.bf16.mxu0 0
        %2913 = vmatpush1.bf16.msra.mxu0 %v2676
        %2914 = vmatprep.subr.bf16.mxu0 0
        %2915 = vmatpush1.bf16.msra.mxu0 %v2677
        %2916 = vmatprep.subr.bf16.mxu0 0
        %2917 = vmatpush1.bf16.msra.mxu0 %v2678
        %2918 = vmatprep.subr.bf16.mxu0 0
        %2919 = vmatpush1.bf16.msra.mxu0 %v2679
        %2920 = vmatprep.subr.bf16.mxu0 0
        %2921 = vmatpush1.bf16.msra.mxu0 %v2680
        %2922 = vmatprep.mubr.bf16.mxu0 %v2183
        %2923 = vmatmul.mubr.bf16.gmra.mrb[0].mxu0 %v2175
        %v2924 = vpop.f32.mrb[0].mxu0
        %v2925 = vadd.f32 %v2828, %v2924
        %v2926 = vpop.f32.mrb[0].mxu0
        %v2927 = vpop.f32.mrb[0].mxu0
        %v2928 = vadd.f32 %v2831, %v2927
        %v2929 = vpop.f32.mrb[0].mxu0
        %2930 = vmatprep.mubr.bf16.mxu0 %v2184
        %2931 = vmatmul.mubr.bf16.gmra.mrb[0].mxu0 %v2176
        %v2932 = vpop.f32.mrb[0].mxu0
        %v2933 = vadd.f32 %v2836, %v2932
        %v2934 = vpop.f32.mrb[0].mxu0
        %v2935 = vpop.f32.mrb[0].mxu0
        %v2936 = vadd.f32 %v2839, %v2935
        %v2937 = vpop.f32.mrb[0].mxu0
        %2938 = vmatprep.mubr.bf16.mxu0 %v2185
        %2939 = vmatmul.mubr.bf16.gmra.mrb[0].mxu0 %v2177
        %v2940 = vpop.f32.mrb[0].mxu0
        %v2941 = vadd.f32 %v2844, %v2940
        %v2942 = vpop.f32.mrb[0].mxu0
        %v2943 = vpop.f32.mrb[0].mxu0
        %v2944 = vadd.f32 %v2847, %v2943
        %v2945 = vpop.f32.mrb[0].mxu0
        %2946 = vmatprep.mubr.bf16.mxu0 %v2186
        %2947 = vmatmul.mubr.bf16.gmra.mrb[0].mxu0 %v2178
        %v2948 = vpop.f32.mrb[0].mxu0
        %v2949 = vadd.f32 %v2852, %v2948
        %v2950 = vpop.f32.mrb[0].mxu0
        %v2951 = vpop.f32.mrb[0].mxu0
        %v2952 = vadd.f32 %v2855, %v2951
        %v2953 = vpop.f32.mrb[0].mxu0
        %2954 = vmatprep.mubr.bf16.mxu0 %v2187
        %2955 = vmatmul.mubr.bf16.gmra.mrb[0].mxu0 %v2179
        %v2956 = vpop.f32.mrb[0].mxu0
        %v2957 = vadd.f32 %v2860, %v2956
        %v2958 = vpop.f32.mrb[0].mxu0
        %v2959 = vpop.f32.mrb[0].mxu0
        %v2960 = vadd.f32 %v2863, %v2959
        %v2961 = vpop.f32.mrb[0].mxu0
        %2962 = vmatprep.mubr.bf16.mxu0 %v2188
        %2963 = vmatmul.mubr.bf16.gmra.mrb[0].mxu0 %v2180
        %v2964 = vpop.f32.mrb[0].mxu0
        %v2965 = vadd.f32 %v2868, %v2964
        %v2966 = vpop.f32.mrb[0].mxu0
        %v2967 = vpop.f32.mrb[0].mxu0
        %v2968 = vadd.f32 %v2871, %v2967
        %v2969 = vpop.f32.mrb[0].mxu0
        %2970 = vmatprep.mubr.bf16.mxu0 %v2189
        %2971 = vmatmul.mubr.bf16.gmra.mrb[0].mxu0 %v2181
        %v2972 = vpop.f32.mrb[0].mxu0
        %v2973 = vadd.f32 %v2876, %v2972
        %v2974 = vpop.f32.mrb[0].mxu0
        %v2975 = vpop.f32.mrb[0].mxu0
        %v2976 = vadd.f32 %v2879, %v2975
        %v2977 = vpop.f32.mrb[0].mxu0
        %2978 = vmatprep.mubr.bf16.mxu0 %v2190
        %2979 = vmatmul.mubr.bf16.gmra.mrb[0].mxu0 %v2182
        %v2980 = vpop.f32.mrb[0].mxu0
        %v2981 = vadd.f32 %v2884, %v2980
        %v2982 = vpop.f32.mrb[0].mxu0
        %v2983 = vpop.f32.mrb[0].mxu0
        %v2984 = vadd.f32 %v2887, %v2983
        %v2985 = vpop.f32.mrb[0].mxu0
        %2986 = vdwg.mxu0
        %2987 = vmatprep.subr.bf16.mxu0 0
        %2988 = vmatpush1.bf16.msra.mxu0 %v2681
        %2989 = vmatprep.subr.bf16.mxu0 0
        %2990 = vmatpush1.bf16.msra.mxu0 %v2682
        %2991 = vmatprep.subr.bf16.mxu0 0
        %2992 = vmatpush1.bf16.msra.mxu0 %v2683
        %2993 = vmatprep.subr.bf16.mxu0 0
        %2994 = vmatpush1.bf16.msra.mxu0 %v2684
        %2995 = vmatprep.subr.bf16.mxu0 0
        %2996 = vmatpush1.bf16.msra.mxu0 %v2685
        %2997 = vmatprep.subr.bf16.mxu0 0
        %2998 = vmatpush1.bf16.msra.mxu0 %v2686
        %2999 = vmatprep.subr.bf16.mxu0 0
        %3000 = vmatpush1.bf16.msra.mxu0 %v2687
        %3001 = vmatprep.subr.bf16.mxu0 0
        %3002 = vmatpush1.bf16.msra.mxu0 %v2688
        %3003 = vmatprep.subr.bf16.mxu0 0
        %3004 = vmatpush1.bf16.msra.mxu0 %v2689
        %3005 = vmatprep.subr.bf16.mxu0 0
        %3006 = vmatpush1.bf16.msra.mxu0 %v2690
        %3007 = vmatprep.subr.bf16.mxu0 0
        %3008 = vmatpush1.bf16.msra.mxu0 %v2691
        %3009 = vmatprep.subr.bf16.mxu0 0
        %3010 = vmatpush1.bf16.msra.mxu0 %v2692
        %3011 = vmatprep.subr.bf16.mxu0 0
        %3012 = vmatpush1.bf16.msra.mxu0 %v2693
        %3013 = vmatprep.subr.bf16.mxu0 0
        %3014 = vmatpush1.bf16.msra.mxu0 %v2694
        %3015 = vmatprep.subr.bf16.mxu0 0
        %3016 = vmatpush1.bf16.msra.mxu0 %v2695
        %3017 = vmatprep.subr.bf16.mxu0 0
        %3018 = vmatpush1.bf16.msra.mxu0 %v2696
        %3019 = vmatprep.mubr.bf16.mxu0 %v2199
        %3020 = vmatmul.mubr.bf16.gmra.mrb[0].mxu0 %v2191
        %v3021 = vpop.f32.mrb[0].mxu0
        %v3022 = vadd.f32 %v2925, %v3021
        %v3023 = vpop.f32.mrb[0].mxu0
        %v3024 = vpop.f32.mrb[0].mxu0
        %v3025 = vadd.f32 %v2928, %v3024
        %v3026 = vpop.f32.mrb[0].mxu0
        %3027 = vmatprep.mubr.bf16.mxu0 %v2200
        %3028 = vmatmul.mubr.bf16.gmra.mrb[0].mxu0 %v2192
        %v3029 = vpop.f32.mrb[0].mxu0
        %v3030 = vadd.f32 %v2933, %v3029
        %v3031 = vpop.f32.mrb[0].mxu0
        %v3032 = vpop.f32.mrb[0].mxu0
        %v3033 = vadd.f32 %v2936, %v3032
        %v3034 = vpop.f32.mrb[0].mxu0
        %3035 = vmatprep.mubr.bf16.mxu0 %v2201
        %3036 = vmatmul.mubr.bf16.gmra.mrb[0].mxu0 %v2193
        %v3037 = vpop.f32.mrb[0].mxu0
        %v3038 = vadd.f32 %v2941, %v3037
        %v3039 = vpop.f32.mrb[0].mxu0
        %v3040 = vpop.f32.mrb[0].mxu0
        %v3041 = vadd.f32 %v2944, %v3040
        %v3042 = vpop.f32.mrb[0].mxu0
        %3043 = vmatprep.mubr.bf16.mxu0 %v2202
        %3044 = vmatmul.mubr.bf16.gmra.mrb[0].mxu0 %v2194
        %v3045 = vpop.f32.mrb[0].mxu0
        %v3046 = vadd.f32 %v2949, %v3045
        %v3047 = vpop.f32.mrb[0].mxu0
        %v3048 = vpop.f32.mrb[0].mxu0
        %v3049 = vadd.f32 %v2952, %v3048
        %v3050 = vpop.f32.mrb[0].mxu0
        %3051 = vmatprep.mubr.bf16.mxu0 %v2203
        %3052 = vmatmul.mubr.bf16.gmra.mrb[0].mxu0 %v2195
        %v3053 = vpop.f32.mrb[0].mxu0
        %v3054 = vadd.f32 %v2957, %v3053
        %v3055 = vpop.f32.mrb[0].mxu0
        %v3056 = vpop.f32.mrb[0].mxu0
        %v3057 = vadd.f32 %v2960, %v3056
        %v3058 = vpop.f32.mrb[0].mxu0
        %3059 = vmatprep.mubr.bf16.mxu0 %v2204
        %3060 = vmatmul.mubr.bf16.gmra.mrb[0].mxu0 %v2196
        %v3061 = vpop.f32.mrb[0].mxu0
        %v3062 = vadd.f32 %v2965, %v3061
        %v3063 = vpop.f32.mrb[0].mxu0
        %v3064 = vpop.f32.mrb[0].mxu0
        %v3065 = vadd.f32 %v2968, %v3064
        %v3066 = vpop.f32.mrb[0].mxu0
        %3067 = vmatprep.mubr.bf16.mxu0 %v2205
        %3068 = vmatmul.mubr.bf16.gmra.mrb[0].mxu0 %v2197
        %v3069 = vpop.f32.mrb[0].mxu0
        %v3070 = vadd.f32 %v2973, %v3069
        %v3071 = vpop.f32.mrb[0].mxu0
        %v3072 = vpop.f32.mrb[0].mxu0
        %v3073 = vadd.f32 %v2976, %v3072
        %v3074 = vpop.f32.mrb[0].mxu0
        %3075 = vmatprep.mubr.bf16.mxu0 %v2206
        %3076 = vmatmul.mubr.bf16.gmra.mrb[0].mxu0 %v2198
        %v3077 = vpop.f32.mrb[0].mxu0
        %v3078 = vadd.f32 %v2981, %v3077
        %v3079 = vpop.f32.mrb[0].mxu0
        %v3080 = vpop.f32.mrb[0].mxu0
        %v3081 = vadd.f32 %v2984, %v3080
        %v3082 = vpop.f32.mrb[0].mxu0
        %3083 = vdwg.mxu0
        %3084 = vmatprep.subr.bf16.mxu0 0
        %3085 = vmatpush1.bf16.msra.mxu0 %v2697
        %3086 = vmatprep.subr.bf16.mxu0 0
        %3087 = vmatpush1.bf16.msra.mxu0 %v2698
        %3088 = vmatprep.subr.bf16.mxu0 0
        %3089 = vmatpush1.bf16.msra.mxu0 %v2699
        %3090 = vmatprep.subr.bf16.mxu0 0
        %3091 = vmatpush1.bf16.msra.mxu0 %v2700
        %3092 = vmatprep.subr.bf16.mxu0 0
        %3093 = vmatpush1.bf16.msra.mxu0 %v2701
        %3094 = vmatprep.subr.bf16.mxu0 0
        %3095 = vmatpush1.bf16.msra.mxu0 %v2702
        %3096 = vmatprep.subr.bf16.mxu0 0
        %3097 = vmatpush1.bf16.msra.mxu0 %v2703
        %3098 = vmatprep.subr.bf16.mxu0 0
        %3099 = vmatpush1.bf16.msra.mxu0 %v2704
        %3100 = vmatprep.subr.bf16.mxu0 0
        %3101 = vmatpush1.bf16.msra.mxu0 %v2705
        %3102 = vmatprep.subr.bf16.mxu0 0
        %3103 = vmatpush1.bf16.msra.mxu0 %v2706
        %3104 = vmatprep.subr.bf16.mxu0 0
        %3105 = vmatpush1.bf16.msra.mxu0 %v2707
        %3106 = vmatprep.subr.bf16.mxu0 0
        %3107 = vmatpush1.bf16.msra.mxu0 %v2708
        %3108 = vmatprep.subr.bf16.mxu0 0
        %3109 = vmatpush1.bf16.msra.mxu0 %v2709
        %3110 = vmatprep.subr.bf16.mxu0 0
        %3111 = vmatpush1.bf16.msra.mxu0 %v2710
        %3112 = vmatprep.subr.bf16.mxu0 0
        %3113 = vmatpush1.bf16.msra.mxu0 %v2711
        %3114 = vmatprep.subr.bf16.mxu0 0
        %3115 = vmatpush1.bf16.msra.mxu0 %v2712
        %3116 = vmatprep.mubr.bf16.mxu0 %v2168
        %3117 = vmatmul.mubr.bf16.gmra.mrb[0].mxu0 %v2160
        %v3118 = vpop.f32.mrb[0].mxu0
        %v3119 = vadd.f32 %v3022, %v3118
        %v3120 = vpop.f32.mrb[0].mxu0
        %v3121 = vpop.f32.mrb[0].mxu0
        %v3122 = vadd.f32 %v3025, %v3121
        %v3123 = vpop.f32.mrb[0].mxu0
        %3124 = vmatprep.mubr.bf16.mxu0 %v2169
        %3125 = vmatmul.mubr.bf16.gmra.mrb[0].mxu0 %v2161
        %v3126 = vpop.f32.mrb[0].mxu0
        %v3127 = vadd.f32 %v3030, %v3126
        %v3128 = vpop.f32.mrb[0].mxu0
        %v3129 = vpop.f32.mrb[0].mxu0
        %v3130 = vadd.f32 %v3033, %v3129
        %v3131 = vpop.f32.mrb[0].mxu0
        %3132 = vmatprep.mubr.bf16.mxu0 %v2170
        %3133 = vmatmul.mubr.bf16.gmra.mrb[0].mxu0 %v2162
        %v3134 = vpop.f32.mrb[0].mxu0
        %v3135 = vadd.f32 %v3038, %v3134
        %v3136 = vpop.f32.mrb[0].mxu0
        %v3137 = vpop.f32.mrb[0].mxu0
        %v3138 = vadd.f32 %v3041, %v3137
        %v3139 = vpop.f32.mrb[0].mxu0
        %3140 = vmatprep.mubr.bf16.mxu0 %v2171
        %3141 = vmatmul.mubr.bf16.gmra.mrb[0].mxu0 %v2163
        %v3142 = vpop.f32.mrb[0].mxu0
        %v3143 = vadd.f32 %v3046, %v3142
        %v3144 = vpop.f32.mrb[0].mxu0
        %v3145 = vpop.f32.mrb[0].mxu0
        %v3146 = vadd.f32 %v3049, %v3145
        %v3147 = vpop.f32.mrb[0].mxu0
        %3148 = vmatprep.mubr.bf16.mxu0 %v2172
        %3149 = vmatmul.mubr.bf16.gmra.mrb[0].mxu0 %v2164
        %v3150 = vpop.f32.mrb[0].mxu0
        %v3151 = vadd.f32 %v3054, %v3150
        %v3152 = vpop.f32.mrb[0].mxu0
        %v3153 = vpop.f32.mrb[0].mxu0
        %v3154 = vadd.f32 %v3057, %v3153
        %v3155 = vpop.f32.mrb[0].mxu0
        %3156 = vmatprep.mubr.bf16.mxu0 %v2173
        %3157 = vmatmul.mubr.bf16.gmra.mrb[0].mxu0 %v2165
        %v3158 = vpop.f32.mrb[0].mxu0
        %v3159 = vadd.f32 %v3062, %v3158
        %v3160 = vpop.f32.mrb[0].mxu0
        %v3161 = vpop.f32.mrb[0].mxu0
        %v3162 = vadd.f32 %v3065, %v3161
        %v3163 = vpop.f32.mrb[0].mxu0
        %3164 = vmatprep.mubr.bf16.mxu0 %v2174
        %3165 = vmatmul.mubr.bf16.gmra.mrb[0].mxu0 %v2166
        %v3166 = vpop.f32.mrb[0].mxu0
        %v3167 = vadd.f32 %v3070, %v3166
        %v3168 = vpop.f32.mrb[0].mxu0
        %v3169 = vpop.f32.mrb[0].mxu0
        %v3170 = vadd.f32 %v3073, %v3169
        %v3171 = vpop.f32.mrb[0].mxu0
        %3172 = vmatprep.mubr.bf16.mxu0 %v2208
        %3173 = vmatmul.mubr.bf16.gmra.mrb[0].mxu0 %v2207
        %v3174 = vpop.f32.mrb[0].mxu0
        %v3175 = vadd.f32 %v3078, %v3174
        %v3176 = vpop.f32.mrb[0].mxu0
        %v3177 = vpop.f32.mrb[0].mxu0
        %v3178 = vadd.f32 %v3081, %v3177
        %v3179 = vpop.f32.mrb[0].mxu0
        %3180 = vdwg.mxu0
        %3181 = vmatprep.subr.bf16.mxu0 0
        %3182 = vmatpush1.bf16.msra.mxu0 %v2713
        %3183 = vmatprep.subr.bf16.mxu0 0
        %3184 = vmatpush1.bf16.msra.mxu0 %v2714
        %3185 = vmatprep.subr.bf16.mxu0 0
        %3186 = vmatpush1.bf16.msra.mxu0 %v2715
        %3187 = vmatprep.subr.bf16.mxu0 0
        %3188 = vmatpush1.bf16.msra.mxu0 %v2716
        %3189 = vmatprep.subr.bf16.mxu0 0
        %3190 = vmatpush1.bf16.msra.mxu0 %v2717
        %3191 = vmatprep.subr.bf16.mxu0 0
        %3192 = vmatpush1.bf16.msra.mxu0 %v2718
        %3193 = vmatprep.subr.bf16.mxu0 0
        %3194 = vmatpush1.bf16.msra.mxu0 %v2719
        %3195 = vmatprep.subr.bf16.mxu0 0
        %3196 = vmatpush1.bf16.msra.mxu0 %v2720
        %3197 = vmatprep.subr.bf16.mxu0 0
        %3198 = vmatpush1.bf16.msra.mxu0 0
        %3199 = vmatprep.subr.bf16.mxu0 0
        %3200 = vmatpush1.bf16.msra.mxu0 0
        %3201 = vmatprep.subr.bf16.mxu0 0
        %3202 = vmatpush1.bf16.msra.mxu0 0
        %3203 = vmatprep.subr.bf16.mxu0 0
        %3204 = vmatpush1.bf16.msra.mxu0 0
        %3205 = vmatprep.subr.bf16.mxu0 0
        %3206 = vmatpush1.bf16.msra.mxu0 0
        %3207 = vmatprep.subr.bf16.mxu0 0
        %3208 = vmatpush1.bf16.msra.mxu0 0
        %3209 = vmatprep.subr.bf16.mxu0 0
        %3210 = vmatpush1.bf16.msra.mxu0 0
        %3211 = vmatprep.subr.bf16.mxu0 0
        %3212 = vmatpush1.bf16.msra.mxu0 0
        %3213 = vmatprep.mubr.bf16.mxu0 0
        %3214 = vmatmul.mubr.bf16.gmra.mrb[0].mxu0 %v2176
        %v3215 = vpop.f32.mrb[0].mxu0
        %v3216 = vadd.f32 %v3119, %v3215
        %v3217 = vpop.f32.mrb[0].mxu0
        %v3218 = vpop.f32.mrb[0].mxu0
        %v3219 = vadd.f32 %v3122, %v3218
        %v3220 = vpop.f32.mrb[0].mxu0
        %3221 = vmatprep.mubr.bf16.mxu0 0
        %3222 = vmatmul.mubr.bf16.gmra.mrb[0].mxu0 %v2177
        %v3223 = vpop.f32.mrb[0].mxu0
        %v3224 = vadd.f32 %v3127, %v3223
        %v3225 = vpop.f32.mrb[0].mxu0
        %v3226 = vpop.f32.mrb[0].mxu0
        %v3227 = vadd.f32 %v3130, %v3226
        %v3228 = vpop.f32.mrb[0].mxu0
        %3229 = vmatprep.mubr.bf16.mxu0 0
        %3230 = vmatmul.mubr.bf16.gmra.mrb[0].mxu0 %v2178
        %v3231 = vpop.f32.mrb[0].mxu0
        %v3232 = vadd.f32 %v3135, %v3231
        %v3233 = vpop.f32.mrb[0].mxu0
        %v3234 = vpop.f32.mrb[0].mxu0
        %v3235 = vadd.f32 %v3138, %v3234
        %v3236 = vpop.f32.mrb[0].mxu0
        %3237 = vmatprep.mubr.bf16.mxu0 0
        %3238 = vmatmul.mubr.bf16.gmra.mrb[0].mxu0 %v2179
        %v3239 = vpop.f32.mrb[0].mxu0
        %v3240 = vadd.f32 %v3143, %v3239
        %v3241 = vpop.f32.mrb[0].mxu0
        %v3242 = vpop.f32.mrb[0].mxu0
        %v3243 = vadd.f32 %v3146, %v3242
        %v3244 = vpop.f32.mrb[0].mxu0
        %3245 = vmatprep.mubr.bf16.mxu0 0
        %3246 = vmatmul.mubr.bf16.gmra.mrb[0].mxu0 %v2180
        %v3247 = vpop.f32.mrb[0].mxu0
        %v3248 = vadd.f32 %v3151, %v3247
        %v3249 = vpop.f32.mrb[0].mxu0
        %v3250 = vpop.f32.mrb[0].mxu0
        %v3251 = vadd.f32 %v3154, %v3250
        %v3252 = vpop.f32.mrb[0].mxu0
        %3253 = vmatprep.mubr.bf16.mxu0 0
        %3254 = vmatmul.mubr.bf16.gmra.mrb[0].mxu0 %v2181
        %v3255 = vpop.f32.mrb[0].mxu0
        %v3256 = vadd.f32 %v3159, %v3255
        %v3257 = vpop.f32.mrb[0].mxu0
        %v3258 = vpop.f32.mrb[0].mxu0
        %v3259 = vadd.f32 %v3162, %v3258
        %v3260 = vpop.f32.mrb[0].mxu0
        %3261 = vmatprep.mubr.bf16.mxu0 0
        %3262 = vmatmul.mubr.bf16.gmra.mrb[0].mxu0 %v2182
        %v3263 = vpop.f32.mrb[0].mxu0
        %v3264 = vadd.f32 %v3167, %v3263
        %v3265 = vpop.f32.mrb[0].mxu0
        %v3266 = vpop.f32.mrb[0].mxu0
        %v3267 = vadd.f32 %v3170, %v3266
        %v3268 = vpop.f32.mrb[0].mxu0
        %3269 = vmatprep.mubr.bf16.mxu0 0
        %3270 = vmatmul.mubr.bf16.gmra.mrb[0].mxu0 %v2209
        %v3271 = vpop.f32.mrb[0].mxu0
        %v3272 = vadd.f32 %v3175, %v3271
        %v3273 = vpop.f32.mrb[0].mxu0
        %v3274 = vpop.f32.mrb[0].mxu0
        %v3275 = vadd.f32 %v3178, %v3274
        %v3276 = vpop.f32.mrb[0].mxu0
        %3277 = vdwg.mxu0
        %v3278 = vadd.f32 %v3216, %v3219
        %v3279 = vadd.f32 %v3278, %v3224
        %v3280 = vadd.f32 %v3279, %v3227
        %v3281 = vadd.f32 %v3280, %v3232
        %v3282 = vadd.f32 %v3281, %v3235
        %v3283 = vadd.f32 %v3282, %v3240
        %v3284 = vadd.f32 %v3283, %v3243
        %v3285 = vadd.f32 %v3284, %v3248
        %v3286 = vadd.f32 %v3285, %v3251
        %v3287 = vadd.f32 %v3286, %v3256
        %v3288 = vadd.f32 %v3287, %v3259
        %v3289 = vadd.f32 %v3288, %v3264
        %v3290 = vadd.f32 %v3289, %v3267
        %v3291 = vadd.f32 %v3290, %v3272
        %v3292 = vadd.f32 %v3291, %v3275
        %v3293 = vrot.slane %v3292, 4
        %v3294 = vadd.f32 %v3292, %v3293
        %v3295 = vrot.slane %v3294, 2
        %v3296 = vadd.f32 %v3294, %v3295
        %v3297 = vrot.slane %v3296, 1
        %v3298 = vadd.f32 %v3296, %v3297
        %v3299 = vmul.f32 %v3216, %v3216
        %v3300 = vmul.f32 %v3219, %v3219
        %v3301 = vmul.f32 %v3224, %v3224
        %v3302 = vmul.f32 %v3227, %v3227
        %v3303 = vmul.f32 %v3232, %v3232
        %v3304 = vmul.f32 %v3235, %v3235
        %v3305 = vmul.f32 %v3240, %v3240
        %v3306 = vmul.f32 %v3243, %v3243
        %v3307 = vmul.f32 %v3248, %v3248
        %v3308 = vmul.f32 %v3251, %v3251
        %v3309 = vmul.f32 %v3256, %v3256
        %v3310 = vmul.f32 %v3259, %v3259
        %v3311 = vmul.f32 %v3264, %v3264
        %v3312 = vmul.f32 %v3267, %v3267
        %v3313 = vmul.f32 %v3272, %v3272
        %v3314 = vmul.f32 %v3275, %v3275
        %v3315 = vadd.f32 %v3299, %v3300
        %v3316 = vadd.f32 %v3315, %v3301
        %v3317 = vadd.f32 %v3316, %v3302
        %v3318 = vadd.f32 %v3317, %v3303
        %v3319 = vadd.f32 %v3318, %v3304
        %v3320 = vadd.f32 %v3319, %v3305
        %v3321 = vadd.f32 %v3320, %v3306
        %v3322 = vadd.f32 %v3321, %v3307
        %v3323 = vadd.f32 %v3322, %v3308
        %v3324 = vadd.f32 %v3323, %v3309
        %v3325 = vadd.f32 %v3324, %v3310
        %v3326 = vadd.f32 %v3325, %v3311
        %v3327 = vadd.f32 %v3326, %v3312
        %v3328 = vadd.f32 %v3327, %v3313
        %v3329 = vadd.f32 %v3328, %v3314
        %v3330 = vrot.slane %v3329, 4
        %v3331 = vadd.f32 %v3329, %v3330
        %v3332 = vrot.slane %v3331, 2
        %v3333 = vadd.f32 %v3331, %v3332
        %v3334 = vrot.slane %v3333, 1
        %v3335 = vadd.f32 %v3333, %v3334
        %3337 = vrot.lane.b32.xlu0 %v3298, 64
        %v3338 = vpop.permute.xlu0 %3337
        %v3340 = vadd.f32 %v3298, %v3338
        %v3341 = vmul.f32 %v3340, 0.00390625
        %3343 = vrot.lane.b32.xlu0 %v3335, 64
        %v3344 = vpop.permute.xlu0 %3343
        %v3346 = vadd.f32 %v3335, %v3344
        %v3347 = vmul.f32 %v3346, 0.00390625
        %v3348 = vmul.f32 %v3341, %v3341
        %v3349 = vsub.f32 %v3347, %v3348
        %v3350 = vmax.f32 %v3349, 0.0
        %v3351 = vrsqrt.pop %v3350
        %v3352 = vmul.f32 %v3350, %v3351
        %vm3353 = vcmp.eq.f32.partialorder %v3350, inf
        %v3354 = vsel %vm3353, %v3350, %v3352
        %vm3355 = vcmp.eq.f32.partialorder %v3350, 0.0
        %v3356 = vand.u32 %v3350, 2147483648
        %v3357 = vsel %vm3355, %v3356, %v3354
        %v3358 = vadd.f32 %v3357, %v3341
        %v3359 = vld [vmem:[%s5] sm:$0xf]
        %v3360 = vlaneseq
        %v3361 = vshrl.u32 %v3360, 7
        %v3362 = vsub.s32 0, %v3361
        %v3363 = vrot.slane %v3358, %v3362
        %v3364 = vmul.f32 %v3363, %v3359
        %vm3365 = vcmask 519168
        %v3366 = vsel %vm3365, %v3364, 0.0
        %3367 = vadd.xlane.f32.xlu0 %v3366
        %v3368 = vpop.xlane.xlu0 %3367
        %v3369 = vld [vmem:[%s6] sm:$0xf]
        %v3370 = vadd.f32 %v3368, %v3369
        %v3371 = vmax.f32 %v3370, 0.0
        %v3372 = vld [vmem:[%s7] sm:$0xf]
        %3374 = vset.pattern.permute.xlu0 0
        %3375 = vperm.xlu0 %3374, %v3371
        %v3376 = vpop.permute.xlu0 %3375
        %v3378 = vmul.f32 %v3376, %v3372
        %v3379 = vsel %vm3365, %v3378, 0.0
        %v3380 = vrot.slane %v3379, 4
        %v3381 = vadd.f32 %v3379, %v3380
        %v3382 = vrot.slane %v3381, 2
        %v3383 = vadd.f32 %v3381, %v3382
        %v3384 = vrot.slane %v3383, 1
        %v3385 = vadd.f32 %v3383, %v3384
        %v3386 = vld [vmem:[%s8] sm:$0x1]
        %v3387 = vadd.f32 %v3385, %v3386
        %v3388 = vxor.u32 %v3387, 2147483648
        %v3389 = vmul.f32 %v3388, 1.442695
        %v3390 = vpow.pop %v3389
        %v3391 = vadd.f32 %v3390, 1.0
        %v3392 = vrcp.pop %v3391
        %v3393 = vmul.f32 1.0, %v3392
        %v3394 = vmul.f32 %v3393, %v3358
        %3396 = vrot.lane.b32.xlu0 %v3394, 64
        %v3397 = vpop.permute.xlu0 %3396
        %vm3399 = vcmask 523264
        %v3400 = vsel %vm3399, %v3394, %v3397
        %v3401 = vlaneseq
        %v3402 = vshrl.u32 %v3401, 7
        %v3403 = vsub.s32 0, %v3402
        %v3404 = vrot.slane %v3400, %v3403
        %v3405 = vadd.f32 %v622, %v3404
        %v3406 = vadd.f32 %v623, %v3404
        %v3407 = vadd.f32 %v624, %v3404
        %v3408 = vadd.f32 %v625, %v3404
        %v3409 = vadd.f32 %v626, %v3404
        %v3410 = vadd.f32 %v627, %v3404
        %v3411 = vadd.f32 %v628, %v3404
        %v3412 = vadd.f32 %v629, %v3404
        %v3413 = vadd.f32 %v630, %v3404
        %v3414 = vadd.f32 %v631, %v3404
        %v3415 = vadd.f32 %v632, %v3404
        %v3416 = vadd.f32 %v633, %v3404
        %v3417 = vadd.f32 %v634, %v3404
        %v3418 = vadd.f32 %v635, %v3404
        %v3419 = vadd.f32 %v636, %v3404
        %v3420 = vadd.f32 %v637, %v3404
        %3421 = vst [vmem:[%s379] sm:$0xff] %v3405
        %3422 = vst [vmem:[%s379 + $0x8] sm:$0xff] %v3406
        %3423 = vst [vmem:[%s379 + $0x10] sm:$0xff] %v3407
        %3424 = vst [vmem:[%s379 + $0x18] sm:$0xff] %v3408
        %3425 = vst [vmem:[%s379 + $0x20] sm:$0xff] %v3409
        %3426 = vst [vmem:[%s379 + $0x28] sm:$0xff] %v3410
        %3427 = vst [vmem:[%s379 + $0x30] sm:$0xff] %v3411
        %3428 = vst [vmem:[%s379 + $0x38] sm:$0xff] %v3412
        %3429 = vst [vmem:[%s379 + $0x40] sm:$0xff] %v3413
        %3430 = vst [vmem:[%s379 + $0x48] sm:$0xff] %v3414
        %3431 = vst [vmem:[%s379 + $0x50] sm:$0xff] %v3415
        %3432 = vst [vmem:[%s379 + $0x58] sm:$0xff] %v3416
        %3433 = vst [vmem:[%s379 + $0x60] sm:$0xff] %v3417
        %3434 = vst [vmem:[%s379 + $0x68] sm:$0xff] %v3418
        %3435 = vst [vmem:[%s379 + $0x70] sm:$0xff] %v3419
        %3436 = vst [vmem:[%s379 + $0x78] sm:$0xff] %v3420
        %s3437 = sand.u32 %s229, 1
        %s3438 = scalar_lea.sflag [#allocation4], %s3437
        %s3439 = sand.u32 %s229, 1
        %s3440 = smul.addr %s3439, 128
        %s3441 = scalar_lea.vmem [#allocation8], %s3440
        // Predicated region
        $region69: #{tpu_custom_call.1} parent=55 // pred_check
          %p3442 = pneg %p239
        $region70: #{tpu_custom_call.1} parent=55 // pred_check_branch
          %3444 = sbr.rel (%p3442) target = $region72
        $region71: #{tpu_custom_call.1} parent=55 // pred_region
          %s3446 = ssub.s32 2048, 2048
          %3447 = vsyncadd %s3438, %s3446
          %s3448 = smul.addr %s27, 16
          %s3449 = smul.addr %s3448, 128
          %s3450 = scalar_lea.hbm %s9, %s3449
          %s3451 = sshll.u32 %s3441, 4
          %s3452 = int_to_ptr.vmem [resolvable:$true] %s3451
          %3457 = dma.vmem_to_hbm [thread:$0]  %s3452, 2048, %s3450, %s3438, 128, 128, 8
        $region72: #{tpu_custom_call.1} parent=55 // pred_fallthru
          _
      $region56: #{tpu_custom_call.1} parent=5 // pred_fallthru
        _
      %p3458 = scmp.le.s32.totalorder 2, %s22
      // Predicated region
      $region73: #{tpu_custom_call.1} parent=5 // pred_check
        %p3459 = pneg %p3458
      $region74: #{tpu_custom_call.1} parent=5 // pred_check_branch
        %3461 = sbr.rel (%p3459) target = $region76
      $region75: #{tpu_custom_call.1} parent=5 // pred_region
        %s3462 = ssub.s32 %s22, 2
        // Predicated region
        $region77: #{tpu_custom_call.1} parent=75 // pred_check
          %p3463 = pneg %p245
        $region78: #{tpu_custom_call.1} parent=75 // pred_check_branch
          %3465 = sbr.rel (%p3463) target = $region80
        $region79: #{tpu_custom_call.1} parent=75 // pred_region
          %s3466 = sand.u32 %s230, 1
          %s3467 = scalar_lea.sflag [#allocation4], %s3466
          %s3468 = sand.u32 %s230, 1
          %s3469 = smul.addr %s3468, 128
          %s3470 = scalar_lea.vmem [#allocation8], %s3469
          %3471 = dma.done %s3467, 2048
        $region80: #{tpu_custom_call.1} parent=75 // pred_fallthru
          _
      $region76: #{tpu_custom_call.1} parent=5 // pred_fallthru
        _
    $region6: #{tpu_custom_call.1} parent=1 // loop_footer
      %s26 = sadd.s32 1, %s22
    $region7: #{tpu_custom_call.1} parent=1 // loop_footer_branch
      %21 = sbr.rel target = $region3
    $region8: #{tpu_custom_call.1} parent=1 // loop_exit
      _
    %3472 = vsyncpa [#allocation3], 1
    %s3473 = scalar_lea.sflag [#allocation3], 1
    %3474 = vsyncpa %s3473, 1
    %3475 = vsyncpa [#allocation6], 1
    %3476 = vsyncpa [#allocation4], 1
    %s3477 = scalar_lea.sflag [#allocation4], 1
    %3478 = vsyncpa %s3477, 1

</llo_original>
